<compile_context>
chip_gen: v7x
topology: tpu7x:2x2x1
jax: 0.10.0
libtpu: 0.0.40
codegen_flags: <defaults>
</compile_context>

<pallas_src>
import functools

import jax
import jax.numpy as jnp
from jax.experimental import pallas as pl
from jax.experimental.pallas import tpu as pltpu

EPS = 1e-5


def _fused_kernel(x_ref, s_ref, w1_ref, g1_ref, b1_ref, w2_ref, g2_ref,
                  b2_ref, o_ref, *, inv_p):
    # x_ref : [Cin,  P]        f32  channel-major activations (x195)
    # s_ref : [1,    Cin]      f32  per-channel scale (x200)
    # w1_ref: [Cmid, Cin]      f32  conv2d67 weight (PyTorch [out,in] layout)
    # g1/b1 : [Cmid, 1]        f32  batchnorm2d39 affine
    # w2_ref: [Cout_blk, Cmid] f32  conv2d68 weight block
    # g2/b2 : [Cout_blk, 1]    f32  batchnorm2d40 affine block
    # o_ref : [Cout_blk, P]    f32
    # Fold the x200 scale into the first conv weight (in f32), cast operands
    # to bf16 for the MXU (f32 accumulation).
    w1s = (w1_ref[...] * s_ref[...]).astype(jnp.bfloat16)        # [Cmid, Cin]
    x = x_ref[...].astype(jnp.bfloat16)                          # [Cin,  P]

    # conv2d67 (1x1): h = W1s @ x -> [Cmid, P]  (MXU, f32 accumulate)
    h = jnp.dot(w1s, x, preferred_element_type=jnp.float32)

    # batchnorm2d39: one-pass batch statistics (biased variance) over pixels.
    m1 = jnp.sum(h, axis=1, keepdims=True) * inv_p
    q1 = jnp.sum(h * h, axis=1, keepdims=True) * inv_p
    v1 = q1 - m1 * m1
    hn = (h - m1) * jax.lax.rsqrt(v1 + EPS) * g1_ref[...] + b1_ref[...]

    # conv2d68 (1x1): y = W2 @ hn -> [Cout_blk, P]
    y = jnp.dot(w2_ref[...].astype(jnp.bfloat16), hn.astype(jnp.bfloat16),
                preferred_element_type=jnp.float32)

    # batchnorm2d40: one-pass batch statistics.
    m2 = jnp.sum(y, axis=1, keepdims=True) * inv_p
    q2 = jnp.sum(y * y, axis=1, keepdims=True) * inv_p
    v2 = q2 - m2 * m2
    o_ref[...] = (y - m2) * jax.lax.rsqrt(v2 + EPS) * g2_ref[...] + b2_ref[...]


def _num_cout_blocks(cout):
    """2-wide output-channel split on v7x (2 TensorCores/chip), else 1."""
    try:
        kind = jax.devices()[0].device_kind.lower()
    except Exception:
        return 1
    if ("v7" in kind or "7x" in kind) and cout % 2 == 0:
        return 2
    return 1


def fused_forward(x195, x200, w1, g1, b1, w2, g2, b2):
    """x195: [1, Cin, H, W]; x200: [1, Cin, 1, 1];
    w1: [Cmid, Cin]; w2: [Cout, Cmid] (1x1 conv weights, PyTorch layout).
    Returns NCHW [1, Cout, H, W]."""
    N, Cin, H, W = x195.shape
    if N != 1:
        # TODO(synk): generalize to N > 1 (per-sample x200 can no longer be
        # folded into w1; BN stats must pool over all N*H*W pixels).
        raise NotImplementedError("kernel assumes batch size 1, as in the source module")
    P = H * W
    Cmid = w1.shape[0]
    Cout = w2.shape[0]

    # NCHW [1,C,H,W] -> channel-major [C, P]: a free reshape, no transpose.
    x_t = x195.reshape(Cin, P)
    s_row = x200.reshape(1, Cin)

    nb = _num_cout_blocks(Cout)
    cb = Cout // nb

    kernel = functools.partial(_fused_kernel, inv_p=1.0 / P)

    out = pl.pallas_call(
        kernel,
        out_shape=jax.ShapeDtypeStruct((Cout, P), jnp.float32),
        grid=(nb,),
        in_specs=[
            pl.BlockSpec((Cin, P), lambda j: (0, 0)),     # x_t    (shared)
            pl.BlockSpec((1, Cin), lambda j: (0, 0)),     # scale  (shared)
            pl.BlockSpec((Cmid, Cin), lambda j: (0, 0)),  # w1     (shared)
            pl.BlockSpec((Cmid, 1), lambda j: (0, 0)),    # gamma1 (shared)
            pl.BlockSpec((Cmid, 1), lambda j: (0, 0)),    # beta1  (shared)
            pl.BlockSpec((cb, Cmid), lambda j: (j, 0)),   # w2     (split on Cout)
            pl.BlockSpec((cb, 1), lambda j: (j, 0)),      # gamma2
            pl.BlockSpec((cb, 1), lambda j: (j, 0)),      # beta2
        ],
        out_specs=pl.BlockSpec((cb, P), lambda j: (j, 0)),
        compiler_params=pltpu.CompilerParams(
            dimension_semantics=("parallel",)),
    )(x_t, s_row, w1, g1.reshape(Cmid, 1), b1.reshape(Cmid, 1),
      w2, g2.reshape(Cout, 1), b2.reshape(Cout, 1))

    # [Cout, P] -> NCHW [1, Cout, H, W]: free reshape.
    return out.reshape(1, Cout, H, W)


def _reference(x195, x200, w1, g1, b1, w2, g2, b2):
    """Pure-JAX f32 forward matching the PyTorch module (training-mode BN)."""
    x = x195 * x200
    N, C, H, W = x.shape
    xm = x.reshape(C, H * W)                      # N == 1
    h = w1 @ xm
    m1 = h.mean(1, keepdims=True)
    v1 = ((h - m1) ** 2).mean(1, keepdims=True)
    hn = (h - m1) / jnp.sqrt(v1 + EPS) * g1[:, None] + b1[:, None]
    y = w2 @ hn
    m2 = y.mean(1, keepdims=True)
    v2 = ((y - m2) ** 2).mean(1, keepdims=True)
    yn = (y - m2) / jnp.sqrt(v2 + EPS) * g2[:, None] + b2[:, None]
    return yn.reshape(N, -1, H, W)


if __name__ == "__main__":
    key = jax.random.PRNGKey(0)
    k1, k2, k3, k4, k5, k6, k7, k8 = jax.random.split(key, 8)

    N, Cin, H, W = 1, 384, 14, 14
    Cmid, Cout = 128, 768

    x195 = jax.random.normal(k1, (N, Cin, H, W), dtype=jnp.float32)
    x200 = jax.random.normal(k2, (N, Cin, 1, 1), dtype=jnp.float32)

    # Synthetic parameters; conv weights in PyTorch [out_ch, in_ch] layout.
    w1 = jax.random.normal(k3, (Cmid, Cin), dtype=jnp.float32) * 0.05
    w2 = jax.random.normal(k4, (Cout, Cmid), dtype=jnp.float32) * 0.05
    g1 = 1.0 + 0.1 * jax.random.normal(k5, (Cmid,), dtype=jnp.float32)
    b1 = 0.1 * jax.random.normal(k6, (Cmid,), dtype=jnp.float32)
    g2 = 1.0 + 0.1 * jax.random.normal(k7, (Cout,), dtype=jnp.float32)
    b2 = 0.1 * jax.random.normal(k8, (Cout,), dtype=jnp.float32)

    out = fused_forward(x195, x200, w1, g1, b1, w2, g2, b2)
    out = jax.block_until_ready(out)

    ref = _reference(x195, x200, w1, g1, b1, w2, g2, b2)
    assert out.shape == (N, Cout, H, W), out.shape
    # bf16 MXU operands (f32 accumulation) vs. a pure-f32 reference:
    # mixed-precision tolerance.
    max_err = float(jnp.max(jnp.abs(out - ref)))
    assert jnp.allclose(out, ref, atol=5e-2, rtol=5e-2), max_err

    print("KERNEL_OK")
</pallas_src>

<mosaic_0001>
module attributes {stable_mosaic.version = 11 : i64} {
  func.func @_fused_kernel(%arg0: i32, %arg1: memref<384x196xf32, #tpu.memory_space<vmem>>, %arg2: memref<1x384xf32, #tpu.memory_space<vmem>>, %arg3: memref<128x384xf32, #tpu.memory_space<vmem>>, %arg4: memref<128x1xf32, #tpu.memory_space<vmem>>, %arg5: memref<128x1xf32, #tpu.memory_space<vmem>>, %arg6: memref<768x128xf32, #tpu.memory_space<vmem>>, %arg7: memref<768x1xf32, #tpu.memory_space<vmem>>, %arg8: memref<768x1xf32, #tpu.memory_space<vmem>>, %arg9: memref<768x196xf32, #tpu.memory_space<vmem>>) attributes {dimension_semantics = [#tpu.dimension_semantics<parallel>], iteration_bounds = array<i64: 1>, scalar_prefetch = 0 : i64, scratch_operands = 0 : i64, tpu.core_type = #tpu.core_type<tc>, window_params = [{pipeline_mode = #tpu.pipeline_mode<synchronous>, transform_indices = @transform_0, window_bounds = array<i64: 384, 196>}, {pipeline_mode = #tpu.pipeline_mode<synchronous>, transform_indices = @transform_1, window_bounds = array<i64: 1, 384>}, {pipeline_mode = #tpu.pipeline_mode<synchronous>, transform_indices = @transform_2, window_bounds = array<i64: 128, 384>}, {pipeline_mode = #tpu.pipeline_mode<synchronous>, transform_indices = @transform_3, window_bounds = array<i64: 128, 1>}, {pipeline_mode = #tpu.pipeline_mode<synchronous>, transform_indices = @transform_4, window_bounds = array<i64: 128, 1>}, {transform_indices = @transform_5, window_bounds = array<i64: 768, 128>}, {transform_indices = @transform_6, window_bounds = array<i64: 768, 1>}, {transform_indices = @transform_7, window_bounds = array<i64: 768, 1>}, {transform_indices = @transform_8, window_bounds = array<i64: 768, 196>}]} {
    %c0 = arith.constant 0 : index
    %c0_0 = arith.constant 0 : index
    %0 = vector.load %arg3[%c0, %c0_0] : memref<128x384xf32, #tpu.memory_space<vmem>>, vector<128x384xf32>
    %c0_1 = arith.constant 0 : index
    %c0_2 = arith.constant 0 : index
    %1 = vector.load %arg2[%c0_1, %c0_2] : memref<1x384xf32, #tpu.memory_space<vmem>>, vector<1x384xf32>
    %2 = vector.broadcast %1 : vector<1x384xf32> to vector<128x384xf32>
    %3 = arith.mulf %0, %2 : vector<128x384xf32>
    %4 = arith.truncf %3 : vector<128x384xf32> to vector<128x384xbf16>
    %c0_3 = arith.constant 0 : index
    %c0_4 = arith.constant 0 : index
    %5 = vector.load %arg1[%c0_3, %c0_4] : memref<384x196xf32, #tpu.memory_space<vmem>>, vector<384x196xf32>
    %6 = arith.truncf %5 : vector<384x196xf32> to vector<384x196xbf16>
    %cst = arith.constant dense<0.000000e+00> : vector<128x196xf32>
    %7 = tpu.matmul %4, %6, %cst {dimension_numbers = #tpu.dot_dimension_numbers<[1], [0], [0], [1], [0, 0, 1, 1], [], []>} : vector<128x384xbf16>, vector<384x196xbf16>, vector<128x196xf32> -> vector<128x196xf32>
    %cst_5 = arith.constant dense<0.000000e+00> : vector<128xf32>
    %8 = vector.multi_reduction <add>, %7, %cst_5 [1] : vector<128x196xf32> to vector<128xf32>
    %9 = vector.shape_cast %8 : vector<128xf32> to vector<128x1xf32>
    %cst_6 = arith.constant 0.00510204071 : f32
    %10 = vector.broadcast %cst_6 : f32 to vector<128x1xf32>
    %11 = arith.mulf %9, %10 : vector<128x1xf32>
    %12 = arith.mulf %7, %7 : vector<128x196xf32>
    %cst_7 = arith.constant dense<0.000000e+00> : vector<128xf32>
    %13 = vector.multi_reduction <add>, %12, %cst_7 [1] : vector<128x196xf32> to vector<128xf32>
    %14 = vector.shape_cast %13 : vector<128xf32> to vector<128x1xf32>
    %cst_8 = arith.constant 0.00510204071 : f32
    %15 = vector.broadcast %cst_8 : f32 to vector<128x1xf32>
    %16 = arith.mulf %14, %15 : vector<128x1xf32>
    %17 = arith.mulf %11, %11 : vector<128x1xf32>
    %18 = arith.subf %16, %17 : vector<128x1xf32>
    %19 = vector.broadcast %11 : vector<128x1xf32> to vector<128x196xf32>
    %20 = arith.subf %7, %19 : vector<128x196xf32>
    %cst_9 = arith.constant 9.99999974E-6 : f32
    %21 = vector.broadcast %cst_9 : f32 to vector<128x1xf32>
    %22 = arith.addf %18, %21 : vector<128x1xf32>
    %23 = math.rsqrt %22 : vector<128x1xf32>
    %24 = vector.broadcast %23 : vector<128x1xf32> to vector<128x196xf32>
    %25 = arith.mulf %20, %24 : vector<128x196xf32>
    %c0_10 = arith.constant 0 : index
    %c0_11 = arith.constant 0 : index
    %26 = vector.load %arg4[%c0_10, %c0_11] : memref<128x1xf32, #tpu.memory_space<vmem>>, vector<128x1xf32>
    %27 = vector.broadcast %26 : vector<128x1xf32> to vector<128x196xf32>
    %28 = arith.mulf %25, %27 : vector<128x196xf32>
    %c0_12 = arith.constant 0 : index
    %c0_13 = arith.constant 0 : index
    %29 = vector.load %arg5[%c0_12, %c0_13] : memref<128x1xf32, #tpu.memory_space<vmem>>, vector<128x1xf32>
    %30 = vector.broadcast %29 : vector<128x1xf32> to vector<128x196xf32>
    %31 = arith.addf %28, %30 : vector<128x196xf32>
    %c0_14 = arith.constant 0 : index
    %c0_15 = arith.constant 0 : index
    %32 = vector.load %arg6[%c0_14, %c0_15] : memref<768x128xf32, #tpu.memory_space<vmem>>, vector<768x128xf32>
    %33 = arith.truncf %32 : vector<768x128xf32> to vector<768x128xbf16>
    %34 = arith.truncf %31 : vector<128x196xf32> to vector<128x196xbf16>
    %cst_16 = arith.constant dense<0.000000e+00> : vector<768x196xf32>
    %35 = tpu.matmul %33, %34, %cst_16 {dimension_numbers = #tpu.dot_dimension_numbers<[1], [0], [0], [1], [0, 0, 1, 1], [], []>} : vector<768x128xbf16>, vector<128x196xbf16>, vector<768x196xf32> -> vector<768x196xf32>
    %cst_17 = arith.constant dense<0.000000e+00> : vector<768xf32>
    %36 = vector.multi_reduction <add>, %35, %cst_17 [1] : vector<768x196xf32> to vector<768xf32>
    %37 = vector.shape_cast %36 : vector<768xf32> to vector<768x1xf32>
    %cst_18 = arith.constant 0.00510204071 : f32
    %38 = vector.broadcast %cst_18 : f32 to vector<768x1xf32>
    %39 = arith.mulf %37, %38 : vector<768x1xf32>
    %40 = arith.mulf %35, %35 : vector<768x196xf32>
    %cst_19 = arith.constant dense<0.000000e+00> : vector<768xf32>
    %41 = vector.multi_reduction <add>, %40, %cst_19 [1] : vector<768x196xf32> to vector<768xf32>
    %42 = vector.shape_cast %41 : vector<768xf32> to vector<768x1xf32>
    %cst_20 = arith.constant 0.00510204071 : f32
    %43 = vector.broadcast %cst_20 : f32 to vector<768x1xf32>
    %44 = arith.mulf %42, %43 : vector<768x1xf32>
    %45 = arith.mulf %39, %39 : vector<768x1xf32>
    %46 = arith.subf %44, %45 : vector<768x1xf32>
    %47 = vector.broadcast %39 : vector<768x1xf32> to vector<768x196xf32>
    %48 = arith.subf %35, %47 : vector<768x196xf32>
    %cst_21 = arith.constant 9.99999974E-6 : f32
    %49 = vector.broadcast %cst_21 : f32 to vector<768x1xf32>
    %50 = arith.addf %46, %49 : vector<768x1xf32>
    %51 = math.rsqrt %50 : vector<768x1xf32>
    %52 = vector.broadcast %51 : vector<768x1xf32> to vector<768x196xf32>
    %53 = arith.mulf %48, %52 : vector<768x196xf32>
    %c0_22 = arith.constant 0 : index
    %c0_23 = arith.constant 0 : index
    %54 = vector.load %arg7[%c0_22, %c0_23] : memref<768x1xf32, #tpu.memory_space<vmem>>, vector<768x1xf32>
    %55 = vector.broadcast %54 : vector<768x1xf32> to vector<768x196xf32>
    %56 = arith.mulf %53, %55 : vector<768x196xf32>
    %c0_24 = arith.constant 0 : index
    %c0_25 = arith.constant 0 : index
    %57 = vector.load %arg8[%c0_24, %c0_25] : memref<768x1xf32, #tpu.memory_space<vmem>>, vector<768x1xf32>
    %58 = vector.broadcast %57 : vector<768x1xf32> to vector<768x196xf32>
    %59 = arith.addf %56, %58 : vector<768x196xf32>
    %c0_26 = arith.constant 0 : index
    %c0_27 = arith.constant 0 : index
    %60 = vector.load %arg9[%c0_26, %c0_27] : memref<768x196xf32, #tpu.memory_space<vmem>>, vector<768x196xf32>
    tpu.vector_store %arg9[%c0_26, %c0_27], %59 {strides = array<i32>} : memref<768x196xf32, #tpu.memory_space<vmem>>, vector<768x196xf32>,
    return
  }
  func.func @transform_0(%arg0: i32) -> (i32, i32) {
    %c0_i32 = arith.constant 0 : i32
    %c0_i32_0 = arith.constant 0 : i32
    %c0_i32_1 = arith.constant 0 : i32
    return %c0_i32, %c0_i32_0 : i32, i32
  }
  func.func @transform_1(%arg0: i32) -> (i32, i32) {
    %c0_i32 = arith.constant 0 : i32
    %c0_i32_0 = arith.constant 0 : i32
    %c0_i32_1 = arith.constant 0 : i32
    return %c0_i32, %c0_i32_0 : i32, i32
  }
  func.func @transform_2(%arg0: i32) -> (i32, i32) {
    %c0_i32 = arith.constant 0 : i32
    %c0_i32_0 = arith.constant 0 : i32
    %c0_i32_1 = arith.constant 0 : i32
    return %c0_i32, %c0_i32_0 : i32, i32
  }
  func.func @transform_3(%arg0: i32) -> (i32, i32) {
    %c0_i32 = arith.constant 0 : i32
    %c0_i32_0 = arith.constant 0 : i32
    %c0_i32_1 = arith.constant 0 : i32
    return %c0_i32, %c0_i32_0 : i32, i32
  }
  func.func @transform_4(%arg0: i32) -> (i32, i32) {
    %c0_i32 = arith.constant 0 : i32
    %c0_i32_0 = arith.constant 0 : i32
    %c0_i32_1 = arith.constant 0 : i32
    return %c0_i32, %c0_i32_0 : i32, i32
  }
  func.func @transform_5(%arg0: i32) -> (i32, i32) {
    %c0_i32 = arith.constant 0 : i32
    %c0_i32_0 = arith.constant 0 : i32
    return %arg0, %c0_i32 : i32, i32
  }
  func.func @transform_6(%arg0: i32) -> (i32, i32) {
    %c0_i32 = arith.constant 0 : i32
    %c0_i32_0 = arith.constant 0 : i32
    return %arg0, %c0_i32 : i32, i32
  }
  func.func @transform_7(%arg0: i32) -> (i32, i32) {
    %c0_i32 = arith.constant 0 : i32
    %c0_i32_0 = arith.constant 0 : i32
    return %arg0, %c0_i32 : i32, i32
  }
  func.func @transform_8(%arg0: i32) -> (i32, i32) {
    %c0_i32 = arith.constant 0 : i32
    %c0_i32_0 = arith.constant 0 : i32
    return %arg0, %c0_i32 : i32, i32
  }
}

</mosaic_0001>

<llo_original>
// kernel: tpu_custom_call.1
$region0: #{tpu_custom_call.1}
  #allocation0 [shape = 'u32[]', space=smem, size = 0x4, offset = 0x4, fixed_abs, tag = 'smem constant byte address 0x4 - core index']
  #allocation1 [shape = 'u32[144,128]{1,0:T(1,128)}', space=vmem, size = 0x12000, scoped, tag = 'internal scratch']
  %s0 = inlined_call_operand.vmem [shape: f32[384,196], index: 0, kind: input, shape index: {}]
  %s1 = inlined_call_operand.vmem [shape: f32[1,384], index: 1, kind: input, shape index: {}]
  %s2 = inlined_call_operand.vmem [shape: f32[128,384], index: 2, kind: input, shape index: {}]
  %s3 = inlined_call_operand.vmem [shape: f32[128,1], index: 3, kind: input, shape index: {}]
  %s4 = inlined_call_operand.vmem [shape: f32[128,1], index: 4, kind: input, shape index: {}]
  %s5 = inlined_call_operand.vmem [shape: f32[768,128], index: 5, kind: input, shape index: {}]
  %s6 = inlined_call_operand.vmem [shape: f32[768,1], index: 6, kind: input, shape index: {}]
  %s7 = inlined_call_operand.vmem [shape: f32[768,1], index: 7, kind: input, shape index: {}]
  %s8 = inlined_call_operand.vmem [shape: f32[768,196], index: 8, kind: output, shape index: {}]
  %s9 = sld [smem:[#allocation0]]
  $region42: #{tpu_custom_call.1} parent=0
    _
  %s11 = ssub.s32 1, %s9
  %s12 = scalar_select 0, %s11, %s9
  // Predicated region
  $region2: #{tpu_custom_call.1} parent=0 // pred_check
    _
  $region3: #{tpu_custom_call.1} parent=0 // pred_check_branch
    %14 = sbr.rel (0) target = $region5
  $region4: #{tpu_custom_call.1} parent=0 // pred_region
    _
  $region5: #{tpu_custom_call.1} parent=0 // pred_fallthru
    _
  // Predicated region
  $region6: #{tpu_custom_call.1} parent=0 // pred_check
    _
  $region7: #{tpu_custom_call.1} parent=0 // pred_check_branch
    %16 = sbr.rel (0) target = $region9
  $region8: #{tpu_custom_call.1} parent=0 // pred_region
    _
  $region9: #{tpu_custom_call.1} parent=0 // pred_fallthru
    _
  // Predicated region
  $region10: #{tpu_custom_call.1} parent=0 // pred_check
    _
  $region11: #{tpu_custom_call.1} parent=0 // pred_check_branch
    %18 = sbr.rel (0) target = $region13
  $region12: #{tpu_custom_call.1} parent=0 // pred_region
    _
  $region13: #{tpu_custom_call.1} parent=0 // pred_fallthru
    _
  // Predicated region
  $region14: #{tpu_custom_call.1} parent=0 // pred_check
    _
  $region15: #{tpu_custom_call.1} parent=0 // pred_check_branch
    %20 = sbr.rel (0) target = $region17
  $region16: #{tpu_custom_call.1} parent=0 // pred_region
    _
  $region17: #{tpu_custom_call.1} parent=0 // pred_fallthru
    _
  // Predicated region
  $region18: #{tpu_custom_call.1} parent=0 // pred_check
    _
  $region19: #{tpu_custom_call.1} parent=0 // pred_check_branch
    %22 = sbr.rel (0) target = $region21
  $region20: #{tpu_custom_call.1} parent=0 // pred_region
    _
  $region21: #{tpu_custom_call.1} parent=0 // pred_fallthru
    _
  // Predicated region
  $region22: #{tpu_custom_call.1} parent=0 // pred_check
    _
  $region23: #{tpu_custom_call.1} parent=0 // pred_check_branch
    %24 = sbr.rel (0) target = $region25
  $region24: #{tpu_custom_call.1} parent=0 // pred_region
    _
  $region25: #{tpu_custom_call.1} parent=0 // pred_fallthru
    _
  // Predicated region
  $region26: #{tpu_custom_call.1} parent=0 // pred_check
    _
  $region27: #{tpu_custom_call.1} parent=0 // pred_check_branch
    %26 = sbr.rel (0) target = $region29
  $region28: #{tpu_custom_call.1} parent=0 // pred_region
    _
  $region29: #{tpu_custom_call.1} parent=0 // pred_fallthru
    _
  // Predicated region
  $region30: #{tpu_custom_call.1} parent=0 // pred_check
    _
  $region31: #{tpu_custom_call.1} parent=0 // pred_check_branch
    %28 = sbr.rel (0) target = $region33
  $region32: #{tpu_custom_call.1} parent=0 // pred_region
    _
  $region33: #{tpu_custom_call.1} parent=0 // pred_fallthru
    _
  %v30 = vld [vmem:[%s2] sm:$0xff]
  %v31 = vld [vmem:[%s2 + $0x8] sm:$0xff]
  %v32 = vld [vmem:[%s2 + $0x10] sm:$0xff]
  %v33 = vld [vmem:[%s2 + $0x18] sm:$0xff]
  %v34 = vld [vmem:[%s2 + $0x20] sm:$0xff]
  %v35 = vld [vmem:[%s2 + $0x28] sm:$0xff]
  %v36 = vld [vmem:[%s2 + $0x30] sm:$0xff]
  %v37 = vld [vmem:[%s2 + $0x38] sm:$0xff]
  %v38 = vld [vmem:[%s2 + $0x40] sm:$0xff]
  %v39 = vld [vmem:[%s2 + $0x48] sm:$0xff]
  %v40 = vld [vmem:[%s2 + $0x50] sm:$0xff]
  %v41 = vld [vmem:[%s2 + $0x58] sm:$0xff]
  %v42 = vld [vmem:[%s2 + $0x60] sm:$0xff]
  %v43 = vld [vmem:[%s2 + $0x68] sm:$0xff]
  %v44 = vld [vmem:[%s2 + $0x70] sm:$0xff]
  %v45 = vld [vmem:[%s2 + $0x78] sm:$0xff]
  %v46 = vld [vmem:[%s2 + $0x80] sm:$0xff]
  %v47 = vld [vmem:[%s2 + $0x88] sm:$0xff]
  %v48 = vld [vmem:[%s2 + $0x90] sm:$0xff]
  %v49 = vld [vmem:[%s2 + $0x98] sm:$0xff]
  %v50 = vld [vmem:[%s2 + $0xa0] sm:$0xff]
  %v51 = vld [vmem:[%s2 + $0xa8] sm:$0xff]
  %v52 = vld [vmem:[%s2 + $0xb0] sm:$0xff]
  %v53 = vld [vmem:[%s2 + $0xb8] sm:$0xff]
  %v54 = vld [vmem:[%s2 + $0xc0] sm:$0xff]
  %v55 = vld [vmem:[%s2 + $0xc8] sm:$0xff]
  %v56 = vld [vmem:[%s2 + $0xd0] sm:$0xff]
  %v57 = vld [vmem:[%s2 + $0xd8] sm:$0xff]
  %v58 = vld [vmem:[%s2 + $0xe0] sm:$0xff]
  %v59 = vld [vmem:[%s2 + $0xe8] sm:$0xff]
  %v60 = vld [vmem:[%s2 + $0xf0] sm:$0xff]
  %v61 = vld [vmem:[%s2 + $0xf8] sm:$0xff]
  %v62 = vld [vmem:[%s2 + $0x100] sm:$0xff]
  %v63 = vld [vmem:[%s2 + $0x108] sm:$0xff]
  %v64 = vld [vmem:[%s2 + $0x110] sm:$0xff]
  %v65 = vld [vmem:[%s2 + $0x118] sm:$0xff]
  %v66 = vld [vmem:[%s2 + $0x120] sm:$0xff]
  %v67 = vld [vmem:[%s2 + $0x128] sm:$0xff]
  %v68 = vld [vmem:[%s2 + $0x130] sm:$0xff]
  %v69 = vld [vmem:[%s2 + $0x138] sm:$0xff]
  %v70 = vld [vmem:[%s2 + $0x140] sm:$0xff]
  %v71 = vld [vmem:[%s2 + $0x148] sm:$0xff]
  %v72 = vld [vmem:[%s2 + $0x150] sm:$0xff]
  %v73 = vld [vmem:[%s2 + $0x158] sm:$0xff]
  %v74 = vld [vmem:[%s2 + $0x160] sm:$0xff]
  %v75 = vld [vmem:[%s2 + $0x168] sm:$0xff]
  %v76 = vld [vmem:[%s2 + $0x170] sm:$0xff]
  %v77 = vld [vmem:[%s2 + $0x178] sm:$0xff]
  %v78 = vld [vmem:[%s1] sm:$0x7]
  %v80 = vlaneseq
  %v81 = vshrl.u32 %v80, 7
  %v82 = vsub.s32 0, %v81
  %v83 = vrot.slane %v78, %v82
  %v84 = vlaneseq
  %v85 = vshrl.u32 %v84, 7
  %v86 = vsub.s32 1, %v85
  %v87 = vrot.slane %v78, %v86
  %v88 = vlaneseq
  %v89 = vshrl.u32 %v88, 7
  %v90 = vsub.s32 2, %v89
  %v91 = vrot.slane %v78, %v90
  %v95 = vmul.f32 %v30, %v83
  %v96 = vmul.f32 %v31, %v87
  %v97 = vmul.f32 %v32, %v91
  %v98 = vmul.f32 %v33, %v83
  %v99 = vmul.f32 %v34, %v87
  %v100 = vmul.f32 %v35, %v91
  %v101 = vmul.f32 %v36, %v83
  %v102 = vmul.f32 %v37, %v87
  %v103 = vmul.f32 %v38, %v91
  %v104 = vmul.f32 %v39, %v83
  %v105 = vmul.f32 %v40, %v87
  %v106 = vmul.f32 %v41, %v91
  %v107 = vmul.f32 %v42, %v83
  %v108 = vmul.f32 %v43, %v87
  %v109 = vmul.f32 %v44, %v91
  %v110 = vmul.f32 %v45, %v83
  %v111 = vmul.f32 %v46, %v87
  %v112 = vmul.f32 %v47, %v91
  %v113 = vmul.f32 %v48, %v83
  %v114 = vmul.f32 %v49, %v87
  %v115 = vmul.f32 %v50, %v91
  %v116 = vmul.f32 %v51, %v83
  %v117 = vmul.f32 %v52, %v87
  %v118 = vmul.f32 %v53, %v91
  %v119 = vmul.f32 %v54, %v83
  %v120 = vmul.f32 %v55, %v87
  %v121 = vmul.f32 %v56, %v91
  %v122 = vmul.f32 %v57, %v83
  %v123 = vmul.f32 %v58, %v87
  %v124 = vmul.f32 %v59, %v91
  %v125 = vmul.f32 %v60, %v83
  %v126 = vmul.f32 %v61, %v87
  %v127 = vmul.f32 %v62, %v91
  %v128 = vmul.f32 %v63, %v83
  %v129 = vmul.f32 %v64, %v87
  %v130 = vmul.f32 %v65, %v91
  %v131 = vmul.f32 %v66, %v83
  %v132 = vmul.f32 %v67, %v87
  %v133 = vmul.f32 %v68, %v91
  %v134 = vmul.f32 %v69, %v83
  %v135 = vmul.f32 %v70, %v87
  %v136 = vmul.f32 %v71, %v91
  %v137 = vmul.f32 %v72, %v83
  %v138 = vmul.f32 %v73, %v87
  %v139 = vmul.f32 %v74, %v91
  %v140 = vmul.f32 %v75, %v83
  %v141 = vmul.f32 %v76, %v87
  %v142 = vmul.f32 %v77, %v91
  %v143 = vpack.c.bf16 %v98, %v95
  %v144 = vpack.c.bf16 %v99, %v96
  %v145 = vpack.c.bf16 %v100, %v97
  %v146 = vpack.c.bf16 %v104, %v101
  %v147 = vpack.c.bf16 %v105, %v102
  %v148 = vpack.c.bf16 %v106, %v103
  %v149 = vpack.c.bf16 %v110, %v107
  %v150 = vpack.c.bf16 %v111, %v108
  %v151 = vpack.c.bf16 %v112, %v109
  %v152 = vpack.c.bf16 %v116, %v113
  %v153 = vpack.c.bf16 %v117, %v114
  %v154 = vpack.c.bf16 %v118, %v115
  %v155 = vpack.c.bf16 %v122, %v119
  %v156 = vpack.c.bf16 %v123, %v120
  %v157 = vpack.c.bf16 %v124, %v121
  %v158 = vpack.c.bf16 %v128, %v125
  %v159 = vpack.c.bf16 %v129, %v126
  %v160 = vpack.c.bf16 %v130, %v127
  %v161 = vpack.c.bf16 %v134, %v131
  %v162 = vpack.c.bf16 %v135, %v132
  %v163 = vpack.c.bf16 %v136, %v133
  %v164 = vpack.c.bf16 %v140, %v137
  %v165 = vpack.c.bf16 %v141, %v138
  %v166 = vpack.c.bf16 %v142, %v139
  %v167 = vld [vmem:[%s0] sm:$0xff]
  %v168 = vld [vmem:[%s0 + $0x8] sm:$0xff]
  %v169 = vld [vmem:[%s0 + $0x10] sm:$0xff]
  %v170 = vld [vmem:[%s0 + $0x18] sm:$0xff]
  %v171 = vld [vmem:[%s0 + $0x20] sm:$0xff]
  %v172 = vld [vmem:[%s0 + $0x28] sm:$0xff]
  %v173 = vld [vmem:[%s0 + $0x30] sm:$0xff]
  %v174 = vld [vmem:[%s0 + $0x38] sm:$0xff]
  %v175 = vld [vmem:[%s0 + $0x40] sm:$0xff]
  %v176 = vld [vmem:[%s0 + $0x48] sm:$0xff]
  %v177 = vld [vmem:[%s0 + $0x50] sm:$0xff]
  %v178 = vld [vmem:[%s0 + $0x58] sm:$0xff]
  %v179 = vld [vmem:[%s0 + $0x60] sm:$0xff]
  %v180 = vld [vmem:[%s0 + $0x68] sm:$0xff]
  %v181 = vld [vmem:[%s0 + $0x70] sm:$0xff]
  %v182 = vld [vmem:[%s0 + $0x78] sm:$0xff]
  %v183 = vld [vmem:[%s0 + $0x80] sm:$0xff]
  %v184 = vld [vmem:[%s0 + $0x88] sm:$0xff]
  %v185 = vld [vmem:[%s0 + $0x90] sm:$0xff]
  %v186 = vld [vmem:[%s0 + $0x98] sm:$0xff]
  %v187 = vld [vmem:[%s0 + $0xa0] sm:$0xff]
  %v188 = vld [vmem:[%s0 + $0xa8] sm:$0xff]
  %v189 = vld [vmem:[%s0 + $0xb0] sm:$0xff]
  %v190 = vld [vmem:[%s0 + $0xb8] sm:$0xff]
  %v191 = vld [vmem:[%s0 + $0xc0] sm:$0xff]
  %v192 = vld [vmem:[%s0 + $0xc8] sm:$0xff]
  %v193 = vld [vmem:[%s0 + $0xd0] sm:$0xff]
  %v194 = vld [vmem:[%s0 + $0xd8] sm:$0xff]
  %v195 = vld [vmem:[%s0 + $0xe0] sm:$0xff]
  %v196 = vld [vmem:[%s0 + $0xe8] sm:$0xff]
  %v197 = vld [vmem:[%s0 + $0xf0] sm:$0xff]
  %v198 = vld [vmem:[%s0 + $0xf8] sm:$0xff]
  %v199 = vld [vmem:[%s0 + $0x100] sm:$0xff]
  %v200 = vld [vmem:[%s0 + $0x108] sm:$0xff]
  %v201 = vld [vmem:[%s0 + $0x110] sm:$0xff]
  %v202 = vld [vmem:[%s0 + $0x118] sm:$0xff]
  %v203 = vld [vmem:[%s0 + $0x120] sm:$0xff]
  %v204 = vld [vmem:[%s0 + $0x128] sm:$0xff]
  %v205 = vld [vmem:[%s0 + $0x130] sm:$0xff]
  %v206 = vld [vmem:[%s0 + $0x138] sm:$0xff]
  %v207 = vld [vmem:[%s0 + $0x140] sm:$0xff]
  %v208 = vld [vmem:[%s0 + $0x148] sm:$0xff]
  %v209 = vld [vmem:[%s0 + $0x150] sm:$0xff]
  %v210 = vld [vmem:[%s0 + $0x158] sm:$0xff]
  %v211 = vld [vmem:[%s0 + $0x160] sm:$0xff]
  %v212 = vld [vmem:[%s0 + $0x168] sm:$0xff]
  %v213 = vld [vmem:[%s0 + $0x170] sm:$0xff]
  %v214 = vld [vmem:[%s0 + $0x178] sm:$0xff]
  %v215 = vld [vmem:[%s0 + $0x180] sm:$0xff]
  %v216 = vld [vmem:[%s0 + $0x188] sm:$0xff]
  %v217 = vld [vmem:[%s0 + $0x190] sm:$0xff]
  %v218 = vld [vmem:[%s0 + $0x198] sm:$0xff]
  %v219 = vld [vmem:[%s0 + $0x1a0] sm:$0xff]
  %v220 = vld [vmem:[%s0 + $0x1a8] sm:$0xff]
  %v221 = vld [vmem:[%s0 + $0x1b0] sm:$0xff]
  %v222 = vld [vmem:[%s0 + $0x1b8] sm:$0xff]
  %v223 = vld [vmem:[%s0 + $0x1c0] sm:$0xff]
  %v224 = vld [vmem:[%s0 + $0x1c8] sm:$0xff]
  %v225 = vld [vmem:[%s0 + $0x1d0] sm:$0xff]
  %v226 = vld [vmem:[%s0 + $0x1d8] sm:$0xff]
  %v227 = vld [vmem:[%s0 + $0x1e0] sm:$0xff]
  %v228 = vld [vmem:[%s0 + $0x1e8] sm:$0xff]
  %v229 = vld [vmem:[%s0 + $0x1f0] sm:$0xff]
  %v230 = vld [vmem:[%s0 + $0x1f8] sm:$0xff]
  %v231 = vld [vmem:[%s0 + $0x200] sm:$0xff]
  %v232 = vld [vmem:[%s0 + $0x208] sm:$0xff]
  %v233 = vld [vmem:[%s0 + $0x210] sm:$0xff]
  %v234 = vld [vmem:[%s0 + $0x218] sm:$0xff]
  %v235 = vld [vmem:[%s0 + $0x220] sm:$0xff]
  %v236 = vld [vmem:[%s0 + $0x228] sm:$0xff]
  %v237 = vld [vmem:[%s0 + $0x230] sm:$0xff]
  %v238 = vld [vmem:[%s0 + $0x238] sm:$0xff]
  %v239 = vld [vmem:[%s0 + $0x240] sm:$0xff]
  %v240 = vld [vmem:[%s0 + $0x248] sm:$0xff]
  %v241 = vld [vmem:[%s0 + $0x250] sm:$0xff]
  %v242 = vld [vmem:[%s0 + $0x258] sm:$0xff]
  %v243 = vld [vmem:[%s0 + $0x260] sm:$0xff]
  %v244 = vld [vmem:[%s0 + $0x268] sm:$0xff]
  %v245 = vld [vmem:[%s0 + $0x270] sm:$0xff]
  %v246 = vld [vmem:[%s0 + $0x278] sm:$0xff]
  %v247 = vld [vmem:[%s0 + $0x280] sm:$0xff]
  %v248 = vld [vmem:[%s0 + $0x288] sm:$0xff]
  %v249 = vld [vmem:[%s0 + $0x290] sm:$0xff]
  %v250 = vld [vmem:[%s0 + $0x298] sm:$0xff]
  %v251 = vld [vmem:[%s0 + $0x2a0] sm:$0xff]
  %v252 = vld [vmem:[%s0 + $0x2a8] sm:$0xff]
  %v253 = vld [vmem:[%s0 + $0x2b0] sm:$0xff]
  %v254 = vld [vmem:[%s0 + $0x2b8] sm:$0xff]
  %v255 = vld [vmem:[%s0 + $0x2c0] sm:$0xff]
  %v256 = vld [vmem:[%s0 + $0x2c8] sm:$0xff]
  %v257 = vld [vmem:[%s0 + $0x2d0] sm:$0xff]
  %v258 = vld [vmem:[%s0 + $0x2d8] sm:$0xff]
  %v259 = vld [vmem:[%s0 + $0x2e0] sm:$0xff]
  %v260 = vld [vmem:[%s0 + $0x2e8] sm:$0xff]
  %v261 = vld [vmem:[%s0 + $0x2f0] sm:$0xff]
  %v262 = vld [vmem:[%s0 + $0x2f8] sm:$0xff]
  %v263 = vpack.c.bf16 %v169, %v167
  %v264 = vpack.c.bf16 %v170, %v168
  %v265 = vpack.c.bf16 %v173, %v171
  %v266 = vpack.c.bf16 %v174, %v172
  %v267 = vpack.c.bf16 %v177, %v175
  %v268 = vpack.c.bf16 %v178, %v176
  %v269 = vpack.c.bf16 %v181, %v179
  %v270 = vpack.c.bf16 %v182, %v180
  %v271 = vpack.c.bf16 %v185, %v183
  %v272 = vpack.c.bf16 %v186, %v184
  %v273 = vpack.c.bf16 %v189, %v187
  %v274 = vpack.c.bf16 %v190, %v188
  %v275 = vpack.c.bf16 %v193, %v191
  %v276 = vpack.c.bf16 %v194, %v192
  %v277 = vpack.c.bf16 %v197, %v195
  %v278 = vpack.c.bf16 %v198, %v196
  %v279 = vpack.c.bf16 %v201, %v199
  %v280 = vpack.c.bf16 %v202, %v200
  %v281 = vpack.c.bf16 %v205, %v203
  %v282 = vpack.c.bf16 %v206, %v204
  %v283 = vpack.c.bf16 %v209, %v207
  %v284 = vpack.c.bf16 %v210, %v208
  %v285 = vpack.c.bf16 %v213, %v211
  %v286 = vpack.c.bf16 %v214, %v212
  %v287 = vpack.c.bf16 %v217, %v215
  %v288 = vpack.c.bf16 %v218, %v216
  %v289 = vpack.c.bf16 %v221, %v219
  %v290 = vpack.c.bf16 %v222, %v220
  %v291 = vpack.c.bf16 %v225, %v223
  %v292 = vpack.c.bf16 %v226, %v224
  %v293 = vpack.c.bf16 %v229, %v227
  %v294 = vpack.c.bf16 %v230, %v228
  %v295 = vpack.c.bf16 %v233, %v231
  %v296 = vpack.c.bf16 %v234, %v232
  %v297 = vpack.c.bf16 %v237, %v235
  %v298 = vpack.c.bf16 %v238, %v236
  %v299 = vpack.c.bf16 %v241, %v239
  %v300 = vpack.c.bf16 %v242, %v240
  %v301 = vpack.c.bf16 %v245, %v243
  %v302 = vpack.c.bf16 %v246, %v244
  %v303 = vpack.c.bf16 %v249, %v247
  %v304 = vpack.c.bf16 %v250, %v248
  %v305 = vpack.c.bf16 %v253, %v251
  %v306 = vpack.c.bf16 %v254, %v252
  %v307 = vpack.c.bf16 %v257, %v255
  %v308 = vpack.c.bf16 %v258, %v256
  %v309 = vpack.c.bf16 %v261, %v259
  %v310 = vpack.c.bf16 %v262, %v260
  %311 = vmatprep.subr.bf16.mxu0 %v264
  %312 = vmatpush1.bf16.msra.mxu0 %v263
  %313 = vmatprep.subr.bf16.mxu0 %v266
  %314 = vmatpush1.bf16.msra.mxu0 %v265
  %315 = vmatprep.subr.bf16.mxu0 %v268
  %316 = vmatpush1.bf16.msra.mxu0 %v267
  %317 = vmatprep.subr.bf16.mxu0 %v270
  %318 = vmatpush1.bf16.msra.mxu0 %v269
  %319 = vmatprep.subr.bf16.mxu0 %v272
  %320 = vmatpush1.bf16.msra.mxu0 %v271
  %321 = vmatprep.subr.bf16.mxu0 %v274
  %322 = vmatpush1.bf16.msra.mxu0 %v273
  %323 = vmatprep.subr.bf16.mxu0 %v276
  %324 = vmatpush1.bf16.msra.mxu0 %v275
  %325 = vmatprep.subr.bf16.mxu0 %v278
  %326 = vmatpush1.bf16.msra.mxu0 %v277
  %327 = vmatprep.subr.bf16.mxu0 %v280
  %328 = vmatpush1.bf16.msra.mxu0 %v279
  %329 = vmatprep.subr.bf16.mxu0 %v282
  %330 = vmatpush1.bf16.msra.mxu0 %v281
  %331 = vmatprep.subr.bf16.mxu0 %v284
  %332 = vmatpush1.bf16.msra.mxu0 %v283
  %333 = vmatprep.subr.bf16.mxu0 %v286
  %334 = vmatpush1.bf16.msra.mxu0 %v285
  %335 = vmatprep.subr.bf16.mxu0 %v288
  %336 = vmatpush1.bf16.msra.mxu0 %v287
  %337 = vmatprep.subr.bf16.mxu0 %v290
  %338 = vmatpush1.bf16.msra.mxu0 %v289
  %339 = vmatprep.subr.bf16.mxu0 %v292
  %340 = vmatpush1.bf16.msra.mxu0 %v291
  %341 = vmatprep.subr.bf16.mxu0 %v294
  %342 = vmatpush1.bf16.msra.mxu0 %v293
  %343 = vmatprep.mubr.bf16.mxu0 %v144
  %344 = vmatmul.mubr.bf16.gmra.mrb[0].mxu0 %v143
  %v345 = vpop.f32.mrb[0].mxu0
  %v346 = vadd.f32 0.0, %v345
  %v347 = vpop.f32.mrb[0].mxu0
  %v348 = vadd.f32 0.0, %v347
  %v349 = vpop.f32.mrb[0].mxu0
  %v350 = vadd.f32 0.0, %v349
  %v351 = vpop.f32.mrb[0].mxu0
  %v352 = vadd.f32 0.0, %v351
  %353 = vmatprep.mubr.bf16.mxu0 %v147
  %354 = vmatmul.mubr.bf16.gmra.mrb[0].mxu0 %v146
  %v355 = vpop.f32.mrb[0].mxu0
  %v356 = vadd.f32 0.0, %v355
  %v357 = vpop.f32.mrb[0].mxu0
  %v358 = vadd.f32 0.0, %v357
  %v359 = vpop.f32.mrb[0].mxu0
  %v360 = vadd.f32 0.0, %v359
  %v361 = vpop.f32.mrb[0].mxu0
  %v362 = vadd.f32 0.0, %v361
  %363 = vmatprep.mubr.bf16.mxu0 %v150
  %364 = vmatmul.mubr.bf16.gmra.mrb[0].mxu0 %v149
  %v365 = vpop.f32.mrb[0].mxu0
  %v366 = vadd.f32 0.0, %v365
  %v367 = vpop.f32.mrb[0].mxu0
  %v368 = vadd.f32 0.0, %v367
  %v369 = vpop.f32.mrb[0].mxu0
  %v370 = vadd.f32 0.0, %v369
  %v371 = vpop.f32.mrb[0].mxu0
  %v372 = vadd.f32 0.0, %v371
  %373 = vmatprep.mubr.bf16.mxu0 %v153
  %374 = vmatmul.mubr.bf16.gmra.mrb[0].mxu0 %v152
  %v375 = vpop.f32.mrb[0].mxu0
  %v376 = vadd.f32 0.0, %v375
  %v377 = vpop.f32.mrb[0].mxu0
  %v378 = vadd.f32 0.0, %v377
  %v379 = vpop.f32.mrb[0].mxu0
  %v380 = vadd.f32 0.0, %v379
  %v381 = vpop.f32.mrb[0].mxu0
  %v382 = vadd.f32 0.0, %v381
  %383 = vmatprep.mubr.bf16.mxu0 %v156
  %384 = vmatmul.mubr.bf16.gmra.mrb[0].mxu0 %v155
  %v385 = vpop.f32.mrb[0].mxu0
  %v386 = vadd.f32 0.0, %v385
  %v387 = vpop.f32.mrb[0].mxu0
  %v388 = vadd.f32 0.0, %v387
  %v389 = vpop.f32.mrb[0].mxu0
  %v390 = vadd.f32 0.0, %v389
  %v391 = vpop.f32.mrb[0].mxu0
  %v392 = vadd.f32 0.0, %v391
  %393 = vmatprep.mubr.bf16.mxu0 %v159
  %394 = vmatmul.mubr.bf16.gmra.mrb[0].mxu0 %v158
  %v395 = vpop.f32.mrb[0].mxu0
  %v396 = vadd.f32 0.0, %v395
  %v397 = vpop.f32.mrb[0].mxu0
  %v398 = vadd.f32 0.0, %v397
  %v399 = vpop.f32.mrb[0].mxu0
  %v400 = vadd.f32 0.0, %v399
  %v401 = vpop.f32.mrb[0].mxu0
  %v402 = vadd.f32 0.0, %v401
  %403 = vmatprep.mubr.bf16.mxu0 %v162
  %404 = vmatmul.mubr.bf16.gmra.mrb[0].mxu0 %v161
  %v405 = vpop.f32.mrb[0].mxu0
  %v406 = vadd.f32 0.0, %v405
  %v407 = vpop.f32.mrb[0].mxu0
  %v408 = vadd.f32 0.0, %v407
  %v409 = vpop.f32.mrb[0].mxu0
  %v410 = vadd.f32 0.0, %v409
  %v411 = vpop.f32.mrb[0].mxu0
  %v412 = vadd.f32 0.0, %v411
  %413 = vmatprep.mubr.bf16.mxu0 %v165
  %414 = vmatmul.mubr.bf16.gmra.mrb[0].mxu0 %v164
  %v415 = vpop.f32.mrb[0].mxu0
  %v416 = vadd.f32 0.0, %v415
  %v417 = vpop.f32.mrb[0].mxu0
  %v418 = vadd.f32 0.0, %v417
  %v419 = vpop.f32.mrb[0].mxu0
  %v420 = vadd.f32 0.0, %v419
  %v421 = vpop.f32.mrb[0].mxu0
  %v422 = vadd.f32 0.0, %v421
  %423 = vdwg.mxu0
  %424 = vmatprep.subr.bf16.mxu0 %v296
  %425 = vmatpush1.bf16.msra.mxu0 %v295
  %426 = vmatprep.subr.bf16.mxu0 %v298
  %427 = vmatpush1.bf16.msra.mxu0 %v297
  %428 = vmatprep.subr.bf16.mxu0 %v300
  %429 = vmatpush1.bf16.msra.mxu0 %v299
  %430 = vmatprep.subr.bf16.mxu0 %v302
  %431 = vmatpush1.bf16.msra.mxu0 %v301
  %432 = vmatprep.subr.bf16.mxu0 %v304
  %433 = vmatpush1.bf16.msra.mxu0 %v303
  %434 = vmatprep.subr.bf16.mxu0 %v306
  %435 = vmatpush1.bf16.msra.mxu0 %v305
  %436 = vmatprep.subr.bf16.mxu0 %v308
  %437 = vmatpush1.bf16.msra.mxu0 %v307
  %438 = vmatprep.subr.bf16.mxu0 %v310
  %439 = vmatpush1.bf16.msra.mxu0 %v309
  %440 = vmatprep.subr.bf16.mxu0 0
  %441 = vmatpush1.bf16.msra.mxu0 0
  %442 = vmatprep.subr.bf16.mxu0 0
  %443 = vmatpush1.bf16.msra.mxu0 0
  %444 = vmatprep.subr.bf16.mxu0 0
  %445 = vmatpush1.bf16.msra.mxu0 0
  %446 = vmatprep.subr.bf16.mxu0 0
  %447 = vmatpush1.bf16.msra.mxu0 0
  %448 = vmatprep.subr.bf16.mxu0 0
  %449 = vmatpush1.bf16.msra.mxu0 0
  %450 = vmatprep.subr.bf16.mxu0 0
  %451 = vmatpush1.bf16.msra.mxu0 0
  %452 = vmatprep.subr.bf16.mxu0 0
  %453 = vmatpush1.bf16.msra.mxu0 0
  %454 = vmatprep.subr.bf16.mxu0 0
  %455 = vmatpush1.bf16.msra.mxu0 0
  %456 = vmatprep.mubr.bf16.mxu0 0
  %457 = vmatmul.mubr.bf16.gmra.mrb[0].mxu0 %v145
  %v458 = vpop.f32.mrb[0].mxu0
  %v459 = vadd.f32 %v346, %v458
  %v460 = vpop.f32.mrb[0].mxu0
  %v461 = vadd.f32 %v348, %v460
  %v462 = vpop.f32.mrb[0].mxu0
  %v463 = vadd.f32 %v350, %v462
  %v464 = vpop.f32.mrb[0].mxu0
  %v465 = vadd.f32 %v352, %v464
  %466 = vmatprep.mubr.bf16.mxu0 0
  %467 = vmatmul.mubr.bf16.gmra.mrb[0].mxu0 %v148
  %v468 = vpop.f32.mrb[0].mxu0
  %v469 = vadd.f32 %v356, %v468
  %v470 = vpop.f32.mrb[0].mxu0
  %v471 = vadd.f32 %v358, %v470
  %v472 = vpop.f32.mrb[0].mxu0
  %v473 = vadd.f32 %v360, %v472
  %v474 = vpop.f32.mrb[0].mxu0
  %v475 = vadd.f32 %v362, %v474
  %476 = vmatprep.mubr.bf16.mxu0 0
  %477 = vmatmul.mubr.bf16.gmra.mrb[0].mxu0 %v151
  %v478 = vpop.f32.mrb[0].mxu0
  %v479 = vadd.f32 %v366, %v478
  %v480 = vpop.f32.mrb[0].mxu0
  %v481 = vadd.f32 %v368, %v480
  %v482 = vpop.f32.mrb[0].mxu0
  %v483 = vadd.f32 %v370, %v482
  %v484 = vpop.f32.mrb[0].mxu0
  %v485 = vadd.f32 %v372, %v484
  %486 = vmatprep.mubr.bf16.mxu0 0
  %487 = vmatmul.mubr.bf16.gmra.mrb[0].mxu0 %v154
  %v488 = vpop.f32.mrb[0].mxu0
  %v489 = vadd.f32 %v376, %v488
  %v490 = vpop.f32.mrb[0].mxu0
  %v491 = vadd.f32 %v378, %v490
  %v492 = vpop.f32.mrb[0].mxu0
  %v493 = vadd.f32 %v380, %v492
  %v494 = vpop.f32.mrb[0].mxu0
  %v495 = vadd.f32 %v382, %v494
  %496 = vmatprep.mubr.bf16.mxu0 0
  %497 = vmatmul.mubr.bf16.gmra.mrb[0].mxu0 %v157
  %v498 = vpop.f32.mrb[0].mxu0
  %v499 = vadd.f32 %v386, %v498
  %v500 = vpop.f32.mrb[0].mxu0
  %v501 = vadd.f32 %v388, %v500
  %v502 = vpop.f32.mrb[0].mxu0
  %v503 = vadd.f32 %v390, %v502
  %v504 = vpop.f32.mrb[0].mxu0
  %v505 = vadd.f32 %v392, %v504
  %506 = vmatprep.mubr.bf16.mxu0 0
  %507 = vmatmul.mubr.bf16.gmra.mrb[0].mxu0 %v160
  %v508 = vpop.f32.mrb[0].mxu0
  %v509 = vadd.f32 %v396, %v508
  %v510 = vpop.f32.mrb[0].mxu0
  %v511 = vadd.f32 %v398, %v510
  %v512 = vpop.f32.mrb[0].mxu0
  %v513 = vadd.f32 %v400, %v512
  %v514 = vpop.f32.mrb[0].mxu0
  %v515 = vadd.f32 %v402, %v514
  %516 = vmatprep.mubr.bf16.mxu0 0
  %517 = vmatmul.mubr.bf16.gmra.mrb[0].mxu0 %v163
  %v518 = vpop.f32.mrb[0].mxu0
  %v519 = vadd.f32 %v406, %v518
  %v520 = vpop.f32.mrb[0].mxu0
  %v521 = vadd.f32 %v408, %v520
  %v522 = vpop.f32.mrb[0].mxu0
  %v523 = vadd.f32 %v410, %v522
  %v524 = vpop.f32.mrb[0].mxu0
  %v525 = vadd.f32 %v412, %v524
  %526 = vmatprep.mubr.bf16.mxu0 0
  %527 = vmatmul.mubr.bf16.gmra.mrb[0].mxu0 %v166
  %v528 = vpop.f32.mrb[0].mxu0
  %v529 = vadd.f32 %v416, %v528
  %v530 = vpop.f32.mrb[0].mxu0
  %v531 = vadd.f32 %v418, %v530
  %v532 = vpop.f32.mrb[0].mxu0
  %v533 = vadd.f32 %v420, %v532
  %v534 = vpop.f32.mrb[0].mxu0
  %v535 = vadd.f32 %v422, %v534
  %536 = vdwg.mxu0
  %vm537 = vcmask 556032
  %v538 = vsel %vm537, %v461, 0.0
  %v539 = vadd.f32 %v459, %v538
  %540 = vadd.xlane.f32.xlu0 %v539
  %v541 = vpop.xlane.xlu0 %540
  %v542 = vsel %vm537, %v465, 0.0
  %v543 = vadd.f32 %v463, %v542
  %544 = vadd.xlane.f32.xlu0 %v543
  %v545 = vpop.xlane.xlu0 %544
  %v546 = vsel %vm537, %v471, 0.0
  %v547 = vadd.f32 %v469, %v546
  %548 = vadd.xlane.f32.xlu0 %v547
  %v549 = vpop.xlane.xlu0 %548
  %v550 = vsel %vm537, %v475, 0.0
  %v551 = vadd.f32 %v473, %v550
  %552 = vadd.xlane.f32.xlu0 %v551
  %v553 = vpop.xlane.xlu0 %552
  %v554 = vsel %vm537, %v481, 0.0
  %v555 = vadd.f32 %v479, %v554
  %556 = vadd.xlane.f32.xlu0 %v555
  %v557 = vpop.xlane.xlu0 %556
  %v558 = vsel %vm537, %v485, 0.0
  %v559 = vadd.f32 %v483, %v558
  %560 = vadd.xlane.f32.xlu0 %v559
  %v561 = vpop.xlane.xlu0 %560
  %v562 = vsel %vm537, %v491, 0.0
  %v563 = vadd.f32 %v489, %v562
  %564 = vadd.xlane.f32.xlu0 %v563
  %v565 = vpop.xlane.xlu0 %564
  %v566 = vsel %vm537, %v495, 0.0
  %v567 = vadd.f32 %v493, %v566
  %568 = vadd.xlane.f32.xlu0 %v567
  %v569 = vpop.xlane.xlu0 %568
  %v570 = vsel %vm537, %v501, 0.0
  %v571 = vadd.f32 %v499, %v570
  %572 = vadd.xlane.f32.xlu0 %v571
  %v573 = vpop.xlane.xlu0 %572
  %v574 = vsel %vm537, %v505, 0.0
  %v575 = vadd.f32 %v503, %v574
  %576 = vadd.xlane.f32.xlu0 %v575
  %v577 = vpop.xlane.xlu0 %576
  %v578 = vsel %vm537, %v511, 0.0
  %v579 = vadd.f32 %v509, %v578
  %580 = vadd.xlane.f32.xlu0 %v579
  %v581 = vpop.xlane.xlu0 %580
  %v582 = vsel %vm537, %v515, 0.0
  %v583 = vadd.f32 %v513, %v582
  %584 = vadd.xlane.f32.xlu0 %v583
  %v585 = vpop.xlane.xlu0 %584
  %v586 = vsel %vm537, %v521, 0.0
  %v587 = vadd.f32 %v519, %v586
  %588 = vadd.xlane.f32.xlu0 %v587
  %v589 = vpop.xlane.xlu0 %588
  %v590 = vsel %vm537, %v525, 0.0
  %v591 = vadd.f32 %v523, %v590
  %592 = vadd.xlane.f32.xlu0 %v591
  %v593 = vpop.xlane.xlu0 %592
  %v594 = vsel %vm537, %v531, 0.0
  %v595 = vadd.f32 %v529, %v594
  %596 = vadd.xlane.f32.xlu0 %v595
  %v597 = vpop.xlane.xlu0 %596
  %v598 = vsel %vm537, %v535, 0.0
  %v599 = vadd.f32 %v533, %v598
  %600 = vadd.xlane.f32.xlu0 %v599
  %v601 = vpop.xlane.xlu0 %600
  %v602 = vmul.f32 %v541, 0.0051020407
  %v603 = vmul.f32 %v545, 0.0051020407
  %v604 = vmul.f32 %v549, 0.0051020407
  %v605 = vmul.f32 %v553, 0.0051020407
  %v606 = vmul.f32 %v557, 0.0051020407
  %v607 = vmul.f32 %v561, 0.0051020407
  %v608 = vmul.f32 %v565, 0.0051020407
  %v609 = vmul.f32 %v569, 0.0051020407
  %v610 = vmul.f32 %v573, 0.0051020407
  %v611 = vmul.f32 %v577, 0.0051020407
  %v612 = vmul.f32 %v581, 0.0051020407
  %v613 = vmul.f32 %v585, 0.0051020407
  %v614 = vmul.f32 %v589, 0.0051020407
  %v615 = vmul.f32 %v593, 0.0051020407
  %v616 = vmul.f32 %v597, 0.0051020407
  %v617 = vmul.f32 %v601, 0.0051020407
  %v618 = vmul.f32 %v459, %v459
  %v619 = vmul.f32 %v461, %v461
  %v620 = vmul.f32 %v463, %v463
  %v621 = vmul.f32 %v465, %v465
  %v622 = vmul.f32 %v469, %v469
  %v623 = vmul.f32 %v471, %v471
  %v624 = vmul.f32 %v473, %v473
  %v625 = vmul.f32 %v475, %v475
  %v626 = vmul.f32 %v479, %v479
  %v627 = vmul.f32 %v481, %v481
  %v628 = vmul.f32 %v483, %v483
  %v629 = vmul.f32 %v485, %v485
  %v630 = vmul.f32 %v489, %v489
  %v631 = vmul.f32 %v491, %v491
  %v632 = vmul.f32 %v493, %v493
  %v633 = vmul.f32 %v495, %v495
  %v634 = vmul.f32 %v499, %v499
  %v635 = vmul.f32 %v501, %v501
  %v636 = vmul.f32 %v503, %v503
  %v637 = vmul.f32 %v505, %v505
  %v638 = vmul.f32 %v509, %v509
  %v639 = vmul.f32 %v511, %v511
  %v640 = vmul.f32 %v513, %v513
  %v641 = vmul.f32 %v515, %v515
  %v642 = vmul.f32 %v519, %v519
  %v643 = vmul.f32 %v521, %v521
  %v644 = vmul.f32 %v523, %v523
  %v645 = vmul.f32 %v525, %v525
  %v646 = vmul.f32 %v529, %v529
  %v647 = vmul.f32 %v531, %v531
  %v648 = vmul.f32 %v533, %v533
  %v649 = vmul.f32 %v535, %v535
  %v650 = vsel %vm537, %v619, 0.0
  %v651 = vadd.f32 %v618, %v650
  %652 = vadd.xlane.f32.xlu0 %v651
  %v653 = vpop.xlane.xlu0 %652
  %v654 = vsel %vm537, %v621, 0.0
  %v655 = vadd.f32 %v620, %v654
  %656 = vadd.xlane.f32.xlu0 %v655
  %v657 = vpop.xlane.xlu0 %656
  %v658 = vsel %vm537, %v623, 0.0
  %v659 = vadd.f32 %v622, %v658
  %660 = vadd.xlane.f32.xlu0 %v659
  %v661 = vpop.xlane.xlu0 %660
  %v662 = vsel %vm537, %v625, 0.0
  %v663 = vadd.f32 %v624, %v662
  %664 = vadd.xlane.f32.xlu0 %v663
  %v665 = vpop.xlane.xlu0 %664
  %v666 = vsel %vm537, %v627, 0.0
  %v667 = vadd.f32 %v626, %v666
  %668 = vadd.xlane.f32.xlu0 %v667
  %v669 = vpop.xlane.xlu0 %668
  %v670 = vsel %vm537, %v629, 0.0
  %v671 = vadd.f32 %v628, %v670
  %672 = vadd.xlane.f32.xlu0 %v671
  %v673 = vpop.xlane.xlu0 %672
  %v674 = vsel %vm537, %v631, 0.0
  %v675 = vadd.f32 %v630, %v674
  %676 = vadd.xlane.f32.xlu0 %v675
  %v677 = vpop.xlane.xlu0 %676
  %v678 = vsel %vm537, %v633, 0.0
  %v679 = vadd.f32 %v632, %v678
  %680 = vadd.xlane.f32.xlu0 %v679
  %v681 = vpop.xlane.xlu0 %680
  %v682 = vsel %vm537, %v635, 0.0
  %v683 = vadd.f32 %v634, %v682
  %684 = vadd.xlane.f32.xlu0 %v683
  %v685 = vpop.xlane.xlu0 %684
  %v686 = vsel %vm537, %v637, 0.0
  %v687 = vadd.f32 %v636, %v686
  %688 = vadd.xlane.f32.xlu0 %v687
  %v689 = vpop.xlane.xlu0 %688
  %v690 = vsel %vm537, %v639, 0.0
  %v691 = vadd.f32 %v638, %v690
  %692 = vadd.xlane.f32.xlu0 %v691
  %v693 = vpop.xlane.xlu0 %692
  %v694 = vsel %vm537, %v641, 0.0
  %v695 = vadd.f32 %v640, %v694
  %696 = vadd.xlane.f32.xlu0 %v695
  %v697 = vpop.xlane.xlu0 %696
  %v698 = vsel %vm537, %v643, 0.0
  %v699 = vadd.f32 %v642, %v698
  %700 = vadd.xlane.f32.xlu0 %v699
  %v701 = vpop.xlane.xlu0 %700
  %v702 = vsel %vm537, %v645, 0.0
  %v703 = vadd.f32 %v644, %v702
  %704 = vadd.xlane.f32.xlu0 %v703
  %v705 = vpop.xlane.xlu0 %704
  %v706 = vsel %vm537, %v647, 0.0
  %v707 = vadd.f32 %v646, %v706
  %708 = vadd.xlane.f32.xlu0 %v707
  %v709 = vpop.xlane.xlu0 %708
  %v710 = vsel %vm537, %v649, 0.0
  %v711 = vadd.f32 %v648, %v710
  %712 = vadd.xlane.f32.xlu0 %v711
  %v713 = vpop.xlane.xlu0 %712
  %v714 = vmul.f32 %v653, 0.0051020407
  %v715 = vmul.f32 %v657, 0.0051020407
  %v716 = vmul.f32 %v661, 0.0051020407
  %v717 = vmul.f32 %v665, 0.0051020407
  %v718 = vmul.f32 %v669, 0.0051020407
  %v719 = vmul.f32 %v673, 0.0051020407
  %v720 = vmul.f32 %v677, 0.0051020407
  %v721 = vmul.f32 %v681, 0.0051020407
  %v722 = vmul.f32 %v685, 0.0051020407
  %v723 = vmul.f32 %v689, 0.0051020407
  %v724 = vmul.f32 %v693, 0.0051020407
  %v725 = vmul.f32 %v697, 0.0051020407
  %v726 = vmul.f32 %v701, 0.0051020407
  %v727 = vmul.f32 %v705, 0.0051020407
  %v728 = vmul.f32 %v709, 0.0051020407
  %v729 = vmul.f32 %v713, 0.0051020407
  %v730 = vmul.f32 %v602, %v602
  %v731 = vmul.f32 %v603, %v603
  %v732 = vmul.f32 %v604, %v604
  %v733 = vmul.f32 %v605, %v605
  %v734 = vmul.f32 %v606, %v606
  %v735 = vmul.f32 %v607, %v607
  %v736 = vmul.f32 %v608, %v608
  %v737 = vmul.f32 %v609, %v609
  %v738 = vmul.f32 %v610, %v610
  %v739 = vmul.f32 %v611, %v611
  %v740 = vmul.f32 %v612, %v612
  %v741 = vmul.f32 %v613, %v613
  %v742 = vmul.f32 %v614, %v614
  %v743 = vmul.f32 %v615, %v615
  %v744 = vmul.f32 %v616, %v616
  %v745 = vmul.f32 %v617, %v617
  %v746 = vsub.f32 %v714, %v730
  %v747 = vsub.f32 %v715, %v731
  %v748 = vsub.f32 %v716, %v732
  %v749 = vsub.f32 %v717, %v733
  %v750 = vsub.f32 %v718, %v734
  %v751 = vsub.f32 %v719, %v735
  %v752 = vsub.f32 %v720, %v736
  %v753 = vsub.f32 %v721, %v737
  %v754 = vsub.f32 %v722, %v738
  %v755 = vsub.f32 %v723, %v739
  %v756 = vsub.f32 %v724, %v740
  %v757 = vsub.f32 %v725, %v741
  %v758 = vsub.f32 %v726, %v742
  %v759 = vsub.f32 %v727, %v743
  %v760 = vsub.f32 %v728, %v744
  %v761 = vsub.f32 %v729, %v745
  %v762 = vsub.f32 %v459, %v602
  %v763 = vsub.f32 %v461, %v602
  %v764 = vsub.f32 %v463, %v603
  %v765 = vsub.f32 %v465, %v603
  %v766 = vsub.f32 %v469, %v604
  %v767 = vsub.f32 %v471, %v604
  %v768 = vsub.f32 %v473, %v605
  %v769 = vsub.f32 %v475, %v605
  %v770 = vsub.f32 %v479, %v606
  %v771 = vsub.f32 %v481, %v606
  %v772 = vsub.f32 %v483, %v607
  %v773 = vsub.f32 %v485, %v607
  %v774 = vsub.f32 %v489, %v608
  %v775 = vsub.f32 %v491, %v608
  %v776 = vsub.f32 %v493, %v609
  %v777 = vsub.f32 %v495, %v609
  %v778 = vsub.f32 %v499, %v610
  %v779 = vsub.f32 %v501, %v610
  %v780 = vsub.f32 %v503, %v611
  %v781 = vsub.f32 %v505, %v611
  %v782 = vsub.f32 %v509, %v612
  %v783 = vsub.f32 %v511, %v612
  %v784 = vsub.f32 %v513, %v613
  %v785 = vsub.f32 %v515, %v613
  %v786 = vsub.f32 %v519, %v614
  %v787 = vsub.f32 %v521, %v614
  %v788 = vsub.f32 %v523, %v615
  %v789 = vsub.f32 %v525, %v615
  %v790 = vsub.f32 %v529, %v616
  %v791 = vsub.f32 %v531, %v616
  %v792 = vsub.f32 %v533, %v617
  %v793 = vsub.f32 %v535, %v617
  %v794 = vadd.f32 %v746, 1e-05
  %v795 = vadd.f32 %v747, 1e-05
  %v796 = vadd.f32 %v748, 1e-05
  %v797 = vadd.f32 %v749, 1e-05
  %v798 = vadd.f32 %v750, 1e-05
  %v799 = vadd.f32 %v751, 1e-05
  %v800 = vadd.f32 %v752, 1e-05
  %v801 = vadd.f32 %v753, 1e-05
  %v802 = vadd.f32 %v754, 1e-05
  %v803 = vadd.f32 %v755, 1e-05
  %v804 = vadd.f32 %v756, 1e-05
  %v805 = vadd.f32 %v757, 1e-05
  %v806 = vadd.f32 %v758, 1e-05
  %v807 = vadd.f32 %v759, 1e-05
  %v808 = vadd.f32 %v760, 1e-05
  %v809 = vadd.f32 %v761, 1e-05
  %v810 = vrsqrt.pop %v794
  %v811 = vrsqrt.pop %v795
  %v812 = vrsqrt.pop %v796
  %v813 = vrsqrt.pop %v797
  %v814 = vrsqrt.pop %v798
  %v815 = vrsqrt.pop %v799
  %v816 = vrsqrt.pop %v800
  %v817 = vrsqrt.pop %v801
  %v818 = vrsqrt.pop %v802
  %v819 = vrsqrt.pop %v803
  %v820 = vrsqrt.pop %v804
  %v821 = vrsqrt.pop %v805
  %v822 = vrsqrt.pop %v806
  %v823 = vrsqrt.pop %v807
  %v824 = vrsqrt.pop %v808
  %v825 = vrsqrt.pop %v809
  %v826 = vmul.f32 %v762, %v810
  %v827 = vmul.f32 %v763, %v810
  %v828 = vmul.f32 %v764, %v811
  %v829 = vmul.f32 %v765, %v811
  %v830 = vmul.f32 %v766, %v812
  %v831 = vmul.f32 %v767, %v812
  %v832 = vmul.f32 %v768, %v813
  %v833 = vmul.f32 %v769, %v813
  %v834 = vmul.f32 %v770, %v814
  %v835 = vmul.f32 %v771, %v814
  %v836 = vmul.f32 %v772, %v815
  %v837 = vmul.f32 %v773, %v815
  %v838 = vmul.f32 %v774, %v816
  %v839 = vmul.f32 %v775, %v816
  %v840 = vmul.f32 %v776, %v817
  %v841 = vmul.f32 %v777, %v817
  %v842 = vmul.f32 %v778, %v818
  %v843 = vmul.f32 %v779, %v818
  %v844 = vmul.f32 %v780, %v819
  %v845 = vmul.f32 %v781, %v819
  %v846 = vmul.f32 %v782, %v820
  %v847 = vmul.f32 %v783, %v820
  %v848 = vmul.f32 %v784, %v821
  %v849 = vmul.f32 %v785, %v821
  %v850 = vmul.f32 %v786, %v822
  %v851 = vmul.f32 %v787, %v822
  %v852 = vmul.f32 %v788, %v823
  %v853 = vmul.f32 %v789, %v823
  %v854 = vmul.f32 %v790, %v824
  %v855 = vmul.f32 %v791, %v824
  %v856 = vmul.f32 %v792, %v825
  %v857 = vmul.f32 %v793, %v825
  %v858 = vld [vmem:[%s3] sm:$0xff]
  %v859 = vld [vmem:[%s3 + $0x8] sm:$0xff]
  %v860 = vld [vmem:[%s3 + $0x10] sm:$0xff]
  %v861 = vld [vmem:[%s3 + $0x18] sm:$0xff]
  %v862 = vld [vmem:[%s3 + $0x20] sm:$0xff]
  %v863 = vld [vmem:[%s3 + $0x28] sm:$0xff]
  %v864 = vld [vmem:[%s3 + $0x30] sm:$0xff]
  %v865 = vld [vmem:[%s3 + $0x38] sm:$0xff]
  %v866 = vld [vmem:[%s3 + $0x40] sm:$0xff]
  %v867 = vld [vmem:[%s3 + $0x48] sm:$0xff]
  %v868 = vld [vmem:[%s3 + $0x50] sm:$0xff]
  %v869 = vld [vmem:[%s3 + $0x58] sm:$0xff]
  %v870 = vld [vmem:[%s3 + $0x60] sm:$0xff]
  %v871 = vld [vmem:[%s3 + $0x68] sm:$0xff]
  %v872 = vld [vmem:[%s3 + $0x70] sm:$0xff]
  %v873 = vld [vmem:[%s3 + $0x78] sm:$0xff]
  %875 = vset.pattern.permute.xlu0 0
  %876 = vperm.xlu0 %875, %v858
  %v877 = vpop.permute.xlu0 %876
  %880 = vset.pattern.permute.xlu0 0
  %881 = vperm.xlu0 %880, %v859
  %v882 = vpop.permute.xlu0 %881
  %885 = vset.pattern.permute.xlu0 0
  %886 = vperm.xlu0 %885, %v860
  %v887 = vpop.permute.xlu0 %886
  %890 = vset.pattern.permute.xlu0 0
  %891 = vperm.xlu0 %890, %v861
  %v892 = vpop.permute.xlu0 %891
  %895 = vset.pattern.permute.xlu0 0
  %896 = vperm.xlu0 %895, %v862
  %v897 = vpop.permute.xlu0 %896
  %900 = vset.pattern.permute.xlu0 0
  %901 = vperm.xlu0 %900, %v863
  %v902 = vpop.permute.xlu0 %901
  %905 = vset.pattern.permute.xlu0 0
  %906 = vperm.xlu0 %905, %v864
  %v907 = vpop.permute.xlu0 %906
  %910 = vset.pattern.permute.xlu0 0
  %911 = vperm.xlu0 %910, %v865
  %v912 = vpop.permute.xlu0 %911
  %915 = vset.pattern.permute.xlu0 0
  %916 = vperm.xlu0 %915, %v866
  %v917 = vpop.permute.xlu0 %916
  %920 = vset.pattern.permute.xlu0 0
  %921 = vperm.xlu0 %920, %v867
  %v922 = vpop.permute.xlu0 %921
  %925 = vset.pattern.permute.xlu0 0
  %926 = vperm.xlu0 %925, %v868
  %v927 = vpop.permute.xlu0 %926
  %930 = vset.pattern.permute.xlu0 0
  %931 = vperm.xlu0 %930, %v869
  %v932 = vpop.permute.xlu0 %931
  %935 = vset.pattern.permute.xlu0 0
  %936 = vperm.xlu0 %935, %v870
  %v937 = vpop.permute.xlu0 %936
  %940 = vset.pattern.permute.xlu0 0
  %941 = vperm.xlu0 %940, %v871
  %v942 = vpop.permute.xlu0 %941
  %945 = vset.pattern.permute.xlu0 0
  %946 = vperm.xlu0 %945, %v872
  %v947 = vpop.permute.xlu0 %946
  %950 = vset.pattern.permute.xlu0 0
  %951 = vperm.xlu0 %950, %v873
  %v952 = vpop.permute.xlu0 %951
  %v954 = vmul.f32 %v826, %v877
  %v955 = vmul.f32 %v827, %v877
  %v956 = vmul.f32 %v828, %v882
  %v957 = vmul.f32 %v829, %v882
  %v958 = vmul.f32 %v830, %v887
  %v959 = vmul.f32 %v831, %v887
  %v960 = vmul.f32 %v832, %v892
  %v961 = vmul.f32 %v833, %v892
  %v962 = vmul.f32 %v834, %v897
  %v963 = vmul.f32 %v835, %v897
  %v964 = vmul.f32 %v836, %v902
  %v965 = vmul.f32 %v837, %v902
  %v966 = vmul.f32 %v838, %v907
  %v967 = vmul.f32 %v839, %v907
  %v968 = vmul.f32 %v840, %v912
  %v969 = vmul.f32 %v841, %v912
  %v970 = vmul.f32 %v842, %v917
  %v971 = vmul.f32 %v843, %v917
  %v972 = vmul.f32 %v844, %v922
  %v973 = vmul.f32 %v845, %v922
  %v974 = vmul.f32 %v846, %v927
  %v975 = vmul.f32 %v847, %v927
  %v976 = vmul.f32 %v848, %v932
  %v977 = vmul.f32 %v849, %v932
  %v978 = vmul.f32 %v850, %v937
  %v979 = vmul.f32 %v851, %v937
  %v980 = vmul.f32 %v852, %v942
  %v981 = vmul.f32 %v853, %v942
  %v982 = vmul.f32 %v854, %v947
  %v983 = vmul.f32 %v855, %v947
  %v984 = vmul.f32 %v856, %v952
  %v985 = vmul.f32 %v857, %v952
  %v986 = vld [vmem:[%s4] sm:$0xff]
  %v987 = vld [vmem:[%s4 + $0x8] sm:$0xff]
  %v988 = vld [vmem:[%s4 + $0x10] sm:$0xff]
  %v989 = vld [vmem:[%s4 + $0x18] sm:$0xff]
  %v990 = vld [vmem:[%s4 + $0x20] sm:$0xff]
  %v991 = vld [vmem:[%s4 + $0x28] sm:$0xff]
  %v992 = vld [vmem:[%s4 + $0x30] sm:$0xff]
  %v993 = vld [vmem:[%s4 + $0x38] sm:$0xff]
  %v994 = vld [vmem:[%s4 + $0x40] sm:$0xff]
  %v995 = vld [vmem:[%s4 + $0x48] sm:$0xff]
  %v996 = vld [vmem:[%s4 + $0x50] sm:$0xff]
  %v997 = vld [vmem:[%s4 + $0x58] sm:$0xff]
  %v998 = vld [vmem:[%s4 + $0x60] sm:$0xff]
  %v999 = vld [vmem:[%s4 + $0x68] sm:$0xff]
  %v1000 = vld [vmem:[%s4 + $0x70] sm:$0xff]
  %v1001 = vld [vmem:[%s4 + $0x78] sm:$0xff]
  %1003 = vset.pattern.permute.xlu0 0
  %1004 = vperm.xlu0 %1003, %v986
  %v1005 = vpop.permute.xlu0 %1004
  %1008 = vset.pattern.permute.xlu0 0
  %1009 = vperm.xlu0 %1008, %v987
  %v1010 = vpop.permute.xlu0 %1009
  %1013 = vset.pattern.permute.xlu0 0
  %1014 = vperm.xlu0 %1013, %v988
  %v1015 = vpop.permute.xlu0 %1014
  %1018 = vset.pattern.permute.xlu0 0
  %1019 = vperm.xlu0 %1018, %v989
  %v1020 = vpop.permute.xlu0 %1019
  %1023 = vset.pattern.permute.xlu0 0
  %1024 = vperm.xlu0 %1023, %v990
  %v1025 = vpop.permute.xlu0 %1024
  %1028 = vset.pattern.permute.xlu0 0
  %1029 = vperm.xlu0 %1028, %v991
  %v1030 = vpop.permute.xlu0 %1029
  %1033 = vset.pattern.permute.xlu0 0
  %1034 = vperm.xlu0 %1033, %v992
  %v1035 = vpop.permute.xlu0 %1034
  %1038 = vset.pattern.permute.xlu0 0
  %1039 = vperm.xlu0 %1038, %v993
  %v1040 = vpop.permute.xlu0 %1039
  %1043 = vset.pattern.permute.xlu0 0
  %1044 = vperm.xlu0 %1043, %v994
  %v1045 = vpop.permute.xlu0 %1044
  %1048 = vset.pattern.permute.xlu0 0
  %1049 = vperm.xlu0 %1048, %v995
  %v1050 = vpop.permute.xlu0 %1049
  %1053 = vset.pattern.permute.xlu0 0
  %1054 = vperm.xlu0 %1053, %v996
  %v1055 = vpop.permute.xlu0 %1054
  %1058 = vset.pattern.permute.xlu0 0
  %1059 = vperm.xlu0 %1058, %v997
  %v1060 = vpop.permute.xlu0 %1059
  %1063 = vset.pattern.permute.xlu0 0
  %1064 = vperm.xlu0 %1063, %v998
  %v1065 = vpop.permute.xlu0 %1064
  %1068 = vset.pattern.permute.xlu0 0
  %1069 = vperm.xlu0 %1068, %v999
  %v1070 = vpop.permute.xlu0 %1069
  %1073 = vset.pattern.permute.xlu0 0
  %1074 = vperm.xlu0 %1073, %v1000
  %v1075 = vpop.permute.xlu0 %1074
  %1078 = vset.pattern.permute.xlu0 0
  %1079 = vperm.xlu0 %1078, %v1001
  %v1080 = vpop.permute.xlu0 %1079
  %v1082 = vadd.f32 %v954, %v1005
  %v1083 = vadd.f32 %v955, %v1005
  %v1084 = vadd.f32 %v956, %v1010
  %v1085 = vadd.f32 %v957, %v1010
  %v1086 = vadd.f32 %v958, %v1015
  %v1087 = vadd.f32 %v959, %v1015
  %v1088 = vadd.f32 %v960, %v1020
  %v1089 = vadd.f32 %v961, %v1020
  %v1090 = vadd.f32 %v962, %v1025
  %v1091 = vadd.f32 %v963, %v1025
  %v1092 = vadd.f32 %v964, %v1030
  %v1093 = vadd.f32 %v965, %v1030
  %v1094 = vadd.f32 %v966, %v1035
  %v1095 = vadd.f32 %v967, %v1035
  %v1096 = vadd.f32 %v968, %v1040
  %v1097 = vadd.f32 %v969, %v1040
  %v1098 = vadd.f32 %v970, %v1045
  %v1099 = vadd.f32 %v971, %v1045
  %v1100 = vadd.f32 %v972, %v1050
  %v1101 = vadd.f32 %v973, %v1050
  %v1102 = vadd.f32 %v974, %v1055
  %v1103 = vadd.f32 %v975, %v1055
  %v1104 = vadd.f32 %v976, %v1060
  %v1105 = vadd.f32 %v977, %v1060
  %v1106 = vadd.f32 %v978, %v1065
  %v1107 = vadd.f32 %v979, %v1065
  %v1108 = vadd.f32 %v980, %v1070
  %v1109 = vadd.f32 %v981, %v1070
  %v1110 = vadd.f32 %v982, %v1075
  %v1111 = vadd.f32 %v983, %v1075
  %v1112 = vadd.f32 %v984, %v1080
  %v1113 = vadd.f32 %v985, %v1080
  %v1114 = vld [vmem:[%s5] sm:$0xff]
  %v1115 = vld [vmem:[%s5 + $0x8] sm:$0xff]
  %v1116 = vld [vmem:[%s5 + $0x10] sm:$0xff]
  %v1117 = vld [vmem:[%s5 + $0x18] sm:$0xff]
  %v1118 = vld [vmem:[%s5 + $0x20] sm:$0xff]
  %v1119 = vld [vmem:[%s5 + $0x28] sm:$0xff]
  %v1120 = vld [vmem:[%s5 + $0x30] sm:$0xff]
  %v1121 = vld [vmem:[%s5 + $0x38] sm:$0xff]
  %v1122 = vld [vmem:[%s5 + $0x40] sm:$0xff]
  %v1123 = vld [vmem:[%s5 + $0x48] sm:$0xff]
  %v1124 = vld [vmem:[%s5 + $0x50] sm:$0xff]
  %v1125 = vld [vmem:[%s5 + $0x58] sm:$0xff]
  %v1126 = vld [vmem:[%s5 + $0x60] sm:$0xff]
  %v1127 = vld [vmem:[%s5 + $0x68] sm:$0xff]
  %v1128 = vld [vmem:[%s5 + $0x70] sm:$0xff]
  %v1129 = vld [vmem:[%s5 + $0x78] sm:$0xff]
  %v1130 = vld [vmem:[%s5 + $0x80] sm:$0xff]
  %v1131 = vld [vmem:[%s5 + $0x88] sm:$0xff]
  %v1132 = vld [vmem:[%s5 + $0x90] sm:$0xff]
  %v1133 = vld [vmem:[%s5 + $0x98] sm:$0xff]
  %v1134 = vld [vmem:[%s5 + $0xa0] sm:$0xff]
  %v1135 = vld [vmem:[%s5 + $0xa8] sm:$0xff]
  %v1136 = vld [vmem:[%s5 + $0xb0] sm:$0xff]
  %v1137 = vld [vmem:[%s5 + $0xb8] sm:$0xff]
  %v1138 = vld [vmem:[%s5 + $0xc0] sm:$0xff]
  %v1139 = vld [vmem:[%s5 + $0xc8] sm:$0xff]
  %v1140 = vld [vmem:[%s5 + $0xd0] sm:$0xff]
  %v1141 = vld [vmem:[%s5 + $0xd8] sm:$0xff]
  %v1142 = vld [vmem:[%s5 + $0xe0] sm:$0xff]
  %v1143 = vld [vmem:[%s5 + $0xe8] sm:$0xff]
  %v1144 = vld [vmem:[%s5 + $0xf0] sm:$0xff]
  %v1145 = vld [vmem:[%s5 + $0xf8] sm:$0xff]
  %v1146 = vld [vmem:[%s5 + $0x100] sm:$0xff]
  %v1147 = vld [vmem:[%s5 + $0x108] sm:$0xff]
  %v1148 = vld [vmem:[%s5 + $0x110] sm:$0xff]
  %v1149 = vld [vmem:[%s5 + $0x118] sm:$0xff]
  %v1150 = vld [vmem:[%s5 + $0x120] sm:$0xff]
  %v1151 = vld [vmem:[%s5 + $0x128] sm:$0xff]
  %v1152 = vld [vmem:[%s5 + $0x130] sm:$0xff]
  %v1153 = vld [vmem:[%s5 + $0x138] sm:$0xff]
  %v1154 = vld [vmem:[%s5 + $0x140] sm:$0xff]
  %v1155 = vld [vmem:[%s5 + $0x148] sm:$0xff]
  %v1156 = vld [vmem:[%s5 + $0x150] sm:$0xff]
  %v1157 = vld [vmem:[%s5 + $0x158] sm:$0xff]
  %v1158 = vld [vmem:[%s5 + $0x160] sm:$0xff]
  %v1159 = vld [vmem:[%s5 + $0x168] sm:$0xff]
  %v1160 = vld [vmem:[%s5 + $0x170] sm:$0xff]
  %v1161 = vld [vmem:[%s5 + $0x178] sm:$0xff]
  %v1162 = vld [vmem:[%s5 + $0x180] sm:$0xff]
  %v1163 = vld [vmem:[%s5 + $0x188] sm:$0xff]
  %v1164 = vld [vmem:[%s5 + $0x190] sm:$0xff]
  %v1165 = vld [vmem:[%s5 + $0x198] sm:$0xff]
  %v1166 = vld [vmem:[%s5 + $0x1a0] sm:$0xff]
  %v1167 = vld [vmem:[%s5 + $0x1a8] sm:$0xff]
  %v1168 = vld [vmem:[%s5 + $0x1b0] sm:$0xff]
  %v1169 = vld [vmem:[%s5 + $0x1b8] sm:$0xff]
  %v1170 = vld [vmem:[%s5 + $0x1c0] sm:$0xff]
  %v1171 = vld [vmem:[%s5 + $0x1c8] sm:$0xff]
  %v1172 = vld [vmem:[%s5 + $0x1d0] sm:$0xff]
  %v1173 = vld [vmem:[%s5 + $0x1d8] sm:$0xff]
  %v1174 = vld [vmem:[%s5 + $0x1e0] sm:$0xff]
  %v1175 = vld [vmem:[%s5 + $0x1e8] sm:$0xff]
  %v1176 = vld [vmem:[%s5 + $0x1f0] sm:$0xff]
  %v1177 = vld [vmem:[%s5 + $0x1f8] sm:$0xff]
  %v1178 = vld [vmem:[%s5 + $0x200] sm:$0xff]
  %v1179 = vld [vmem:[%s5 + $0x208] sm:$0xff]
  %v1180 = vld [vmem:[%s5 + $0x210] sm:$0xff]
  %v1181 = vld [vmem:[%s5 + $0x218] sm:$0xff]
  %v1182 = vld [vmem:[%s5 + $0x220] sm:$0xff]
  %v1183 = vld [vmem:[%s5 + $0x228] sm:$0xff]
  %v1184 = vld [vmem:[%s5 + $0x230] sm:$0xff]
  %v1185 = vld [vmem:[%s5 + $0x238] sm:$0xff]
  %v1186 = vld [vmem:[%s5 + $0x240] sm:$0xff]
  %v1187 = vld [vmem:[%s5 + $0x248] sm:$0xff]
  %v1188 = vld [vmem:[%s5 + $0x250] sm:$0xff]
  %v1189 = vld [vmem:[%s5 + $0x258] sm:$0xff]
  %v1190 = vld [vmem:[%s5 + $0x260] sm:$0xff]
  %v1191 = vld [vmem:[%s5 + $0x268] sm:$0xff]
  %v1192 = vld [vmem:[%s5 + $0x270] sm:$0xff]
  %v1193 = vld [vmem:[%s5 + $0x278] sm:$0xff]
  %v1194 = vld [vmem:[%s5 + $0x280] sm:$0xff]
  %v1195 = vld [vmem:[%s5 + $0x288] sm:$0xff]
  %v1196 = vld [vmem:[%s5 + $0x290] sm:$0xff]
  %v1197 = vld [vmem:[%s5 + $0x298] sm:$0xff]
  %v1198 = vld [vmem:[%s5 + $0x2a0] sm:$0xff]
  %v1199 = vld [vmem:[%s5 + $0x2a8] sm:$0xff]
  %v1200 = vld [vmem:[%s5 + $0x2b0] sm:$0xff]
  %v1201 = vld [vmem:[%s5 + $0x2b8] sm:$0xff]
  %v1202 = vld [vmem:[%s5 + $0x2c0] sm:$0xff]
  %v1203 = vld [vmem:[%s5 + $0x2c8] sm:$0xff]
  %v1204 = vld [vmem:[%s5 + $0x2d0] sm:$0xff]
  %v1205 = vld [vmem:[%s5 + $0x2d8] sm:$0xff]
  %v1206 = vld [vmem:[%s5 + $0x2e0] sm:$0xff]
  %v1207 = vld [vmem:[%s5 + $0x2e8] sm:$0xff]
  %v1208 = vld [vmem:[%s5 + $0x2f0] sm:$0xff]
  %v1209 = vld [vmem:[%s5 + $0x2f8] sm:$0xff]
  %v1210 = vpack.c.bf16 %v1115, %v1114
  %v1211 = vpack.c.bf16 %v1117, %v1116
  %v1212 = vpack.c.bf16 %v1119, %v1118
  %v1213 = vpack.c.bf16 %v1121, %v1120
  %v1214 = vpack.c.bf16 %v1123, %v1122
  %v1215 = vpack.c.bf16 %v1125, %v1124
  %v1216 = vpack.c.bf16 %v1127, %v1126
  %v1217 = vpack.c.bf16 %v1129, %v1128
  %v1218 = vpack.c.bf16 %v1131, %v1130
  %v1219 = vpack.c.bf16 %v1133, %v1132
  %v1220 = vpack.c.bf16 %v1135, %v1134
  %v1221 = vpack.c.bf16 %v1137, %v1136
  %v1222 = vpack.c.bf16 %v1139, %v1138
  %v1223 = vpack.c.bf16 %v1141, %v1140
  %v1224 = vpack.c.bf16 %v1143, %v1142
  %v1225 = vpack.c.bf16 %v1145, %v1144
  %v1226 = vpack.c.bf16 %v1147, %v1146
  %v1227 = vpack.c.bf16 %v1149, %v1148
  %v1228 = vpack.c.bf16 %v1151, %v1150
  %v1229 = vpack.c.bf16 %v1153, %v1152
  %v1230 = vpack.c.bf16 %v1155, %v1154
  %v1231 = vpack.c.bf16 %v1157, %v1156
  %v1232 = vpack.c.bf16 %v1159, %v1158
  %v1233 = vpack.c.bf16 %v1161, %v1160
  %v1234 = vpack.c.bf16 %v1163, %v1162
  %v1235 = vpack.c.bf16 %v1165, %v1164
  %v1236 = vpack.c.bf16 %v1167, %v1166
  %v1237 = vpack.c.bf16 %v1169, %v1168
  %v1238 = vpack.c.bf16 %v1171, %v1170
  %v1239 = vpack.c.bf16 %v1173, %v1172
  %v1240 = vpack.c.bf16 %v1175, %v1174
  %v1241 = vpack.c.bf16 %v1177, %v1176
  %v1242 = vpack.c.bf16 %v1179, %v1178
  %v1243 = vpack.c.bf16 %v1181, %v1180
  %v1244 = vpack.c.bf16 %v1183, %v1182
  %v1245 = vpack.c.bf16 %v1185, %v1184
  %v1246 = vpack.c.bf16 %v1187, %v1186
  %v1247 = vpack.c.bf16 %v1189, %v1188
  %v1248 = vpack.c.bf16 %v1191, %v1190
  %v1249 = vpack.c.bf16 %v1193, %v1192
  %v1250 = vpack.c.bf16 %v1195, %v1194
  %v1251 = vpack.c.bf16 %v1197, %v1196
  %v1252 = vpack.c.bf16 %v1199, %v1198
  %v1253 = vpack.c.bf16 %v1201, %v1200
  %v1254 = vpack.c.bf16 %v1203, %v1202
  %v1255 = vpack.c.bf16 %v1205, %v1204
  %v1256 = vpack.c.bf16 %v1207, %v1206
  %v1257 = vpack.c.bf16 %v1209, %v1208
  %v1258 = vpack.c.bf16 %v1084, %v1082
  %v1259 = vpack.c.bf16 %v1085, %v1083
  %v1260 = vpack.c.bf16 %v1088, %v1086
  %v1261 = vpack.c.bf16 %v1089, %v1087
  %v1262 = vpack.c.bf16 %v1092, %v1090
  %v1263 = vpack.c.bf16 %v1093, %v1091
  %v1264 = vpack.c.bf16 %v1096, %v1094
  %v1265 = vpack.c.bf16 %v1097, %v1095
  %v1266 = vpack.c.bf16 %v1100, %v1098
  %v1267 = vpack.c.bf16 %v1101, %v1099
  %v1268 = vpack.c.bf16 %v1104, %v1102
  %v1269 = vpack.c.bf16 %v1105, %v1103
  %v1270 = vpack.c.bf16 %v1108, %v1106
  %v1271 = vpack.c.bf16 %v1109, %v1107
  %v1272 = vpack.c.bf16 %v1112, %v1110
  %v1273 = vpack.c.bf16 %v1113, %v1111
  %1274 = vmatprep.subr.bf16.mxu0 %v1259
  %1275 = vmatpush1.bf16.msra.mxu0 %v1258
  %1276 = vmatprep.subr.bf16.mxu0 %v1261
  %1277 = vmatpush1.bf16.msra.mxu0 %v1260
  %1278 = vmatprep.subr.bf16.mxu0 %v1263
  %1279 = vmatpush1.bf16.msra.mxu0 %v1262
  %1280 = vmatprep.subr.bf16.mxu0 %v1265
  %1281 = vmatpush1.bf16.msra.mxu0 %v1264
  %1282 = vmatprep.subr.bf16.mxu0 %v1267
  %1283 = vmatpush1.bf16.msra.mxu0 %v1266
  %1284 = vmatprep.subr.bf16.mxu0 %v1269
  %1285 = vmatpush1.bf16.msra.mxu0 %v1268
  %1286 = vmatprep.subr.bf16.mxu0 %v1271
  %1287 = vmatpush1.bf16.msra.mxu0 %v1270
  %1288 = vmatprep.subr.bf16.mxu0 %v1273
  %1289 = vmatpush1.bf16.msra.mxu0 %v1272
  %1290 = vmatprep.subr.bf16.mxu0 0
  %1291 = vmatpush1.bf16.msra.mxu0 0
  %1292 = vmatprep.subr.bf16.mxu0 0
  %1293 = vmatpush1.bf16.msra.mxu0 0
  %1294 = vmatprep.subr.bf16.mxu0 0
  %1295 = vmatpush1.bf16.msra.mxu0 0
  %1296 = vmatprep.subr.bf16.mxu0 0
  %1297 = vmatpush1.bf16.msra.mxu0 0
  %1298 = vmatprep.subr.bf16.mxu0 0
  %1299 = vmatpush1.bf16.msra.mxu0 0
  %1300 = vmatprep.subr.bf16.mxu0 0
  %1301 = vmatpush1.bf16.msra.mxu0 0
  %1302 = vmatprep.subr.bf16.mxu0 0
  %1303 = vmatpush1.bf16.msra.mxu0 0
  %1304 = vmatprep.subr.bf16.mxu0 0
  %1305 = vmatpush1.bf16.msra.mxu0 0
  %1306 = vmatprep.mubr.bf16.mxu0 0
  %1307 = vmatmul.mubr.bf16.gmra.mrb[0].mxu0 %v1210
  %v1308 = vpop.f32.mrb[0].mxu0
  %v1309 = vadd.f32 0.0, %v1308
  %v1310 = vpop.f32.mrb[0].mxu0
  %v1311 = vadd.f32 0.0, %v1310
  %v1312 = vpop.f32.mrb[0].mxu0
  %v1313 = vadd.f32 0.0, %v1312
  %v1314 = vpop.f32.mrb[0].mxu0
  %v1315 = vadd.f32 0.0, %v1314
  %1316 = vmatprep.mubr.bf16.mxu0 0
  %1317 = vmatmul.mubr.bf16.gmra.mrb[0].mxu0 %v1211
  %v1318 = vpop.f32.mrb[0].mxu0
  %v1319 = vadd.f32 0.0, %v1318
  %v1320 = vpop.f32.mrb[0].mxu0
  %v1321 = vadd.f32 0.0, %v1320
  %v1322 = vpop.f32.mrb[0].mxu0
  %v1323 = vadd.f32 0.0, %v1322
  %v1324 = vpop.f32.mrb[0].mxu0
  %v1325 = vadd.f32 0.0, %v1324
  %1326 = vmatprep.mubr.bf16.mxu0 0
  %1327 = vmatmul.mubr.bf16.gmra.mrb[0].mxu0 %v1212
  %v1328 = vpop.f32.mrb[0].mxu0
  %v1329 = vadd.f32 0.0, %v1328
  %v1330 = vpop.f32.mrb[0].mxu0
  %v1331 = vadd.f32 0.0, %v1330
  %v1332 = vpop.f32.mrb[0].mxu0
  %v1333 = vadd.f32 0.0, %v1332
  %v1334 = vpop.f32.mrb[0].mxu0
  %v1335 = vadd.f32 0.0, %v1334
  %1336 = vmatprep.mubr.bf16.mxu0 0
  %1337 = vmatmul.mubr.bf16.gmra.mrb[0].mxu0 %v1213
  %v1338 = vpop.f32.mrb[0].mxu0
  %v1339 = vadd.f32 0.0, %v1338
  %v1340 = vpop.f32.mrb[0].mxu0
  %v1341 = vadd.f32 0.0, %v1340
  %v1342 = vpop.f32.mrb[0].mxu0
  %v1343 = vadd.f32 0.0, %v1342
  %v1344 = vpop.f32.mrb[0].mxu0
  %v1345 = vadd.f32 0.0, %v1344
  %1346 = vmatprep.mubr.bf16.mxu0 0
  %1347 = vmatmul.mubr.bf16.gmra.mrb[0].mxu0 %v1214
  %v1348 = vpop.f32.mrb[0].mxu0
  %v1349 = vadd.f32 0.0, %v1348
  %v1350 = vpop.f32.mrb[0].mxu0
  %v1351 = vadd.f32 0.0, %v1350
  %v1352 = vpop.f32.mrb[0].mxu0
  %v1353 = vadd.f32 0.0, %v1352
  %v1354 = vpop.f32.mrb[0].mxu0
  %v1355 = vadd.f32 0.0, %v1354
  %1356 = vmatprep.mubr.bf16.mxu0 0
  %1357 = vmatmul.mubr.bf16.gmra.mrb[0].mxu0 %v1215
  %v1358 = vpop.f32.mrb[0].mxu0
  %v1359 = vadd.f32 0.0, %v1358
  %v1360 = vpop.f32.mrb[0].mxu0
  %v1361 = vadd.f32 0.0, %v1360
  %v1362 = vpop.f32.mrb[0].mxu0
  %v1363 = vadd.f32 0.0, %v1362
  %v1364 = vpop.f32.mrb[0].mxu0
  %v1365 = vadd.f32 0.0, %v1364
  %1366 = vmatprep.mubr.bf16.mxu0 0
  %1367 = vmatmul.mubr.bf16.gmra.mrb[0].mxu0 %v1216
  %v1368 = vpop.f32.mrb[0].mxu0
  %v1369 = vadd.f32 0.0, %v1368
  %v1370 = vpop.f32.mrb[0].mxu0
  %v1371 = vadd.f32 0.0, %v1370
  %v1372 = vpop.f32.mrb[0].mxu0
  %v1373 = vadd.f32 0.0, %v1372
  %v1374 = vpop.f32.mrb[0].mxu0
  %v1375 = vadd.f32 0.0, %v1374
  %1376 = vmatprep.mubr.bf16.mxu0 0
  %1377 = vmatmul.mubr.bf16.gmra.mrb[0].mxu0 %v1217
  %v1378 = vpop.f32.mrb[0].mxu0
  %v1379 = vadd.f32 0.0, %v1378
  %v1380 = vpop.f32.mrb[0].mxu0
  %v1381 = vadd.f32 0.0, %v1380
  %v1382 = vpop.f32.mrb[0].mxu0
  %v1383 = vadd.f32 0.0, %v1382
  %v1384 = vpop.f32.mrb[0].mxu0
  %v1385 = vadd.f32 0.0, %v1384
  %1386 = vmatprep.mubr.bf16.mxu0 0
  %1387 = vmatmul.mubr.bf16.gmra.mrb[0].mxu0 %v1218
  %v1388 = vpop.f32.mrb[0].mxu0
  %v1389 = vadd.f32 0.0, %v1388
  %v1390 = vpop.f32.mrb[0].mxu0
  %v1391 = vadd.f32 0.0, %v1390
  %v1392 = vpop.f32.mrb[0].mxu0
  %v1393 = vadd.f32 0.0, %v1392
  %v1394 = vpop.f32.mrb[0].mxu0
  %v1395 = vadd.f32 0.0, %v1394
  %1396 = vmatprep.mubr.bf16.mxu0 0
  %1397 = vmatmul.mubr.bf16.gmra.mrb[0].mxu0 %v1219
  %v1398 = vpop.f32.mrb[0].mxu0
  %v1399 = vadd.f32 0.0, %v1398
  %v1400 = vpop.f32.mrb[0].mxu0
  %v1401 = vadd.f32 0.0, %v1400
  %v1402 = vpop.f32.mrb[0].mxu0
  %v1403 = vadd.f32 0.0, %v1402
  %v1404 = vpop.f32.mrb[0].mxu0
  %v1405 = vadd.f32 0.0, %v1404
  %1406 = vmatprep.mubr.bf16.mxu0 0
  %1407 = vmatmul.mubr.bf16.gmra.mrb[0].mxu0 %v1220
  %v1408 = vpop.f32.mrb[0].mxu0
  %v1409 = vadd.f32 0.0, %v1408
  %v1410 = vpop.f32.mrb[0].mxu0
  %v1411 = vadd.f32 0.0, %v1410
  %v1412 = vpop.f32.mrb[0].mxu0
  %v1413 = vadd.f32 0.0, %v1412
  %v1414 = vpop.f32.mrb[0].mxu0
  %v1415 = vadd.f32 0.0, %v1414
  %1416 = vmatprep.mubr.bf16.mxu0 0
  %1417 = vmatmul.mubr.bf16.gmra.mrb[0].mxu0 %v1221
  %v1418 = vpop.f32.mrb[0].mxu0
  %v1419 = vadd.f32 0.0, %v1418
  %v1420 = vpop.f32.mrb[0].mxu0
  %v1421 = vadd.f32 0.0, %v1420
  %v1422 = vpop.f32.mrb[0].mxu0
  %v1423 = vadd.f32 0.0, %v1422
  %v1424 = vpop.f32.mrb[0].mxu0
  %v1425 = vadd.f32 0.0, %v1424
  %1426 = vmatprep.mubr.bf16.mxu0 0
  %1427 = vmatmul.mubr.bf16.gmra.mrb[0].mxu0 %v1222
  %v1428 = vpop.f32.mrb[0].mxu0
  %v1429 = vadd.f32 0.0, %v1428
  %v1430 = vpop.f32.mrb[0].mxu0
  %v1431 = vadd.f32 0.0, %v1430
  %v1432 = vpop.f32.mrb[0].mxu0
  %v1433 = vadd.f32 0.0, %v1432
  %v1434 = vpop.f32.mrb[0].mxu0
  %v1435 = vadd.f32 0.0, %v1434
  %1436 = vmatprep.mubr.bf16.mxu0 0
  %1437 = vmatmul.mubr.bf16.gmra.mrb[0].mxu0 %v1223
  %v1438 = vpop.f32.mrb[0].mxu0
  %v1439 = vadd.f32 0.0, %v1438
  %v1440 = vpop.f32.mrb[0].mxu0
  %v1441 = vadd.f32 0.0, %v1440
  %v1442 = vpop.f32.mrb[0].mxu0
  %v1443 = vadd.f32 0.0, %v1442
  %v1444 = vpop.f32.mrb[0].mxu0
  %v1445 = vadd.f32 0.0, %v1444
  %1446 = vmatprep.mubr.bf16.mxu0 0
  %1447 = vmatmul.mubr.bf16.gmra.mrb[0].mxu0 %v1224
  %v1448 = vpop.f32.mrb[0].mxu0
  %v1449 = vadd.f32 0.0, %v1448
  %v1450 = vpop.f32.mrb[0].mxu0
  %v1451 = vadd.f32 0.0, %v1450
  %v1452 = vpop.f32.mrb[0].mxu0
  %v1453 = vadd.f32 0.0, %v1452
  %v1454 = vpop.f32.mrb[0].mxu0
  %v1455 = vadd.f32 0.0, %v1454
  %1456 = vmatprep.mubr.bf16.mxu0 0
  %1457 = vmatmul.mubr.bf16.gmra.mrb[0].mxu0 %v1225
  %v1458 = vpop.f32.mrb[0].mxu0
  %v1459 = vadd.f32 0.0, %v1458
  %v1460 = vpop.f32.mrb[0].mxu0
  %v1461 = vadd.f32 0.0, %v1460
  %v1462 = vpop.f32.mrb[0].mxu0
  %v1463 = vadd.f32 0.0, %v1462
  %v1464 = vpop.f32.mrb[0].mxu0
  %v1465 = vadd.f32 0.0, %v1464
  %1466 = vmatprep.mubr.bf16.mxu0 0
  %1467 = vmatmul.mubr.bf16.gmra.mrb[0].mxu0 %v1226
  %v1468 = vpop.f32.mrb[0].mxu0
  %v1469 = vadd.f32 0.0, %v1468
  %v1470 = vpop.f32.mrb[0].mxu0
  %v1471 = vadd.f32 0.0, %v1470
  %v1472 = vpop.f32.mrb[0].mxu0
  %v1473 = vadd.f32 0.0, %v1472
  %v1474 = vpop.f32.mrb[0].mxu0
  %v1475 = vadd.f32 0.0, %v1474
  %1476 = vmatprep.mubr.bf16.mxu0 0
  %1477 = vmatmul.mubr.bf16.gmra.mrb[0].mxu0 %v1227
  %v1478 = vpop.f32.mrb[0].mxu0
  %v1479 = vadd.f32 0.0, %v1478
  %v1480 = vpop.f32.mrb[0].mxu0
  %v1481 = vadd.f32 0.0, %v1480
  %v1482 = vpop.f32.mrb[0].mxu0
  %v1483 = vadd.f32 0.0, %v1482
  %v1484 = vpop.f32.mrb[0].mxu0
  %v1485 = vadd.f32 0.0, %v1484
  %1486 = vmatprep.mubr.bf16.mxu0 0
  %1487 = vmatmul.mubr.bf16.gmra.mrb[0].mxu0 %v1228
  %v1488 = vpop.f32.mrb[0].mxu0
  %v1489 = vadd.f32 0.0, %v1488
  %v1490 = vpop.f32.mrb[0].mxu0
  %v1491 = vadd.f32 0.0, %v1490
  %v1492 = vpop.f32.mrb[0].mxu0
  %v1493 = vadd.f32 0.0, %v1492
  %v1494 = vpop.f32.mrb[0].mxu0
  %v1495 = vadd.f32 0.0, %v1494
  %1496 = vmatprep.mubr.bf16.mxu0 0
  %1497 = vmatmul.mubr.bf16.gmra.mrb[0].mxu0 %v1229
  %v1498 = vpop.f32.mrb[0].mxu0
  %v1499 = vadd.f32 0.0, %v1498
  %v1500 = vpop.f32.mrb[0].mxu0
  %v1501 = vadd.f32 0.0, %v1500
  %v1502 = vpop.f32.mrb[0].mxu0
  %v1503 = vadd.f32 0.0, %v1502
  %v1504 = vpop.f32.mrb[0].mxu0
  %v1505 = vadd.f32 0.0, %v1504
  %1506 = vmatprep.mubr.bf16.mxu0 0
  %1507 = vmatmul.mubr.bf16.gmra.mrb[0].mxu0 %v1230
  %v1508 = vpop.f32.mrb[0].mxu0
  %v1509 = vadd.f32 0.0, %v1508
  %v1510 = vpop.f32.mrb[0].mxu0
  %v1511 = vadd.f32 0.0, %v1510
  %v1512 = vpop.f32.mrb[0].mxu0
  %v1513 = vadd.f32 0.0, %v1512
  %v1514 = vpop.f32.mrb[0].mxu0
  %v1515 = vadd.f32 0.0, %v1514
  %1516 = vmatprep.mubr.bf16.mxu0 0
  %1517 = vmatmul.mubr.bf16.gmra.mrb[0].mxu0 %v1231
  %v1518 = vpop.f32.mrb[0].mxu0
  %v1519 = vadd.f32 0.0, %v1518
  %v1520 = vpop.f32.mrb[0].mxu0
  %v1521 = vadd.f32 0.0, %v1520
  %v1522 = vpop.f32.mrb[0].mxu0
  %v1523 = vadd.f32 0.0, %v1522
  %v1524 = vpop.f32.mrb[0].mxu0
  %v1525 = vadd.f32 0.0, %v1524
  %1526 = vmatprep.mubr.bf16.mxu0 0
  %1527 = vmatmul.mubr.bf16.gmra.mrb[0].mxu0 %v1232
  %v1528 = vpop.f32.mrb[0].mxu0
  %v1529 = vadd.f32 0.0, %v1528
  %v1530 = vpop.f32.mrb[0].mxu0
  %v1531 = vadd.f32 0.0, %v1530
  %v1532 = vpop.f32.mrb[0].mxu0
  %v1533 = vadd.f32 0.0, %v1532
  %v1534 = vpop.f32.mrb[0].mxu0
  %v1535 = vadd.f32 0.0, %v1534
  %1536 = vmatprep.mubr.bf16.mxu0 0
  %1537 = vmatmul.mubr.bf16.gmra.mrb[0].mxu0 %v1233
  %v1538 = vpop.f32.mrb[0].mxu0
  %v1539 = vadd.f32 0.0, %v1538
  %v1540 = vpop.f32.mrb[0].mxu0
  %v1541 = vadd.f32 0.0, %v1540
  %v1542 = vpop.f32.mrb[0].mxu0
  %v1543 = vadd.f32 0.0, %v1542
  %v1544 = vpop.f32.mrb[0].mxu0
  %v1545 = vadd.f32 0.0, %v1544
  %1546 = vmatprep.mubr.bf16.mxu0 0
  %1547 = vmatmul.mubr.bf16.gmra.mrb[0].mxu0 %v1234
  %v1548 = vpop.f32.mrb[0].mxu0
  %v1549 = vadd.f32 0.0, %v1548
  %v1550 = vpop.f32.mrb[0].mxu0
  %v1551 = vadd.f32 0.0, %v1550
  %v1552 = vpop.f32.mrb[0].mxu0
  %v1553 = vadd.f32 0.0, %v1552
  %v1554 = vpop.f32.mrb[0].mxu0
  %v1555 = vadd.f32 0.0, %v1554
  %1556 = vmatprep.mubr.bf16.mxu0 0
  %1557 = vmatmul.mubr.bf16.gmra.mrb[0].mxu0 %v1235
  %v1558 = vpop.f32.mrb[0].mxu0
  %v1559 = vadd.f32 0.0, %v1558
  %v1560 = vpop.f32.mrb[0].mxu0
  %v1561 = vadd.f32 0.0, %v1560
  %v1562 = vpop.f32.mrb[0].mxu0
  %v1563 = vadd.f32 0.0, %v1562
  %v1564 = vpop.f32.mrb[0].mxu0
  %v1565 = vadd.f32 0.0, %v1564
  %1566 = vmatprep.mubr.bf16.mxu0 0
  %1567 = vmatmul.mubr.bf16.gmra.mrb[0].mxu0 %v1236
  %v1568 = vpop.f32.mrb[0].mxu0
  %v1569 = vadd.f32 0.0, %v1568
  %v1570 = vpop.f32.mrb[0].mxu0
  %v1571 = vadd.f32 0.0, %v1570
  %v1572 = vpop.f32.mrb[0].mxu0
  %v1573 = vadd.f32 0.0, %v1572
  %v1574 = vpop.f32.mrb[0].mxu0
  %v1575 = vadd.f32 0.0, %v1574
  %1576 = vmatprep.mubr.bf16.mxu0 0
  %1577 = vmatmul.mubr.bf16.gmra.mrb[0].mxu0 %v1237
  %v1578 = vpop.f32.mrb[0].mxu0
  %v1579 = vadd.f32 0.0, %v1578
  %v1580 = vpop.f32.mrb[0].mxu0
  %v1581 = vadd.f32 0.0, %v1580
  %v1582 = vpop.f32.mrb[0].mxu0
  %v1583 = vadd.f32 0.0, %v1582
  %v1584 = vpop.f32.mrb[0].mxu0
  %v1585 = vadd.f32 0.0, %v1584
  %1586 = vmatprep.mubr.bf16.mxu0 0
  %1587 = vmatmul.mubr.bf16.gmra.mrb[0].mxu0 %v1238
  %v1588 = vpop.f32.mrb[0].mxu0
  %v1589 = vadd.f32 0.0, %v1588
  %v1590 = vpop.f32.mrb[0].mxu0
  %v1591 = vadd.f32 0.0, %v1590
  %v1592 = vpop.f32.mrb[0].mxu0
  %v1593 = vadd.f32 0.0, %v1592
  %v1594 = vpop.f32.mrb[0].mxu0
  %v1595 = vadd.f32 0.0, %v1594
  %1596 = vmatprep.mubr.bf16.mxu0 0
  %1597 = vmatmul.mubr.bf16.gmra.mrb[0].mxu0 %v1239
  %v1598 = vpop.f32.mrb[0].mxu0
  %v1599 = vadd.f32 0.0, %v1598
  %v1600 = vpop.f32.mrb[0].mxu0
  %v1601 = vadd.f32 0.0, %v1600
  %v1602 = vpop.f32.mrb[0].mxu0
  %v1603 = vadd.f32 0.0, %v1602
  %v1604 = vpop.f32.mrb[0].mxu0
  %v1605 = vadd.f32 0.0, %v1604
  %1606 = vmatprep.mubr.bf16.mxu0 0
  %1607 = vmatmul.mubr.bf16.gmra.mrb[0].mxu0 %v1240
  %v1608 = vpop.f32.mrb[0].mxu0
  %v1609 = vadd.f32 0.0, %v1608
  %v1610 = vpop.f32.mrb[0].mxu0
  %v1611 = vadd.f32 0.0, %v1610
  %v1612 = vpop.f32.mrb[0].mxu0
  %v1613 = vadd.f32 0.0, %v1612
  %v1614 = vpop.f32.mrb[0].mxu0
  %v1615 = vadd.f32 0.0, %v1614
  %1616 = vmatprep.mubr.bf16.mxu0 0
  %1617 = vmatmul.mubr.bf16.gmra.mrb[0].mxu0 %v1241
  %v1618 = vpop.f32.mrb[0].mxu0
  %v1619 = vadd.f32 0.0, %v1618
  %v1620 = vpop.f32.mrb[0].mxu0
  %v1621 = vadd.f32 0.0, %v1620
  %v1622 = vpop.f32.mrb[0].mxu0
  %v1623 = vadd.f32 0.0, %v1622
  %v1624 = vpop.f32.mrb[0].mxu0
  %v1625 = vadd.f32 0.0, %v1624
  %1626 = vmatprep.mubr.bf16.mxu0 0
  %1627 = vmatmul.mubr.bf16.gmra.mrb[0].mxu0 %v1242
  %v1628 = vpop.f32.mrb[0].mxu0
  %v1629 = vadd.f32 0.0, %v1628
  %v1630 = vpop.f32.mrb[0].mxu0
  %v1631 = vadd.f32 0.0, %v1630
  %v1632 = vpop.f32.mrb[0].mxu0
  %v1633 = vadd.f32 0.0, %v1632
  %v1634 = vpop.f32.mrb[0].mxu0
  %v1635 = vadd.f32 0.0, %v1634
  %1636 = vmatprep.mubr.bf16.mxu0 0
  %1637 = vmatmul.mubr.bf16.gmra.mrb[0].mxu0 %v1243
  %v1638 = vpop.f32.mrb[0].mxu0
  %v1639 = vadd.f32 0.0, %v1638
  %v1640 = vpop.f32.mrb[0].mxu0
  %v1641 = vadd.f32 0.0, %v1640
  %v1642 = vpop.f32.mrb[0].mxu0
  %v1643 = vadd.f32 0.0, %v1642
  %v1644 = vpop.f32.mrb[0].mxu0
  %v1645 = vadd.f32 0.0, %v1644
  %1646 = vmatprep.mubr.bf16.mxu0 0
  %1647 = vmatmul.mubr.bf16.gmra.mrb[0].mxu0 %v1244
  %v1648 = vpop.f32.mrb[0].mxu0
  %v1649 = vadd.f32 0.0, %v1648
  %v1650 = vpop.f32.mrb[0].mxu0
  %v1651 = vadd.f32 0.0, %v1650
  %v1652 = vpop.f32.mrb[0].mxu0
  %v1653 = vadd.f32 0.0, %v1652
  %v1654 = vpop.f32.mrb[0].mxu0
  %v1655 = vadd.f32 0.0, %v1654
  %1656 = vmatprep.mubr.bf16.mxu0 0
  %1657 = vmatmul.mubr.bf16.gmra.mrb[0].mxu0 %v1245
  %v1658 = vpop.f32.mrb[0].mxu0
  %v1659 = vadd.f32 0.0, %v1658
  %v1660 = vpop.f32.mrb[0].mxu0
  %v1661 = vadd.f32 0.0, %v1660
  %v1662 = vpop.f32.mrb[0].mxu0
  %v1663 = vadd.f32 0.0, %v1662
  %v1664 = vpop.f32.mrb[0].mxu0
  %v1665 = vadd.f32 0.0, %v1664
  %1666 = vmatprep.mubr.bf16.mxu0 0
  %1667 = vmatmul.mubr.bf16.gmra.mrb[0].mxu0 %v1246
  %v1668 = vpop.f32.mrb[0].mxu0
  %v1669 = vadd.f32 0.0, %v1668
  %v1670 = vpop.f32.mrb[0].mxu0
  %v1671 = vadd.f32 0.0, %v1670
  %v1672 = vpop.f32.mrb[0].mxu0
  %v1673 = vadd.f32 0.0, %v1672
  %v1674 = vpop.f32.mrb[0].mxu0
  %v1675 = vadd.f32 0.0, %v1674
  %1676 = vmatprep.mubr.bf16.mxu0 0
  %1677 = vmatmul.mubr.bf16.gmra.mrb[0].mxu0 %v1247
  %v1678 = vpop.f32.mrb[0].mxu0
  %v1679 = vadd.f32 0.0, %v1678
  %v1680 = vpop.f32.mrb[0].mxu0
  %v1681 = vadd.f32 0.0, %v1680
  %v1682 = vpop.f32.mrb[0].mxu0
  %v1683 = vadd.f32 0.0, %v1682
  %v1684 = vpop.f32.mrb[0].mxu0
  %v1685 = vadd.f32 0.0, %v1684
  %1686 = vmatprep.mubr.bf16.mxu0 0
  %1687 = vmatmul.mubr.bf16.gmra.mrb[0].mxu0 %v1248
  %v1688 = vpop.f32.mrb[0].mxu0
  %v1689 = vadd.f32 0.0, %v1688
  %v1690 = vpop.f32.mrb[0].mxu0
  %v1691 = vadd.f32 0.0, %v1690
  %v1692 = vpop.f32.mrb[0].mxu0
  %v1693 = vadd.f32 0.0, %v1692
  %v1694 = vpop.f32.mrb[0].mxu0
  %v1695 = vadd.f32 0.0, %v1694
  %1696 = vmatprep.mubr.bf16.mxu0 0
  %1697 = vmatmul.mubr.bf16.gmra.mrb[0].mxu0 %v1249
  %v1698 = vpop.f32.mrb[0].mxu0
  %v1699 = vadd.f32 0.0, %v1698
  %v1700 = vpop.f32.mrb[0].mxu0
  %v1701 = vadd.f32 0.0, %v1700
  %v1702 = vpop.f32.mrb[0].mxu0
  %v1703 = vadd.f32 0.0, %v1702
  %v1704 = vpop.f32.mrb[0].mxu0
  %v1705 = vadd.f32 0.0, %v1704
  %1706 = vmatprep.mubr.bf16.mxu0 0
  %1707 = vmatmul.mubr.bf16.gmra.mrb[0].mxu0 %v1250
  %v1708 = vpop.f32.mrb[0].mxu0
  %v1709 = vadd.f32 0.0, %v1708
  %v1710 = vpop.f32.mrb[0].mxu0
  %v1711 = vadd.f32 0.0, %v1710
  %v1712 = vpop.f32.mrb[0].mxu0
  %v1713 = vadd.f32 0.0, %v1712
  %v1714 = vpop.f32.mrb[0].mxu0
  %v1715 = vadd.f32 0.0, %v1714
  %1716 = vmatprep.mubr.bf16.mxu0 0
  %1717 = vmatmul.mubr.bf16.gmra.mrb[0].mxu0 %v1251
  %v1718 = vpop.f32.mrb[0].mxu0
  %v1719 = vadd.f32 0.0, %v1718
  %v1720 = vpop.f32.mrb[0].mxu0
  %v1721 = vadd.f32 0.0, %v1720
  %v1722 = vpop.f32.mrb[0].mxu0
  %v1723 = vadd.f32 0.0, %v1722
  %v1724 = vpop.f32.mrb[0].mxu0
  %v1725 = vadd.f32 0.0, %v1724
  %1726 = vmatprep.mubr.bf16.mxu0 0
  %1727 = vmatmul.mubr.bf16.gmra.mrb[0].mxu0 %v1252
  %v1728 = vpop.f32.mrb[0].mxu0
  %v1729 = vadd.f32 0.0, %v1728
  %v1730 = vpop.f32.mrb[0].mxu0
  %v1731 = vadd.f32 0.0, %v1730
  %v1732 = vpop.f32.mrb[0].mxu0
  %v1733 = vadd.f32 0.0, %v1732
  %v1734 = vpop.f32.mrb[0].mxu0
  %v1735 = vadd.f32 0.0, %v1734
  %1736 = vmatprep.mubr.bf16.mxu0 0
  %1737 = vmatmul.mubr.bf16.gmra.mrb[0].mxu0 %v1253
  %v1738 = vpop.f32.mrb[0].mxu0
  %v1739 = vadd.f32 0.0, %v1738
  %v1740 = vpop.f32.mrb[0].mxu0
  %v1741 = vadd.f32 0.0, %v1740
  %v1742 = vpop.f32.mrb[0].mxu0
  %v1743 = vadd.f32 0.0, %v1742
  %v1744 = vpop.f32.mrb[0].mxu0
  %v1745 = vadd.f32 0.0, %v1744
  %1746 = vmatprep.mubr.bf16.mxu0 0
  %1747 = vmatmul.mubr.bf16.gmra.mrb[0].mxu0 %v1254
  %v1748 = vpop.f32.mrb[0].mxu0
  %v1749 = vadd.f32 0.0, %v1748
  %v1750 = vpop.f32.mrb[0].mxu0
  %v1751 = vadd.f32 0.0, %v1750
  %v1752 = vpop.f32.mrb[0].mxu0
  %v1753 = vadd.f32 0.0, %v1752
  %v1754 = vpop.f32.mrb[0].mxu0
  %v1755 = vadd.f32 0.0, %v1754
  %1756 = vmatprep.mubr.bf16.mxu0 0
  %1757 = vmatmul.mubr.bf16.gmra.mrb[0].mxu0 %v1255
  %v1758 = vpop.f32.mrb[0].mxu0
  %v1759 = vadd.f32 0.0, %v1758
  %v1760 = vpop.f32.mrb[0].mxu0
  %v1761 = vadd.f32 0.0, %v1760
  %v1762 = vpop.f32.mrb[0].mxu0
  %v1763 = vadd.f32 0.0, %v1762
  %v1764 = vpop.f32.mrb[0].mxu0
  %v1765 = vadd.f32 0.0, %v1764
  %1766 = vmatprep.mubr.bf16.mxu0 0
  %1767 = vmatmul.mubr.bf16.gmra.mrb[0].mxu0 %v1256
  %v1768 = vpop.f32.mrb[0].mxu0
  %v1769 = vadd.f32 0.0, %v1768
  %v1770 = vpop.f32.mrb[0].mxu0
  %v1771 = vadd.f32 0.0, %v1770
  %v1772 = vpop.f32.mrb[0].mxu0
  %v1773 = vadd.f32 0.0, %v1772
  %v1774 = vpop.f32.mrb[0].mxu0
  %v1775 = vadd.f32 0.0, %v1774
  %1776 = vmatprep.mubr.bf16.mxu0 0
  %1777 = vmatmul.mubr.bf16.gmra.mrb[0].mxu0 %v1257
  %v1778 = vpop.f32.mrb[0].mxu0
  %v1779 = vadd.f32 0.0, %v1778
  %v1780 = vpop.f32.mrb[0].mxu0
  %v1781 = vadd.f32 0.0, %v1780
  %v1782 = vpop.f32.mrb[0].mxu0
  %v1783 = vadd.f32 0.0, %v1782
  %v1784 = vpop.f32.mrb[0].mxu0
  %v1785 = vadd.f32 0.0, %v1784
  %1786 = vdwg.mxu0
  %v1787 = vsel %vm537, %v1311, 0.0
  %v1788 = vadd.f32 %v1309, %v1787
  %1789 = vadd.xlane.f32.xlu0 %v1788
  %v1790 = vpop.xlane.xlu0 %1789
  %v1791 = vsel %vm537, %v1315, 0.0
  %v1792 = vadd.f32 %v1313, %v1791
  %1793 = vadd.xlane.f32.xlu0 %v1792
  %v1794 = vpop.xlane.xlu0 %1793
  %v1795 = vsel %vm537, %v1321, 0.0
  %v1796 = vadd.f32 %v1319, %v1795
  %1797 = vadd.xlane.f32.xlu0 %v1796
  %v1798 = vpop.xlane.xlu0 %1797
  %v1799 = vsel %vm537, %v1325, 0.0
  %v1800 = vadd.f32 %v1323, %v1799
  %1801 = vadd.xlane.f32.xlu0 %v1800
  %v1802 = vpop.xlane.xlu0 %1801
  %v1803 = vsel %vm537, %v1331, 0.0
  %v1804 = vadd.f32 %v1329, %v1803
  %1805 = vadd.xlane.f32.xlu0 %v1804
  %v1806 = vpop.xlane.xlu0 %1805
  %v1807 = vsel %vm537, %v1335, 0.0
  %v1808 = vadd.f32 %v1333, %v1807
  %1809 = vadd.xlane.f32.xlu0 %v1808
  %v1810 = vpop.xlane.xlu0 %1809
  %v1811 = vsel %vm537, %v1341, 0.0
  %v1812 = vadd.f32 %v1339, %v1811
  %1813 = vadd.xlane.f32.xlu0 %v1812
  %v1814 = vpop.xlane.xlu0 %1813
  %v1815 = vsel %vm537, %v1345, 0.0
  %v1816 = vadd.f32 %v1343, %v1815
  %1817 = vadd.xlane.f32.xlu0 %v1816
  %v1818 = vpop.xlane.xlu0 %1817
  %v1819 = vsel %vm537, %v1351, 0.0
  %v1820 = vadd.f32 %v1349, %v1819
  %1821 = vadd.xlane.f32.xlu0 %v1820
  %v1822 = vpop.xlane.xlu0 %1821
  %v1823 = vsel %vm537, %v1355, 0.0
  %v1824 = vadd.f32 %v1353, %v1823
  %1825 = vadd.xlane.f32.xlu0 %v1824
  %v1826 = vpop.xlane.xlu0 %1825
  %v1827 = vsel %vm537, %v1361, 0.0
  %v1828 = vadd.f32 %v1359, %v1827
  %1829 = vadd.xlane.f32.xlu0 %v1828
  %v1830 = vpop.xlane.xlu0 %1829
  %v1831 = vsel %vm537, %v1365, 0.0
  %v1832 = vadd.f32 %v1363, %v1831
  %1833 = vadd.xlane.f32.xlu0 %v1832
  %v1834 = vpop.xlane.xlu0 %1833
  %v1835 = vsel %vm537, %v1371, 0.0
  %v1836 = vadd.f32 %v1369, %v1835
  %1837 = vadd.xlane.f32.xlu0 %v1836
  %v1838 = vpop.xlane.xlu0 %1837
  %v1839 = vsel %vm537, %v1375, 0.0
  %v1840 = vadd.f32 %v1373, %v1839
  %1841 = vadd.xlane.f32.xlu0 %v1840
  %v1842 = vpop.xlane.xlu0 %1841
  %v1843 = vsel %vm537, %v1381, 0.0
  %v1844 = vadd.f32 %v1379, %v1843
  %1845 = vadd.xlane.f32.xlu0 %v1844
  %v1846 = vpop.xlane.xlu0 %1845
  %v1847 = vsel %vm537, %v1385, 0.0
  %v1848 = vadd.f32 %v1383, %v1847
  %1849 = vadd.xlane.f32.xlu0 %v1848
  %v1850 = vpop.xlane.xlu0 %1849
  %v1851 = vsel %vm537, %v1391, 0.0
  %v1852 = vadd.f32 %v1389, %v1851
  %1853 = vadd.xlane.f32.xlu0 %v1852
  %v1854 = vpop.xlane.xlu0 %1853
  %v1855 = vsel %vm537, %v1395, 0.0
  %v1856 = vadd.f32 %v1393, %v1855
  %1857 = vadd.xlane.f32.xlu0 %v1856
  %v1858 = vpop.xlane.xlu0 %1857
  %v1859 = vsel %vm537, %v1401, 0.0
  %v1860 = vadd.f32 %v1399, %v1859
  %1861 = vadd.xlane.f32.xlu0 %v1860
  %v1862 = vpop.xlane.xlu0 %1861
  %v1863 = vsel %vm537, %v1405, 0.0
  %v1864 = vadd.f32 %v1403, %v1863
  %1865 = vadd.xlane.f32.xlu0 %v1864
  %v1866 = vpop.xlane.xlu0 %1865
  %v1867 = vsel %vm537, %v1411, 0.0
  %v1868 = vadd.f32 %v1409, %v1867
  %1869 = vadd.xlane.f32.xlu0 %v1868
  %v1870 = vpop.xlane.xlu0 %1869
  %v1871 = vsel %vm537, %v1415, 0.0
  %v1872 = vadd.f32 %v1413, %v1871
  %1873 = vadd.xlane.f32.xlu0 %v1872
  %v1874 = vpop.xlane.xlu0 %1873
  %v1875 = vsel %vm537, %v1421, 0.0
  %v1876 = vadd.f32 %v1419, %v1875
  %1877 = vadd.xlane.f32.xlu0 %v1876
  %v1878 = vpop.xlane.xlu0 %1877
  %v1879 = vsel %vm537, %v1425, 0.0
  %v1880 = vadd.f32 %v1423, %v1879
  %1881 = vadd.xlane.f32.xlu0 %v1880
  %v1882 = vpop.xlane.xlu0 %1881
  %v1883 = vsel %vm537, %v1431, 0.0
  %v1884 = vadd.f32 %v1429, %v1883
  %1885 = vadd.xlane.f32.xlu0 %v1884
  %v1886 = vpop.xlane.xlu0 %1885
  %v1887 = vsel %vm537, %v1435, 0.0
  %v1888 = vadd.f32 %v1433, %v1887
  %1889 = vadd.xlane.f32.xlu0 %v1888
  %v1890 = vpop.xlane.xlu0 %1889
  %v1891 = vsel %vm537, %v1441, 0.0
  %v1892 = vadd.f32 %v1439, %v1891
  %1893 = vadd.xlane.f32.xlu0 %v1892
  %v1894 = vpop.xlane.xlu0 %1893
  %v1895 = vsel %vm537, %v1445, 0.0
  %v1896 = vadd.f32 %v1443, %v1895
  %1897 = vadd.xlane.f32.xlu0 %v1896
  %v1898 = vpop.xlane.xlu0 %1897
  %v1899 = vsel %vm537, %v1451, 0.0
  %v1900 = vadd.f32 %v1449, %v1899
  %1901 = vadd.xlane.f32.xlu0 %v1900
  %v1902 = vpop.xlane.xlu0 %1901
  %v1903 = vsel %vm537, %v1455, 0.0
  %v1904 = vadd.f32 %v1453, %v1903
  %1905 = vadd.xlane.f32.xlu0 %v1904
  %v1906 = vpop.xlane.xlu0 %1905
  %v1907 = vsel %vm537, %v1461, 0.0
  %v1908 = vadd.f32 %v1459, %v1907
  %1909 = vadd.xlane.f32.xlu0 %v1908
  %v1910 = vpop.xlane.xlu0 %1909
  %v1911 = vsel %vm537, %v1465, 0.0
  %v1912 = vadd.f32 %v1463, %v1911
  %1913 = vadd.xlane.f32.xlu0 %v1912
  %v1914 = vpop.xlane.xlu0 %1913
  %v1915 = vsel %vm537, %v1471, 0.0
  %v1916 = vadd.f32 %v1469, %v1915
  %1917 = vadd.xlane.f32.xlu0 %v1916
  %v1918 = vpop.xlane.xlu0 %1917
  %v1919 = vsel %vm537, %v1475, 0.0
  %v1920 = vadd.f32 %v1473, %v1919
  %1921 = vadd.xlane.f32.xlu0 %v1920
  %v1922 = vpop.xlane.xlu0 %1921
  %v1923 = vsel %vm537, %v1481, 0.0
  %v1924 = vadd.f32 %v1479, %v1923
  %1925 = vadd.xlane.f32.xlu0 %v1924
  %v1926 = vpop.xlane.xlu0 %1925
  %v1927 = vsel %vm537, %v1485, 0.0
  %v1928 = vadd.f32 %v1483, %v1927
  %1929 = vadd.xlane.f32.xlu0 %v1928
  %v1930 = vpop.xlane.xlu0 %1929
  %v1931 = vsel %vm537, %v1491, 0.0
  %v1932 = vadd.f32 %v1489, %v1931
  %1933 = vadd.xlane.f32.xlu0 %v1932
  %v1934 = vpop.xlane.xlu0 %1933
  %v1935 = vsel %vm537, %v1495, 0.0
  %v1936 = vadd.f32 %v1493, %v1935
  %1937 = vadd.xlane.f32.xlu0 %v1936
  %v1938 = vpop.xlane.xlu0 %1937
  %v1939 = vsel %vm537, %v1501, 0.0
  %v1940 = vadd.f32 %v1499, %v1939
  %1941 = vadd.xlane.f32.xlu0 %v1940
  %v1942 = vpop.xlane.xlu0 %1941
  %v1943 = vsel %vm537, %v1505, 0.0
  %v1944 = vadd.f32 %v1503, %v1943
  %1945 = vadd.xlane.f32.xlu0 %v1944
  %v1946 = vpop.xlane.xlu0 %1945
  %v1947 = vsel %vm537, %v1511, 0.0
  %v1948 = vadd.f32 %v1509, %v1947
  %1949 = vadd.xlane.f32.xlu0 %v1948
  %v1950 = vpop.xlane.xlu0 %1949
  %v1951 = vsel %vm537, %v1515, 0.0
  %v1952 = vadd.f32 %v1513, %v1951
  %1953 = vadd.xlane.f32.xlu0 %v1952
  %v1954 = vpop.xlane.xlu0 %1953
  %v1955 = vsel %vm537, %v1521, 0.0
  %v1956 = vadd.f32 %v1519, %v1955
  %1957 = vadd.xlane.f32.xlu0 %v1956
  %v1958 = vpop.xlane.xlu0 %1957
  %v1959 = vsel %vm537, %v1525, 0.0
  %v1960 = vadd.f32 %v1523, %v1959
  %1961 = vadd.xlane.f32.xlu0 %v1960
  %v1962 = vpop.xlane.xlu0 %1961
  %v1963 = vsel %vm537, %v1531, 0.0
  %v1964 = vadd.f32 %v1529, %v1963
  %1965 = vadd.xlane.f32.xlu0 %v1964
  %v1966 = vpop.xlane.xlu0 %1965
  %v1967 = vsel %vm537, %v1535, 0.0
  %v1968 = vadd.f32 %v1533, %v1967
  %1969 = vadd.xlane.f32.xlu0 %v1968
  %v1970 = vpop.xlane.xlu0 %1969
  %v1971 = vsel %vm537, %v1541, 0.0
  %v1972 = vadd.f32 %v1539, %v1971
  %1973 = vadd.xlane.f32.xlu0 %v1972
  %v1974 = vpop.xlane.xlu0 %1973
  %v1975 = vsel %vm537, %v1545, 0.0
  %v1976 = vadd.f32 %v1543, %v1975
  %1977 = vadd.xlane.f32.xlu0 %v1976
  %v1978 = vpop.xlane.xlu0 %1977
  %v1979 = vsel %vm537, %v1551, 0.0
  %v1980 = vadd.f32 %v1549, %v1979
  %1981 = vadd.xlane.f32.xlu0 %v1980
  %v1982 = vpop.xlane.xlu0 %1981
  %v1983 = vsel %vm537, %v1555, 0.0
  %v1984 = vadd.f32 %v1553, %v1983
  %1985 = vadd.xlane.f32.xlu0 %v1984
  %v1986 = vpop.xlane.xlu0 %1985
  %v1987 = vsel %vm537, %v1561, 0.0
  %v1988 = vadd.f32 %v1559, %v1987
  %1989 = vadd.xlane.f32.xlu0 %v1988
  %v1990 = vpop.xlane.xlu0 %1989
  %v1991 = vsel %vm537, %v1565, 0.0
  %v1992 = vadd.f32 %v1563, %v1991
  %1993 = vadd.xlane.f32.xlu0 %v1992
  %v1994 = vpop.xlane.xlu0 %1993
  %v1995 = vsel %vm537, %v1571, 0.0
  %v1996 = vadd.f32 %v1569, %v1995
  %1997 = vadd.xlane.f32.xlu0 %v1996
  %v1998 = vpop.xlane.xlu0 %1997
  %v1999 = vsel %vm537, %v1575, 0.0
  %v2000 = vadd.f32 %v1573, %v1999
  %2001 = vadd.xlane.f32.xlu0 %v2000
  %v2002 = vpop.xlane.xlu0 %2001
  %v2003 = vsel %vm537, %v1581, 0.0
  %v2004 = vadd.f32 %v1579, %v2003
  %2005 = vadd.xlane.f32.xlu0 %v2004
  %v2006 = vpop.xlane.xlu0 %2005
  %v2007 = vsel %vm537, %v1585, 0.0
  %v2008 = vadd.f32 %v1583, %v2007
  %2009 = vadd.xlane.f32.xlu0 %v2008
  %v2010 = vpop.xlane.xlu0 %2009
  %v2011 = vsel %vm537, %v1591, 0.0
  %v2012 = vadd.f32 %v1589, %v2011
  %2013 = vadd.xlane.f32.xlu0 %v2012
  %v2014 = vpop.xlane.xlu0 %2013
  %v2015 = vsel %vm537, %v1595, 0.0
  %v2016 = vadd.f32 %v1593, %v2015
  %2017 = vadd.xlane.f32.xlu0 %v2016
  %v2018 = vpop.xlane.xlu0 %2017
  %v2019 = vsel %vm537, %v1601, 0.0
  %v2020 = vadd.f32 %v1599, %v2019
  %2021 = vadd.xlane.f32.xlu0 %v2020
  %v2022 = vpop.xlane.xlu0 %2021
  %v2023 = vsel %vm537, %v1605, 0.0
  %v2024 = vadd.f32 %v1603, %v2023
  %2025 = vadd.xlane.f32.xlu0 %v2024
  %v2026 = vpop.xlane.xlu0 %2025
  %v2027 = vsel %vm537, %v1611, 0.0
  %v2028 = vadd.f32 %v1609, %v2027
  %2029 = vadd.xlane.f32.xlu0 %v2028
  %v2030 = vpop.xlane.xlu0 %2029
  %v2031 = vsel %vm537, %v1615, 0.0
  %v2032 = vadd.f32 %v1613, %v2031
  %2033 = vadd.xlane.f32.xlu0 %v2032
  %v2034 = vpop.xlane.xlu0 %2033
  %v2035 = vsel %vm537, %v1621, 0.0
  %v2036 = vadd.f32 %v1619, %v2035
  %2037 = vadd.xlane.f32.xlu0 %v2036
  %v2038 = vpop.xlane.xlu0 %2037
  %v2039 = vsel %vm537, %v1625, 0.0
  %v2040 = vadd.f32 %v1623, %v2039
  %2041 = vadd.xlane.f32.xlu0 %v2040
  %v2042 = vpop.xlane.xlu0 %2041
  %v2043 = vsel %vm537, %v1631, 0.0
  %v2044 = vadd.f32 %v1629, %v2043
  %2045 = vadd.xlane.f32.xlu0 %v2044
  %v2046 = vpop.xlane.xlu0 %2045
  %v2047 = vsel %vm537, %v1635, 0.0
  %v2048 = vadd.f32 %v1633, %v2047
  %2049 = vadd.xlane.f32.xlu0 %v2048
  %v2050 = vpop.xlane.xlu0 %2049
  %v2051 = vsel %vm537, %v1641, 0.0
  %v2052 = vadd.f32 %v1639, %v2051
  %2053 = vadd.xlane.f32.xlu0 %v2052
  %v2054 = vpop.xlane.xlu0 %2053
  %v2055 = vsel %vm537, %v1645, 0.0
  %v2056 = vadd.f32 %v1643, %v2055
  %2057 = vadd.xlane.f32.xlu0 %v2056
  %v2058 = vpop.xlane.xlu0 %2057
  %v2059 = vsel %vm537, %v1651, 0.0
  %v2060 = vadd.f32 %v1649, %v2059
  %2061 = vadd.xlane.f32.xlu0 %v2060
  %v2062 = vpop.xlane.xlu0 %2061
  %v2063 = vsel %vm537, %v1655, 0.0
  %v2064 = vadd.f32 %v1653, %v2063
  %2065 = vadd.xlane.f32.xlu0 %v2064
  %v2066 = vpop.xlane.xlu0 %2065
  %v2067 = vsel %vm537, %v1661, 0.0
  %v2068 = vadd.f32 %v1659, %v2067
  %2069 = vadd.xlane.f32.xlu0 %v2068
  %v2070 = vpop.xlane.xlu0 %2069
  %v2071 = vsel %vm537, %v1665, 0.0
  %v2072 = vadd.f32 %v1663, %v2071
  %2073 = vadd.xlane.f32.xlu0 %v2072
  %v2074 = vpop.xlane.xlu0 %2073
  %v2075 = vsel %vm537, %v1671, 0.0
  %v2076 = vadd.f32 %v1669, %v2075
  %2077 = vadd.xlane.f32.xlu0 %v2076
  %v2078 = vpop.xlane.xlu0 %2077
  %v2079 = vsel %vm537, %v1675, 0.0
  %v2080 = vadd.f32 %v1673, %v2079
  %2081 = vadd.xlane.f32.xlu0 %v2080
  %v2082 = vpop.xlane.xlu0 %2081
  %v2083 = vsel %vm537, %v1681, 0.0
  %v2084 = vadd.f32 %v1679, %v2083
  %2085 = vadd.xlane.f32.xlu0 %v2084
  %v2086 = vpop.xlane.xlu0 %2085
  %v2087 = vsel %vm537, %v1685, 0.0
  %v2088 = vadd.f32 %v1683, %v2087
  %2089 = vadd.xlane.f32.xlu0 %v2088
  %v2090 = vpop.xlane.xlu0 %2089
  %v2091 = vsel %vm537, %v1691, 0.0
  %v2092 = vadd.f32 %v1689, %v2091
  %2093 = vadd.xlane.f32.xlu0 %v2092
  %v2094 = vpop.xlane.xlu0 %2093
  %v2095 = vsel %vm537, %v1695, 0.0
  %v2096 = vadd.f32 %v1693, %v2095
  %2097 = vadd.xlane.f32.xlu0 %v2096
  %v2098 = vpop.xlane.xlu0 %2097
  %v2099 = vsel %vm537, %v1701, 0.0
  %v2100 = vadd.f32 %v1699, %v2099
  %2101 = vadd.xlane.f32.xlu0 %v2100
  %v2102 = vpop.xlane.xlu0 %2101
  %v2103 = vsel %vm537, %v1705, 0.0
  %v2104 = vadd.f32 %v1703, %v2103
  %2105 = vadd.xlane.f32.xlu0 %v2104
  %v2106 = vpop.xlane.xlu0 %2105
  %v2107 = vsel %vm537, %v1711, 0.0
  %v2108 = vadd.f32 %v1709, %v2107
  %2109 = vadd.xlane.f32.xlu0 %v2108
  %v2110 = vpop.xlane.xlu0 %2109
  %v2111 = vsel %vm537, %v1715, 0.0
  %v2112 = vadd.f32 %v1713, %v2111
  %2113 = vadd.xlane.f32.xlu0 %v2112
  %v2114 = vpop.xlane.xlu0 %2113
  %v2115 = vsel %vm537, %v1721, 0.0
  %v2116 = vadd.f32 %v1719, %v2115
  %2117 = vadd.xlane.f32.xlu0 %v2116
  %v2118 = vpop.xlane.xlu0 %2117
  %v2119 = vsel %vm537, %v1725, 0.0
  %v2120 = vadd.f32 %v1723, %v2119
  %2121 = vadd.xlane.f32.xlu0 %v2120
  %v2122 = vpop.xlane.xlu0 %2121
  %v2123 = vsel %vm537, %v1731, 0.0
  %v2124 = vadd.f32 %v1729, %v2123
  %2125 = vadd.xlane.f32.xlu0 %v2124
  %v2126 = vpop.xlane.xlu0 %2125
  %v2127 = vsel %vm537, %v1735, 0.0
  %v2128 = vadd.f32 %v1733, %v2127
  %2129 = vadd.xlane.f32.xlu0 %v2128
  %v2130 = vpop.xlane.xlu0 %2129
  %v2131 = vsel %vm537, %v1741, 0.0
  %v2132 = vadd.f32 %v1739, %v2131
  %2133 = vadd.xlane.f32.xlu0 %v2132
  %v2134 = vpop.xlane.xlu0 %2133
  %v2135 = vsel %vm537, %v1745, 0.0
  %v2136 = vadd.f32 %v1743, %v2135
  %2137 = vadd.xlane.f32.xlu0 %v2136
  %v2138 = vpop.xlane.xlu0 %2137
  %v2139 = vsel %vm537, %v1751, 0.0
  %v2140 = vadd.f32 %v1749, %v2139
  %2141 = vadd.xlane.f32.xlu0 %v2140
  %v2142 = vpop.xlane.xlu0 %2141
  %v2143 = vsel %vm537, %v1755, 0.0
  %v2144 = vadd.f32 %v1753, %v2143
  %2145 = vadd.xlane.f32.xlu0 %v2144
  %v2146 = vpop.xlane.xlu0 %2145
  %v2147 = vsel %vm537, %v1761, 0.0
  %v2148 = vadd.f32 %v1759, %v2147
  %2149 = vadd.xlane.f32.xlu0 %v2148
  %v2150 = vpop.xlane.xlu0 %2149
  %v2151 = vsel %vm537, %v1765, 0.0
  %v2152 = vadd.f32 %v1763, %v2151
  %2153 = vadd.xlane.f32.xlu0 %v2152
  %v2154 = vpop.xlane.xlu0 %2153
  %v2155 = vsel %vm537, %v1771, 0.0
  %v2156 = vadd.f32 %v1769, %v2155
  %2157 = vadd.xlane.f32.xlu0 %v2156
  %v2158 = vpop.xlane.xlu0 %2157
  %v2159 = vsel %vm537, %v1775, 0.0
  %v2160 = vadd.f32 %v1773, %v2159
  %2161 = vadd.xlane.f32.xlu0 %v2160
  %v2162 = vpop.xlane.xlu0 %2161
  %v2163 = vsel %vm537, %v1781, 0.0
  %v2164 = vadd.f32 %v1779, %v2163
  %2165 = vadd.xlane.f32.xlu0 %v2164
  %v2166 = vpop.xlane.xlu0 %2165
  %v2167 = vsel %vm537, %v1785, 0.0
  %v2168 = vadd.f32 %v1783, %v2167
  %2169 = vadd.xlane.f32.xlu0 %v2168
  %v2170 = vpop.xlane.xlu0 %2169
  %v2171 = vmul.f32 %v1790, 0.0051020407
  %v2172 = vmul.f32 %v1794, 0.0051020407
  %v2173 = vmul.f32 %v1798, 0.0051020407
  %v2174 = vmul.f32 %v1802, 0.0051020407
  %v2175 = vmul.f32 %v1806, 0.0051020407
  %v2176 = vmul.f32 %v1810, 0.0051020407
  %v2177 = vmul.f32 %v1814, 0.0051020407
  %v2178 = vmul.f32 %v1818, 0.0051020407
  %v2179 = vmul.f32 %v1822, 0.0051020407
  %v2180 = vmul.f32 %v1826, 0.0051020407
  %v2181 = vmul.f32 %v1830, 0.0051020407
  %v2182 = vmul.f32 %v1834, 0.0051020407
  %v2183 = vmul.f32 %v1838, 0.0051020407
  %v2184 = vmul.f32 %v1842, 0.0051020407
  %v2185 = vmul.f32 %v1846, 0.0051020407
  %v2186 = vmul.f32 %v1850, 0.0051020407
  %v2187 = vmul.f32 %v1854, 0.0051020407
  %v2188 = vmul.f32 %v1858, 0.0051020407
  %v2189 = vmul.f32 %v1862, 0.0051020407
  %v2190 = vmul.f32 %v1866, 0.0051020407
  %v2191 = vmul.f32 %v1870, 0.0051020407
  %v2192 = vmul.f32 %v1874, 0.0051020407
  %v2193 = vmul.f32 %v1878, 0.0051020407
  %v2194 = vmul.f32 %v1882, 0.0051020407
  %v2195 = vmul.f32 %v1886, 0.0051020407
  %v2196 = vmul.f32 %v1890, 0.0051020407
  %v2197 = vmul.f32 %v1894, 0.0051020407
  %v2198 = vmul.f32 %v1898, 0.0051020407
  %v2199 = vmul.f32 %v1902, 0.0051020407
  %v2200 = vmul.f32 %v1906, 0.0051020407
  %v2201 = vmul.f32 %v1910, 0.0051020407
  %v2202 = vmul.f32 %v1914, 0.0051020407
  %v2203 = vmul.f32 %v1918, 0.0051020407
  %v2204 = vmul.f32 %v1922, 0.0051020407
  %v2205 = vmul.f32 %v1926, 0.0051020407
  %v2206 = vmul.f32 %v1930, 0.0051020407
  %v2207 = vmul.f32 %v1934, 0.0051020407
  %v2208 = vmul.f32 %v1938, 0.0051020407
  %v2209 = vmul.f32 %v1942, 0.0051020407
  %v2210 = vmul.f32 %v1946, 0.0051020407
  %v2211 = vmul.f32 %v1950, 0.0051020407
  %v2212 = vmul.f32 %v1954, 0.0051020407
  %v2213 = vmul.f32 %v1958, 0.0051020407
  %v2214 = vmul.f32 %v1962, 0.0051020407
  %v2215 = vmul.f32 %v1966, 0.0051020407
  %v2216 = vmul.f32 %v1970, 0.0051020407
  %v2217 = vmul.f32 %v1974, 0.0051020407
  %v2218 = vmul.f32 %v1978, 0.0051020407
  %v2219 = vmul.f32 %v1982, 0.0051020407
  %v2220 = vmul.f32 %v1986, 0.0051020407
  %v2221 = vmul.f32 %v1990, 0.0051020407
  %v2222 = vmul.f32 %v1994, 0.0051020407
  %v2223 = vmul.f32 %v1998, 0.0051020407
  %v2224 = vmul.f32 %v2002, 0.0051020407
  %v2225 = vmul.f32 %v2006, 0.0051020407
  %v2226 = vmul.f32 %v2010, 0.0051020407
  %v2227 = vmul.f32 %v2014, 0.0051020407
  %v2228 = vmul.f32 %v2018, 0.0051020407
  %v2229 = vmul.f32 %v2022, 0.0051020407
  %v2230 = vmul.f32 %v2026, 0.0051020407
  %v2231 = vmul.f32 %v2030, 0.0051020407
  %v2232 = vmul.f32 %v2034, 0.0051020407
  %v2233 = vmul.f32 %v2038, 0.0051020407
  %v2234 = vmul.f32 %v2042, 0.0051020407
  %v2235 = vmul.f32 %v2046, 0.0051020407
  %v2236 = vmul.f32 %v2050, 0.0051020407
  %v2237 = vmul.f32 %v2054, 0.0051020407
  %v2238 = vmul.f32 %v2058, 0.0051020407
  %v2239 = vmul.f32 %v2062, 0.0051020407
  %v2240 = vmul.f32 %v2066, 0.0051020407
  %v2241 = vmul.f32 %v2070, 0.0051020407
  %v2242 = vmul.f32 %v2074, 0.0051020407
  %v2243 = vmul.f32 %v2078, 0.0051020407
  %v2244 = vmul.f32 %v2082, 0.0051020407
  %v2245 = vmul.f32 %v2086, 0.0051020407
  %v2246 = vmul.f32 %v2090, 0.0051020407
  %v2247 = vmul.f32 %v2094, 0.0051020407
  %v2248 = vmul.f32 %v2098, 0.0051020407
  %v2249 = vmul.f32 %v2102, 0.0051020407
  %v2250 = vmul.f32 %v2106, 0.0051020407
  %v2251 = vmul.f32 %v2110, 0.0051020407
  %v2252 = vmul.f32 %v2114, 0.0051020407
  %v2253 = vmul.f32 %v2118, 0.0051020407
  %v2254 = vmul.f32 %v2122, 0.0051020407
  %v2255 = vmul.f32 %v2126, 0.0051020407
  %v2256 = vmul.f32 %v2130, 0.0051020407
  %v2257 = vmul.f32 %v2134, 0.0051020407
  %v2258 = vmul.f32 %v2138, 0.0051020407
  %v2259 = vmul.f32 %v2142, 0.0051020407
  %v2260 = vmul.f32 %v2146, 0.0051020407
  %v2261 = vmul.f32 %v2150, 0.0051020407
  %v2262 = vmul.f32 %v2154, 0.0051020407
  %v2263 = vmul.f32 %v2158, 0.0051020407
  %v2264 = vmul.f32 %v2162, 0.0051020407
  %v2265 = vmul.f32 %v2166, 0.0051020407
  %v2266 = vmul.f32 %v2170, 0.0051020407
  %v2267 = vmul.f32 %v1309, %v1309
  %v2268 = vmul.f32 %v1311, %v1311
  %v2269 = vmul.f32 %v1313, %v1313
  %v2270 = vmul.f32 %v1315, %v1315
  %v2271 = vmul.f32 %v1319, %v1319
  %v2272 = vmul.f32 %v1321, %v1321
  %v2273 = vmul.f32 %v1323, %v1323
  %v2274 = vmul.f32 %v1325, %v1325
  %v2275 = vmul.f32 %v1329, %v1329
  %v2276 = vmul.f32 %v1331, %v1331
  %v2277 = vmul.f32 %v1333, %v1333
  %v2278 = vmul.f32 %v1335, %v1335
  %v2279 = vmul.f32 %v1339, %v1339
  %v2280 = vmul.f32 %v1341, %v1341
  %v2281 = vmul.f32 %v1343, %v1343
  %v2282 = vmul.f32 %v1345, %v1345
  %v2283 = vmul.f32 %v1349, %v1349
  %v2284 = vmul.f32 %v1351, %v1351
  %v2285 = vmul.f32 %v1353, %v1353
  %v2286 = vmul.f32 %v1355, %v1355
  %v2287 = vmul.f32 %v1359, %v1359
  %v2288 = vmul.f32 %v1361, %v1361
  %v2289 = vmul.f32 %v1363, %v1363
  %v2290 = vmul.f32 %v1365, %v1365
  %v2291 = vmul.f32 %v1369, %v1369
  %v2292 = vmul.f32 %v1371, %v1371
  %v2293 = vmul.f32 %v1373, %v1373
  %v2294 = vmul.f32 %v1375, %v1375
  %v2295 = vmul.f32 %v1379, %v1379
  %v2296 = vmul.f32 %v1381, %v1381
  %v2297 = vmul.f32 %v1383, %v1383
  %v2298 = vmul.f32 %v1385, %v1385
  %v2299 = vmul.f32 %v1389, %v1389
  %v2300 = vmul.f32 %v1391, %v1391
  %v2301 = vmul.f32 %v1393, %v1393
  %v2302 = vmul.f32 %v1395, %v1395
  %v2303 = vmul.f32 %v1399, %v1399
  %v2304 = vmul.f32 %v1401, %v1401
  %v2305 = vmul.f32 %v1403, %v1403
  %v2306 = vmul.f32 %v1405, %v1405
  %v2307 = vmul.f32 %v1409, %v1409
  %v2308 = vmul.f32 %v1411, %v1411
  %v2309 = vmul.f32 %v1413, %v1413
  %v2310 = vmul.f32 %v1415, %v1415
  %v2311 = vmul.f32 %v1419, %v1419
  %v2312 = vmul.f32 %v1421, %v1421
  %v2313 = vmul.f32 %v1423, %v1423
  %v2314 = vmul.f32 %v1425, %v1425
  %v2315 = vmul.f32 %v1429, %v1429
  %v2316 = vmul.f32 %v1431, %v1431
  %v2317 = vmul.f32 %v1433, %v1433
  %v2318 = vmul.f32 %v1435, %v1435
  %v2319 = vmul.f32 %v1439, %v1439
  %v2320 = vmul.f32 %v1441, %v1441
  %v2321 = vmul.f32 %v1443, %v1443
  %v2322 = vmul.f32 %v1445, %v1445
  %v2323 = vmul.f32 %v1449, %v1449
  %v2324 = vmul.f32 %v1451, %v1451
  %v2325 = vmul.f32 %v1453, %v1453
  %v2326 = vmul.f32 %v1455, %v1455
  %v2327 = vmul.f32 %v1459, %v1459
  %v2328 = vmul.f32 %v1461, %v1461
  %v2329 = vmul.f32 %v1463, %v1463
  %v2330 = vmul.f32 %v1465, %v1465
  %v2331 = vmul.f32 %v1469, %v1469
  %v2332 = vmul.f32 %v1471, %v1471
  %v2333 = vmul.f32 %v1473, %v1473
  %v2334 = vmul.f32 %v1475, %v1475
  %v2335 = vmul.f32 %v1479, %v1479
  %v2336 = vmul.f32 %v1481, %v1481
  %v2337 = vmul.f32 %v1483, %v1483
  %v2338 = vmul.f32 %v1485, %v1485
  %v2339 = vmul.f32 %v1489, %v1489
  %v2340 = vmul.f32 %v1491, %v1491
  %v2341 = vmul.f32 %v1493, %v1493
  %v2342 = vmul.f32 %v1495, %v1495
  %v2343 = vmul.f32 %v1499, %v1499
  %v2344 = vmul.f32 %v1501, %v1501
  %v2345 = vmul.f32 %v1503, %v1503
  %v2346 = vmul.f32 %v1505, %v1505
  %v2347 = vmul.f32 %v1509, %v1509
  %v2348 = vmul.f32 %v1511, %v1511
  %v2349 = vmul.f32 %v1513, %v1513
  %v2350 = vmul.f32 %v1515, %v1515
  %v2351 = vmul.f32 %v1519, %v1519
  %v2352 = vmul.f32 %v1521, %v1521
  %v2353 = vmul.f32 %v1523, %v1523
  %v2354 = vmul.f32 %v1525, %v1525
  %v2355 = vmul.f32 %v1529, %v1529
  %v2356 = vmul.f32 %v1531, %v1531
  %v2357 = vmul.f32 %v1533, %v1533
  %v2358 = vmul.f32 %v1535, %v1535
  %v2359 = vmul.f32 %v1539, %v1539
  %v2360 = vmul.f32 %v1541, %v1541
  %v2361 = vmul.f32 %v1543, %v1543
  %v2362 = vmul.f32 %v1545, %v1545
  %v2363 = vmul.f32 %v1549, %v1549
  %v2364 = vmul.f32 %v1551, %v1551
  %v2365 = vmul.f32 %v1553, %v1553
  %v2366 = vmul.f32 %v1555, %v1555
  %v2367 = vmul.f32 %v1559, %v1559
  %v2368 = vmul.f32 %v1561, %v1561
  %v2369 = vmul.f32 %v1563, %v1563
  %v2370 = vmul.f32 %v1565, %v1565
  %v2371 = vmul.f32 %v1569, %v1569
  %v2372 = vmul.f32 %v1571, %v1571
  %v2373 = vmul.f32 %v1573, %v1573
  %v2374 = vmul.f32 %v1575, %v1575
  %v2375 = vmul.f32 %v1579, %v1579
  %v2376 = vmul.f32 %v1581, %v1581
  %v2377 = vmul.f32 %v1583, %v1583
  %v2378 = vmul.f32 %v1585, %v1585
  %v2379 = vmul.f32 %v1589, %v1589
  %v2380 = vmul.f32 %v1591, %v1591
  %v2381 = vmul.f32 %v1593, %v1593
  %v2382 = vmul.f32 %v1595, %v1595
  %v2383 = vmul.f32 %v1599, %v1599
  %v2384 = vmul.f32 %v1601, %v1601
  %v2385 = vmul.f32 %v1603, %v1603
  %v2386 = vmul.f32 %v1605, %v1605
  %v2387 = vmul.f32 %v1609, %v1609
  %v2388 = vmul.f32 %v1611, %v1611
  %v2389 = vmul.f32 %v1613, %v1613
  %v2390 = vmul.f32 %v1615, %v1615
  %v2391 = vmul.f32 %v1619, %v1619
  %v2392 = vmul.f32 %v1621, %v1621
  %v2393 = vmul.f32 %v1623, %v1623
  %v2394 = vmul.f32 %v1625, %v1625
  %v2395 = vmul.f32 %v1629, %v1629
  %v2396 = vmul.f32 %v1631, %v1631
  %v2397 = vmul.f32 %v1633, %v1633
  %v2398 = vmul.f32 %v1635, %v1635
  %v2399 = vmul.f32 %v1639, %v1639
  %v2400 = vmul.f32 %v1641, %v1641
  %v2401 = vmul.f32 %v1643, %v1643
  %v2402 = vmul.f32 %v1645, %v1645
  %v2403 = vmul.f32 %v1649, %v1649
  %v2404 = vmul.f32 %v1651, %v1651
  %v2405 = vmul.f32 %v1653, %v1653
  %v2406 = vmul.f32 %v1655, %v1655
  %v2407 = vmul.f32 %v1659, %v1659
  %v2408 = vmul.f32 %v1661, %v1661
  %v2409 = vmul.f32 %v1663, %v1663
  %v2410 = vmul.f32 %v1665, %v1665
  %v2411 = vmul.f32 %v1669, %v1669
  %v2412 = vmul.f32 %v1671, %v1671
  %v2413 = vmul.f32 %v1673, %v1673
  %v2414 = vmul.f32 %v1675, %v1675
  %v2415 = vmul.f32 %v1679, %v1679
  %v2416 = vmul.f32 %v1681, %v1681
  %v2417 = vmul.f32 %v1683, %v1683
  %v2418 = vmul.f32 %v1685, %v1685
  %v2419 = vmul.f32 %v1689, %v1689
  %v2420 = vmul.f32 %v1691, %v1691
  %v2421 = vmul.f32 %v1693, %v1693
  %v2422 = vmul.f32 %v1695, %v1695
  %v2423 = vmul.f32 %v1699, %v1699
  %v2424 = vmul.f32 %v1701, %v1701
  %v2425 = vmul.f32 %v1703, %v1703
  %v2426 = vmul.f32 %v1705, %v1705
  %v2427 = vmul.f32 %v1709, %v1709
  %v2428 = vmul.f32 %v1711, %v1711
  %v2429 = vmul.f32 %v1713, %v1713
  %v2430 = vmul.f32 %v1715, %v1715
  %v2431 = vmul.f32 %v1719, %v1719
  %v2432 = vmul.f32 %v1721, %v1721
  %v2433 = vmul.f32 %v1723, %v1723
  %v2434 = vmul.f32 %v1725, %v1725
  %v2435 = vmul.f32 %v1729, %v1729
  %v2436 = vmul.f32 %v1731, %v1731
  %v2437 = vmul.f32 %v1733, %v1733
  %v2438 = vmul.f32 %v1735, %v1735
  %v2439 = vmul.f32 %v1739, %v1739
  %v2440 = vmul.f32 %v1741, %v1741
  %v2441 = vmul.f32 %v1743, %v1743
  %v2442 = vmul.f32 %v1745, %v1745
  %v2443 = vmul.f32 %v1749, %v1749
  %v2444 = vmul.f32 %v1751, %v1751
  %v2445 = vmul.f32 %v1753, %v1753
  %v2446 = vmul.f32 %v1755, %v1755
  %v2447 = vmul.f32 %v1759, %v1759
  %v2448 = vmul.f32 %v1761, %v1761
  %v2449 = vmul.f32 %v1763, %v1763
  %v2450 = vmul.f32 %v1765, %v1765
  %v2451 = vmul.f32 %v1769, %v1769
  %v2452 = vmul.f32 %v1771, %v1771
  %v2453 = vmul.f32 %v1773, %v1773
  %v2454 = vmul.f32 %v1775, %v1775
  %v2455 = vmul.f32 %v1779, %v1779
  %v2456 = vmul.f32 %v1781, %v1781
  %v2457 = vmul.f32 %v1783, %v1783
  %v2458 = vmul.f32 %v1785, %v1785
  %v2459 = vsel %vm537, %v2268, 0.0
  %v2460 = vadd.f32 %v2267, %v2459
  %2461 = vadd.xlane.f32.xlu0 %v2460
  %v2462 = vpop.xlane.xlu0 %2461
  %v2463 = vsel %vm537, %v2270, 0.0
  %v2464 = vadd.f32 %v2269, %v2463
  %2465 = vadd.xlane.f32.xlu0 %v2464
  %v2466 = vpop.xlane.xlu0 %2465
  %v2467 = vsel %vm537, %v2272, 0.0
  %v2468 = vadd.f32 %v2271, %v2467
  %2469 = vadd.xlane.f32.xlu0 %v2468
  %v2470 = vpop.xlane.xlu0 %2469
  %v2471 = vsel %vm537, %v2274, 0.0
  %v2472 = vadd.f32 %v2273, %v2471
  %2473 = vadd.xlane.f32.xlu0 %v2472
  %v2474 = vpop.xlane.xlu0 %2473
  %v2475 = vsel %vm537, %v2276, 0.0
  %v2476 = vadd.f32 %v2275, %v2475
  %2477 = vadd.xlane.f32.xlu0 %v2476
  %v2478 = vpop.xlane.xlu0 %2477
  %v2479 = vsel %vm537, %v2278, 0.0
  %v2480 = vadd.f32 %v2277, %v2479
  %2481 = vadd.xlane.f32.xlu0 %v2480
  %v2482 = vpop.xlane.xlu0 %2481
  %v2483 = vsel %vm537, %v2280, 0.0
  %v2484 = vadd.f32 %v2279, %v2483
  %2485 = vadd.xlane.f32.xlu0 %v2484
  %v2486 = vpop.xlane.xlu0 %2485
  %v2487 = vsel %vm537, %v2282, 0.0
  %v2488 = vadd.f32 %v2281, %v2487
  %2489 = vadd.xlane.f32.xlu0 %v2488
  %v2490 = vpop.xlane.xlu0 %2489
  %v2491 = vsel %vm537, %v2284, 0.0
  %v2492 = vadd.f32 %v2283, %v2491
  %2493 = vadd.xlane.f32.xlu0 %v2492
  %v2494 = vpop.xlane.xlu0 %2493
  %v2495 = vsel %vm537, %v2286, 0.0
  %v2496 = vadd.f32 %v2285, %v2495
  %2497 = vadd.xlane.f32.xlu0 %v2496
  %v2498 = vpop.xlane.xlu0 %2497
  %v2499 = vsel %vm537, %v2288, 0.0
  %v2500 = vadd.f32 %v2287, %v2499
  %2501 = vadd.xlane.f32.xlu0 %v2500
  %v2502 = vpop.xlane.xlu0 %2501
  %v2503 = vsel %vm537, %v2290, 0.0
  %v2504 = vadd.f32 %v2289, %v2503
  %2505 = vadd.xlane.f32.xlu0 %v2504
  %v2506 = vpop.xlane.xlu0 %2505
  %v2507 = vsel %vm537, %v2292, 0.0
  %v2508 = vadd.f32 %v2291, %v2507
  %2509 = vadd.xlane.f32.xlu0 %v2508
  %v2510 = vpop.xlane.xlu0 %2509
  %v2511 = vsel %vm537, %v2294, 0.0
  %v2512 = vadd.f32 %v2293, %v2511
  %2513 = vadd.xlane.f32.xlu0 %v2512
  %v2514 = vpop.xlane.xlu0 %2513
  %v2515 = vsel %vm537, %v2296, 0.0
  %v2516 = vadd.f32 %v2295, %v2515
  %2517 = vadd.xlane.f32.xlu0 %v2516
  %v2518 = vpop.xlane.xlu0 %2517
  %v2519 = vsel %vm537, %v2298, 0.0
  %v2520 = vadd.f32 %v2297, %v2519
  %2521 = vadd.xlane.f32.xlu0 %v2520
  %v2522 = vpop.xlane.xlu0 %2521
  %v2523 = vsel %vm537, %v2300, 0.0
  %v2524 = vadd.f32 %v2299, %v2523
  %2525 = vadd.xlane.f32.xlu0 %v2524
  %v2526 = vpop.xlane.xlu0 %2525
  %v2527 = vsel %vm537, %v2302, 0.0
  %v2528 = vadd.f32 %v2301, %v2527
  %2529 = vadd.xlane.f32.xlu0 %v2528
  %v2530 = vpop.xlane.xlu0 %2529
  %v2531 = vsel %vm537, %v2304, 0.0
  %v2532 = vadd.f32 %v2303, %v2531
  %2533 = vadd.xlane.f32.xlu0 %v2532
  %v2534 = vpop.xlane.xlu0 %2533
  %v2535 = vsel %vm537, %v2306, 0.0
  %v2536 = vadd.f32 %v2305, %v2535
  %2537 = vadd.xlane.f32.xlu0 %v2536
  %v2538 = vpop.xlane.xlu0 %2537
  %v2539 = vsel %vm537, %v2308, 0.0
  %v2540 = vadd.f32 %v2307, %v2539
  %2541 = vadd.xlane.f32.xlu0 %v2540
  %v2542 = vpop.xlane.xlu0 %2541
  %v2543 = vsel %vm537, %v2310, 0.0
  %v2544 = vadd.f32 %v2309, %v2543
  %2545 = vadd.xlane.f32.xlu0 %v2544
  %v2546 = vpop.xlane.xlu0 %2545
  %v2547 = vsel %vm537, %v2312, 0.0
  %v2548 = vadd.f32 %v2311, %v2547
  %2549 = vadd.xlane.f32.xlu0 %v2548
  %v2550 = vpop.xlane.xlu0 %2549
  %v2551 = vsel %vm537, %v2314, 0.0
  %v2552 = vadd.f32 %v2313, %v2551
  %2553 = vadd.xlane.f32.xlu0 %v2552
  %v2554 = vpop.xlane.xlu0 %2553
  %v2555 = vsel %vm537, %v2316, 0.0
  %v2556 = vadd.f32 %v2315, %v2555
  %2557 = vadd.xlane.f32.xlu0 %v2556
  %v2558 = vpop.xlane.xlu0 %2557
  %v2559 = vsel %vm537, %v2318, 0.0
  %v2560 = vadd.f32 %v2317, %v2559
  %2561 = vadd.xlane.f32.xlu0 %v2560
  %v2562 = vpop.xlane.xlu0 %2561
  %v2563 = vsel %vm537, %v2320, 0.0
  %v2564 = vadd.f32 %v2319, %v2563
  %2565 = vadd.xlane.f32.xlu0 %v2564
  %v2566 = vpop.xlane.xlu0 %2565
  %v2567 = vsel %vm537, %v2322, 0.0
  %v2568 = vadd.f32 %v2321, %v2567
  %2569 = vadd.xlane.f32.xlu0 %v2568
  %v2570 = vpop.xlane.xlu0 %2569
  %v2571 = vsel %vm537, %v2324, 0.0
  %v2572 = vadd.f32 %v2323, %v2571
  %2573 = vadd.xlane.f32.xlu0 %v2572
  %v2574 = vpop.xlane.xlu0 %2573
  %v2575 = vsel %vm537, %v2326, 0.0
  %v2576 = vadd.f32 %v2325, %v2575
  %2577 = vadd.xlane.f32.xlu0 %v2576
  %v2578 = vpop.xlane.xlu0 %2577
  %v2579 = vsel %vm537, %v2328, 0.0
  %v2580 = vadd.f32 %v2327, %v2579
  %2581 = vadd.xlane.f32.xlu0 %v2580
  %v2582 = vpop.xlane.xlu0 %2581
  %v2583 = vsel %vm537, %v2330, 0.0
  %v2584 = vadd.f32 %v2329, %v2583
  %2585 = vadd.xlane.f32.xlu0 %v2584
  %v2586 = vpop.xlane.xlu0 %2585
  %v2587 = vsel %vm537, %v2332, 0.0
  %v2588 = vadd.f32 %v2331, %v2587
  %2589 = vadd.xlane.f32.xlu0 %v2588
  %v2590 = vpop.xlane.xlu0 %2589
  %v2591 = vsel %vm537, %v2334, 0.0
  %v2592 = vadd.f32 %v2333, %v2591
  %2593 = vadd.xlane.f32.xlu0 %v2592
  %v2594 = vpop.xlane.xlu0 %2593
  %v2595 = vsel %vm537, %v2336, 0.0
  %v2596 = vadd.f32 %v2335, %v2595
  %2597 = vadd.xlane.f32.xlu0 %v2596
  %v2598 = vpop.xlane.xlu0 %2597
  %v2599 = vsel %vm537, %v2338, 0.0
  %v2600 = vadd.f32 %v2337, %v2599
  %2601 = vadd.xlane.f32.xlu0 %v2600
  %v2602 = vpop.xlane.xlu0 %2601
  %v2603 = vsel %vm537, %v2340, 0.0
  %v2604 = vadd.f32 %v2339, %v2603
  %2605 = vadd.xlane.f32.xlu0 %v2604
  %v2606 = vpop.xlane.xlu0 %2605
  %v2607 = vsel %vm537, %v2342, 0.0
  %v2608 = vadd.f32 %v2341, %v2607
  %2609 = vadd.xlane.f32.xlu0 %v2608
  %v2610 = vpop.xlane.xlu0 %2609
  %v2611 = vsel %vm537, %v2344, 0.0
  %v2612 = vadd.f32 %v2343, %v2611
  %2613 = vadd.xlane.f32.xlu0 %v2612
  %v2614 = vpop.xlane.xlu0 %2613
  %v2615 = vsel %vm537, %v2346, 0.0
  %v2616 = vadd.f32 %v2345, %v2615
  %2617 = vadd.xlane.f32.xlu0 %v2616
  %v2618 = vpop.xlane.xlu0 %2617
  %v2619 = vsel %vm537, %v2348, 0.0
  %v2620 = vadd.f32 %v2347, %v2619
  %2621 = vadd.xlane.f32.xlu0 %v2620
  %v2622 = vpop.xlane.xlu0 %2621
  %v2623 = vsel %vm537, %v2350, 0.0
  %v2624 = vadd.f32 %v2349, %v2623
  %2625 = vadd.xlane.f32.xlu0 %v2624
  %v2626 = vpop.xlane.xlu0 %2625
  %v2627 = vsel %vm537, %v2352, 0.0
  %v2628 = vadd.f32 %v2351, %v2627
  %2629 = vadd.xlane.f32.xlu0 %v2628
  %v2630 = vpop.xlane.xlu0 %2629
  %v2631 = vsel %vm537, %v2354, 0.0
  %v2632 = vadd.f32 %v2353, %v2631
  %2633 = vadd.xlane.f32.xlu0 %v2632
  %v2634 = vpop.xlane.xlu0 %2633
  %v2635 = vsel %vm537, %v2356, 0.0
  %v2636 = vadd.f32 %v2355, %v2635
  %2637 = vadd.xlane.f32.xlu0 %v2636
  %v2638 = vpop.xlane.xlu0 %2637
  %v2639 = vsel %vm537, %v2358, 0.0
  %v2640 = vadd.f32 %v2357, %v2639
  %2641 = vadd.xlane.f32.xlu0 %v2640
  %v2642 = vpop.xlane.xlu0 %2641
  %v2643 = vsel %vm537, %v2360, 0.0
  %v2644 = vadd.f32 %v2359, %v2643
  %2645 = vadd.xlane.f32.xlu0 %v2644
  %v2646 = vpop.xlane.xlu0 %2645
  %v2647 = vsel %vm537, %v2362, 0.0
  %v2648 = vadd.f32 %v2361, %v2647
  %2649 = vadd.xlane.f32.xlu0 %v2648
  %v2650 = vpop.xlane.xlu0 %2649
  %v2651 = vsel %vm537, %v2364, 0.0
  %v2652 = vadd.f32 %v2363, %v2651
  %2653 = vadd.xlane.f32.xlu0 %v2652
  %v2654 = vpop.xlane.xlu0 %2653
  %v2655 = vsel %vm537, %v2366, 0.0
  %v2656 = vadd.f32 %v2365, %v2655
  %2657 = vadd.xlane.f32.xlu0 %v2656
  %v2658 = vpop.xlane.xlu0 %2657
  %v2659 = vsel %vm537, %v2368, 0.0
  %v2660 = vadd.f32 %v2367, %v2659
  %2661 = vadd.xlane.f32.xlu0 %v2660
  %v2662 = vpop.xlane.xlu0 %2661
  %v2663 = vsel %vm537, %v2370, 0.0
  %v2664 = vadd.f32 %v2369, %v2663
  %2665 = vadd.xlane.f32.xlu0 %v2664
  %v2666 = vpop.xlane.xlu0 %2665
  %v2667 = vsel %vm537, %v2372, 0.0
  %v2668 = vadd.f32 %v2371, %v2667
  %2669 = vadd.xlane.f32.xlu0 %v2668
  %v2670 = vpop.xlane.xlu0 %2669
  %v2671 = vsel %vm537, %v2374, 0.0
  %v2672 = vadd.f32 %v2373, %v2671
  %2673 = vadd.xlane.f32.xlu0 %v2672
  %v2674 = vpop.xlane.xlu0 %2673
  %v2675 = vsel %vm537, %v2376, 0.0
  %v2676 = vadd.f32 %v2375, %v2675
  %2677 = vadd.xlane.f32.xlu0 %v2676
  %v2678 = vpop.xlane.xlu0 %2677
  %v2679 = vsel %vm537, %v2378, 0.0
  %v2680 = vadd.f32 %v2377, %v2679
  %2681 = vadd.xlane.f32.xlu0 %v2680
  %v2682 = vpop.xlane.xlu0 %2681
  %v2683 = vsel %vm537, %v2380, 0.0
  %v2684 = vadd.f32 %v2379, %v2683
  %2685 = vadd.xlane.f32.xlu0 %v2684
  %v2686 = vpop.xlane.xlu0 %2685
  %v2687 = vsel %vm537, %v2382, 0.0
  %v2688 = vadd.f32 %v2381, %v2687
  %2689 = vadd.xlane.f32.xlu0 %v2688
  %v2690 = vpop.xlane.xlu0 %2689
  %v2691 = vsel %vm537, %v2384, 0.0
  %v2692 = vadd.f32 %v2383, %v2691
  %2693 = vadd.xlane.f32.xlu0 %v2692
  %v2694 = vpop.xlane.xlu0 %2693
  %v2695 = vsel %vm537, %v2386, 0.0
  %v2696 = vadd.f32 %v2385, %v2695
  %2697 = vadd.xlane.f32.xlu0 %v2696
  %v2698 = vpop.xlane.xlu0 %2697
  %v2699 = vsel %vm537, %v2388, 0.0
  %v2700 = vadd.f32 %v2387, %v2699
  %2701 = vadd.xlane.f32.xlu0 %v2700
  %v2702 = vpop.xlane.xlu0 %2701
  %v2703 = vsel %vm537, %v2390, 0.0
  %v2704 = vadd.f32 %v2389, %v2703
  %2705 = vadd.xlane.f32.xlu0 %v2704
  %v2706 = vpop.xlane.xlu0 %2705
  %v2707 = vsel %vm537, %v2392, 0.0
  %v2708 = vadd.f32 %v2391, %v2707
  %2709 = vadd.xlane.f32.xlu0 %v2708
  %v2710 = vpop.xlane.xlu0 %2709
  %v2711 = vsel %vm537, %v2394, 0.0
  %v2712 = vadd.f32 %v2393, %v2711
  %2713 = vadd.xlane.f32.xlu0 %v2712
  %v2714 = vpop.xlane.xlu0 %2713
  %v2715 = vsel %vm537, %v2396, 0.0
  %v2716 = vadd.f32 %v2395, %v2715
  %2717 = vadd.xlane.f32.xlu0 %v2716
  %v2718 = vpop.xlane.xlu0 %2717
  %v2719 = vsel %vm537, %v2398, 0.0
  %v2720 = vadd.f32 %v2397, %v2719
  %2721 = vadd.xlane.f32.xlu0 %v2720
  %v2722 = vpop.xlane.xlu0 %2721
  %v2723 = vsel %vm537, %v2400, 0.0
  %v2724 = vadd.f32 %v2399, %v2723
  %2725 = vadd.xlane.f32.xlu0 %v2724
  %v2726 = vpop.xlane.xlu0 %2725
  %v2727 = vsel %vm537, %v2402, 0.0
  %v2728 = vadd.f32 %v2401, %v2727
  %2729 = vadd.xlane.f32.xlu0 %v2728
  %v2730 = vpop.xlane.xlu0 %2729
  %v2731 = vsel %vm537, %v2404, 0.0
  %v2732 = vadd.f32 %v2403, %v2731
  %2733 = vadd.xlane.f32.xlu0 %v2732
  %v2734 = vpop.xlane.xlu0 %2733
  %v2735 = vsel %vm537, %v2406, 0.0
  %v2736 = vadd.f32 %v2405, %v2735
  %2737 = vadd.xlane.f32.xlu0 %v2736
  %v2738 = vpop.xlane.xlu0 %2737
  %v2739 = vsel %vm537, %v2408, 0.0
  %v2740 = vadd.f32 %v2407, %v2739
  %2741 = vadd.xlane.f32.xlu0 %v2740
  %v2742 = vpop.xlane.xlu0 %2741
  %v2743 = vsel %vm537, %v2410, 0.0
  %v2744 = vadd.f32 %v2409, %v2743
  %2745 = vadd.xlane.f32.xlu0 %v2744
  %v2746 = vpop.xlane.xlu0 %2745
  %v2747 = vsel %vm537, %v2412, 0.0
  %v2748 = vadd.f32 %v2411, %v2747
  %2749 = vadd.xlane.f32.xlu0 %v2748
  %v2750 = vpop.xlane.xlu0 %2749
  %v2751 = vsel %vm537, %v2414, 0.0
  %v2752 = vadd.f32 %v2413, %v2751
  %2753 = vadd.xlane.f32.xlu0 %v2752
  %v2754 = vpop.xlane.xlu0 %2753
  %v2755 = vsel %vm537, %v2416, 0.0
  %v2756 = vadd.f32 %v2415, %v2755
  %2757 = vadd.xlane.f32.xlu0 %v2756
  %v2758 = vpop.xlane.xlu0 %2757
  %v2759 = vsel %vm537, %v2418, 0.0
  %v2760 = vadd.f32 %v2417, %v2759
  %2761 = vadd.xlane.f32.xlu0 %v2760
  %v2762 = vpop.xlane.xlu0 %2761
  %v2763 = vsel %vm537, %v2420, 0.0
  %v2764 = vadd.f32 %v2419, %v2763
  %2765 = vadd.xlane.f32.xlu0 %v2764
  %v2766 = vpop.xlane.xlu0 %2765
  %v2767 = vsel %vm537, %v2422, 0.0
  %v2768 = vadd.f32 %v2421, %v2767
  %2769 = vadd.xlane.f32.xlu0 %v2768
  %v2770 = vpop.xlane.xlu0 %2769
  %v2771 = vsel %vm537, %v2424, 0.0
  %v2772 = vadd.f32 %v2423, %v2771
  %2773 = vadd.xlane.f32.xlu0 %v2772
  %v2774 = vpop.xlane.xlu0 %2773
  %v2775 = vsel %vm537, %v2426, 0.0
  %v2776 = vadd.f32 %v2425, %v2775
  %2777 = vadd.xlane.f32.xlu0 %v2776
  %v2778 = vpop.xlane.xlu0 %2777
  %v2779 = vsel %vm537, %v2428, 0.0
  %v2780 = vadd.f32 %v2427, %v2779
  %2781 = vadd.xlane.f32.xlu0 %v2780
  %v2782 = vpop.xlane.xlu0 %2781
  %v2783 = vsel %vm537, %v2430, 0.0
  %v2784 = vadd.f32 %v2429, %v2783
  %2785 = vadd.xlane.f32.xlu0 %v2784
  %v2786 = vpop.xlane.xlu0 %2785
  %v2787 = vsel %vm537, %v2432, 0.0
  %v2788 = vadd.f32 %v2431, %v2787
  %2789 = vadd.xlane.f32.xlu0 %v2788
  %v2790 = vpop.xlane.xlu0 %2789
  %v2791 = vsel %vm537, %v2434, 0.0
  %v2792 = vadd.f32 %v2433, %v2791
  %2793 = vadd.xlane.f32.xlu0 %v2792
  %v2794 = vpop.xlane.xlu0 %2793
  %v2795 = vsel %vm537, %v2436, 0.0
  %v2796 = vadd.f32 %v2435, %v2795
  %2797 = vadd.xlane.f32.xlu0 %v2796
  %v2798 = vpop.xlane.xlu0 %2797
  %v2799 = vsel %vm537, %v2438, 0.0
  %v2800 = vadd.f32 %v2437, %v2799
  %2801 = vadd.xlane.f32.xlu0 %v2800
  %v2802 = vpop.xlane.xlu0 %2801
  %v2803 = vsel %vm537, %v2440, 0.0
  %v2804 = vadd.f32 %v2439, %v2803
  %2805 = vadd.xlane.f32.xlu0 %v2804
  %v2806 = vpop.xlane.xlu0 %2805
  %v2807 = vsel %vm537, %v2442, 0.0
  %v2808 = vadd.f32 %v2441, %v2807
  %2809 = vadd.xlane.f32.xlu0 %v2808
  %v2810 = vpop.xlane.xlu0 %2809
  %v2811 = vsel %vm537, %v2444, 0.0
  %v2812 = vadd.f32 %v2443, %v2811
  %2813 = vadd.xlane.f32.xlu0 %v2812
  %v2814 = vpop.xlane.xlu0 %2813
  %v2815 = vsel %vm537, %v2446, 0.0
  %v2816 = vadd.f32 %v2445, %v2815
  %2817 = vadd.xlane.f32.xlu0 %v2816
  %v2818 = vpop.xlane.xlu0 %2817
  %v2819 = vsel %vm537, %v2448, 0.0
  %v2820 = vadd.f32 %v2447, %v2819
  %2821 = vadd.xlane.f32.xlu0 %v2820
  %v2822 = vpop.xlane.xlu0 %2821
  %v2823 = vsel %vm537, %v2450, 0.0
  %v2824 = vadd.f32 %v2449, %v2823
  %2825 = vadd.xlane.f32.xlu0 %v2824
  %v2826 = vpop.xlane.xlu0 %2825
  %v2827 = vsel %vm537, %v2452, 0.0
  %v2828 = vadd.f32 %v2451, %v2827
  %2829 = vadd.xlane.f32.xlu0 %v2828
  %v2830 = vpop.xlane.xlu0 %2829
  %v2831 = vsel %vm537, %v2454, 0.0
  %v2832 = vadd.f32 %v2453, %v2831
  %2833 = vadd.xlane.f32.xlu0 %v2832
  %v2834 = vpop.xlane.xlu0 %2833
  %v2835 = vsel %vm537, %v2456, 0.0
  %v2836 = vadd.f32 %v2455, %v2835
  %2837 = vadd.xlane.f32.xlu0 %v2836
  %v2838 = vpop.xlane.xlu0 %2837
  %v2839 = vsel %vm537, %v2458, 0.0
  %v2840 = vadd.f32 %v2457, %v2839
  %2841 = vadd.xlane.f32.xlu0 %v2840
  %v2842 = vpop.xlane.xlu0 %2841
  %v2843 = vmul.f32 %v2462, 0.0051020407
  %v2844 = vmul.f32 %v2466, 0.0051020407
  %v2845 = vmul.f32 %v2470, 0.0051020407
  %v2846 = vmul.f32 %v2474, 0.0051020407
  %v2847 = vmul.f32 %v2478, 0.0051020407
  %v2848 = vmul.f32 %v2482, 0.0051020407
  %v2849 = vmul.f32 %v2486, 0.0051020407
  %v2850 = vmul.f32 %v2490, 0.0051020407
  %v2851 = vmul.f32 %v2494, 0.0051020407
  %v2852 = vmul.f32 %v2498, 0.0051020407
  %v2853 = vmul.f32 %v2502, 0.0051020407
  %v2854 = vmul.f32 %v2506, 0.0051020407
  %v2855 = vmul.f32 %v2510, 0.0051020407
  %v2856 = vmul.f32 %v2514, 0.0051020407
  %v2857 = vmul.f32 %v2518, 0.0051020407
  %v2858 = vmul.f32 %v2522, 0.0051020407
  %v2859 = vmul.f32 %v2526, 0.0051020407
  %v2860 = vmul.f32 %v2530, 0.0051020407
  %v2861 = vmul.f32 %v2534, 0.0051020407
  %v2862 = vmul.f32 %v2538, 0.0051020407
  %v2863 = vmul.f32 %v2542, 0.0051020407
  %v2864 = vmul.f32 %v2546, 0.0051020407
  %v2865 = vmul.f32 %v2550, 0.0051020407
  %v2866 = vmul.f32 %v2554, 0.0051020407
  %v2867 = vmul.f32 %v2558, 0.0051020407
  %v2868 = vmul.f32 %v2562, 0.0051020407
  %v2869 = vmul.f32 %v2566, 0.0051020407
  %v2870 = vmul.f32 %v2570, 0.0051020407
  %v2871 = vmul.f32 %v2574, 0.0051020407
  %v2872 = vmul.f32 %v2578, 0.0051020407
  %v2873 = vmul.f32 %v2582, 0.0051020407
  %v2874 = vmul.f32 %v2586, 0.0051020407
  %v2875 = vmul.f32 %v2590, 0.0051020407
  %v2876 = vmul.f32 %v2594, 0.0051020407
  %v2877 = vmul.f32 %v2598, 0.0051020407
  %v2878 = vmul.f32 %v2602, 0.0051020407
  %v2879 = vmul.f32 %v2606, 0.0051020407
  %v2880 = vmul.f32 %v2610, 0.0051020407
  %v2881 = vmul.f32 %v2614, 0.0051020407
  %v2882 = vmul.f32 %v2618, 0.0051020407
  %v2883 = vmul.f32 %v2622, 0.0051020407
  %v2884 = vmul.f32 %v2626, 0.0051020407
  %v2885 = vmul.f32 %v2630, 0.0051020407
  %v2886 = vmul.f32 %v2634, 0.0051020407
  %v2887 = vmul.f32 %v2638, 0.0051020407
  %v2888 = vmul.f32 %v2642, 0.0051020407
  %v2889 = vmul.f32 %v2646, 0.0051020407
  %v2890 = vmul.f32 %v2650, 0.0051020407
  %v2891 = vmul.f32 %v2654, 0.0051020407
  %v2892 = vmul.f32 %v2658, 0.0051020407
  %v2893 = vmul.f32 %v2662, 0.0051020407
  %v2894 = vmul.f32 %v2666, 0.0051020407
  %v2895 = vmul.f32 %v2670, 0.0051020407
  %v2896 = vmul.f32 %v2674, 0.0051020407
  %v2897 = vmul.f32 %v2678, 0.0051020407
  %v2898 = vmul.f32 %v2682, 0.0051020407
  %v2899 = vmul.f32 %v2686, 0.0051020407
  %v2900 = vmul.f32 %v2690, 0.0051020407
  %v2901 = vmul.f32 %v2694, 0.0051020407
  %v2902 = vmul.f32 %v2698, 0.0051020407
  %v2903 = vmul.f32 %v2702, 0.0051020407
  %v2904 = vmul.f32 %v2706, 0.0051020407
  %v2905 = vmul.f32 %v2710, 0.0051020407
  %v2906 = vmul.f32 %v2714, 0.0051020407
  %v2907 = vmul.f32 %v2718, 0.0051020407
  %v2908 = vmul.f32 %v2722, 0.0051020407
  %v2909 = vmul.f32 %v2726, 0.0051020407
  %v2910 = vmul.f32 %v2730, 0.0051020407
  %v2911 = vmul.f32 %v2734, 0.0051020407
  %v2912 = vmul.f32 %v2738, 0.0051020407
  %v2913 = vmul.f32 %v2742, 0.0051020407
  %v2914 = vmul.f32 %v2746, 0.0051020407
  %v2915 = vmul.f32 %v2750, 0.0051020407
  %v2916 = vmul.f32 %v2754, 0.0051020407
  %v2917 = vmul.f32 %v2758, 0.0051020407
  %v2918 = vmul.f32 %v2762, 0.0051020407
  %v2919 = vmul.f32 %v2766, 0.0051020407
  %v2920 = vmul.f32 %v2770, 0.0051020407
  %v2921 = vmul.f32 %v2774, 0.0051020407
  %v2922 = vmul.f32 %v2778, 0.0051020407
  %v2923 = vmul.f32 %v2782, 0.0051020407
  %v2924 = vmul.f32 %v2786, 0.0051020407
  %v2925 = vmul.f32 %v2790, 0.0051020407
  %v2926 = vmul.f32 %v2794, 0.0051020407
  %v2927 = vmul.f32 %v2798, 0.0051020407
  %v2928 = vmul.f32 %v2802, 0.0051020407
  %v2929 = vmul.f32 %v2806, 0.0051020407
  %v2930 = vmul.f32 %v2810, 0.0051020407
  %v2931 = vmul.f32 %v2814, 0.0051020407
  %v2932 = vmul.f32 %v2818, 0.0051020407
  %v2933 = vmul.f32 %v2822, 0.0051020407
  %v2934 = vmul.f32 %v2826, 0.0051020407
  %v2935 = vmul.f32 %v2830, 0.0051020407
  %v2936 = vmul.f32 %v2834, 0.0051020407
  %v2937 = vmul.f32 %v2838, 0.0051020407
  %v2938 = vmul.f32 %v2842, 0.0051020407
  %v2939 = vmul.f32 %v2171, %v2171
  %v2940 = vmul.f32 %v2172, %v2172
  %v2941 = vmul.f32 %v2173, %v2173
  %v2942 = vmul.f32 %v2174, %v2174
  %v2943 = vmul.f32 %v2175, %v2175
  %v2944 = vmul.f32 %v2176, %v2176
  %v2945 = vmul.f32 %v2177, %v2177
  %v2946 = vmul.f32 %v2178, %v2178
  %v2947 = vmul.f32 %v2179, %v2179
  %v2948 = vmul.f32 %v2180, %v2180
  %v2949 = vmul.f32 %v2181, %v2181
  %v2950 = vmul.f32 %v2182, %v2182
  %v2951 = vmul.f32 %v2183, %v2183
  %v2952 = vmul.f32 %v2184, %v2184
  %v2953 = vmul.f32 %v2185, %v2185
  %v2954 = vmul.f32 %v2186, %v2186
  %v2955 = vmul.f32 %v2187, %v2187
  %v2956 = vmul.f32 %v2188, %v2188
  %v2957 = vmul.f32 %v2189, %v2189
  %v2958 = vmul.f32 %v2190, %v2190
  %v2959 = vmul.f32 %v2191, %v2191
  %v2960 = vmul.f32 %v2192, %v2192
  %v2961 = vmul.f32 %v2193, %v2193
  %v2962 = vmul.f32 %v2194, %v2194
  %v2963 = vmul.f32 %v2195, %v2195
  %v2964 = vmul.f32 %v2196, %v2196
  %v2965 = vmul.f32 %v2197, %v2197
  %v2966 = vmul.f32 %v2198, %v2198
  %v2967 = vmul.f32 %v2199, %v2199
  %v2968 = vmul.f32 %v2200, %v2200
  %v2969 = vmul.f32 %v2201, %v2201
  %v2970 = vmul.f32 %v2202, %v2202
  %v2971 = vmul.f32 %v2203, %v2203
  %v2972 = vmul.f32 %v2204, %v2204
  %v2973 = vmul.f32 %v2205, %v2205
  %v2974 = vmul.f32 %v2206, %v2206
  %v2975 = vmul.f32 %v2207, %v2207
  %v2976 = vmul.f32 %v2208, %v2208
  %v2977 = vmul.f32 %v2209, %v2209
  %v2978 = vmul.f32 %v2210, %v2210
  %v2979 = vmul.f32 %v2211, %v2211
  %v2980 = vmul.f32 %v2212, %v2212
  %v2981 = vmul.f32 %v2213, %v2213
  %v2982 = vmul.f32 %v2214, %v2214
  %v2983 = vmul.f32 %v2215, %v2215
  %v2984 = vmul.f32 %v2216, %v2216
  %v2985 = vmul.f32 %v2217, %v2217
  %v2986 = vmul.f32 %v2218, %v2218
  %v2987 = vmul.f32 %v2219, %v2219
  %v2988 = vmul.f32 %v2220, %v2220
  %v2989 = vmul.f32 %v2221, %v2221
  %v2990 = vmul.f32 %v2222, %v2222
  %v2991 = vmul.f32 %v2223, %v2223
  %v2992 = vmul.f32 %v2224, %v2224
  %v2993 = vmul.f32 %v2225, %v2225
  %v2994 = vmul.f32 %v2226, %v2226
  %v2995 = vmul.f32 %v2227, %v2227
  %v2996 = vmul.f32 %v2228, %v2228
  %v2997 = vmul.f32 %v2229, %v2229
  %v2998 = vmul.f32 %v2230, %v2230
  %v2999 = vmul.f32 %v2231, %v2231
  %v3000 = vmul.f32 %v2232, %v2232
  %v3001 = vmul.f32 %v2233, %v2233
  %v3002 = vmul.f32 %v2234, %v2234
  %v3003 = vmul.f32 %v2235, %v2235
  %v3004 = vmul.f32 %v2236, %v2236
  %v3005 = vmul.f32 %v2237, %v2237
  %v3006 = vmul.f32 %v2238, %v2238
  %v3007 = vmul.f32 %v2239, %v2239
  %v3008 = vmul.f32 %v2240, %v2240
  %v3009 = vmul.f32 %v2241, %v2241
  %v3010 = vmul.f32 %v2242, %v2242
  %v3011 = vmul.f32 %v2243, %v2243
  %v3012 = vmul.f32 %v2244, %v2244
  %v3013 = vmul.f32 %v2245, %v2245
  %v3014 = vmul.f32 %v2246, %v2246
  %v3015 = vmul.f32 %v2247, %v2247
  %v3016 = vmul.f32 %v2248, %v2248
  %v3017 = vmul.f32 %v2249, %v2249
  %v3018 = vmul.f32 %v2250, %v2250
  %v3019 = vmul.f32 %v2251, %v2251
  %v3020 = vmul.f32 %v2252, %v2252
  %v3021 = vmul.f32 %v2253, %v2253
  %v3022 = vmul.f32 %v2254, %v2254
  %v3023 = vmul.f32 %v2255, %v2255
  %v3024 = vmul.f32 %v2256, %v2256
  %v3025 = vmul.f32 %v2257, %v2257
  %v3026 = vmul.f32 %v2258, %v2258
  %v3027 = vmul.f32 %v2259, %v2259
  %v3028 = vmul.f32 %v2260, %v2260
  %v3029 = vmul.f32 %v2261, %v2261
  %v3030 = vmul.f32 %v2262, %v2262
  %v3031 = vmul.f32 %v2263, %v2263
  %v3032 = vmul.f32 %v2264, %v2264
  %v3033 = vmul.f32 %v2265, %v2265
  %v3034 = vmul.f32 %v2266, %v2266
  %v3035 = vsub.f32 %v2843, %v2939
  %v3036 = vsub.f32 %v2844, %v2940
  %v3037 = vsub.f32 %v2845, %v2941
  %v3038 = vsub.f32 %v2846, %v2942
  %v3039 = vsub.f32 %v2847, %v2943
  %v3040 = vsub.f32 %v2848, %v2944
  %v3041 = vsub.f32 %v2849, %v2945
  %v3042 = vsub.f32 %v2850, %v2946
  %v3043 = vsub.f32 %v2851, %v2947
  %v3044 = vsub.f32 %v2852, %v2948
  %v3045 = vsub.f32 %v2853, %v2949
  %v3046 = vsub.f32 %v2854, %v2950
  %v3047 = vsub.f32 %v2855, %v2951
  %v3048 = vsub.f32 %v2856, %v2952
  %v3049 = vsub.f32 %v2857, %v2953
  %v3050 = vsub.f32 %v2858, %v2954
  %v3051 = vsub.f32 %v2859, %v2955
  %v3052 = vsub.f32 %v2860, %v2956
  %v3053 = vsub.f32 %v2861, %v2957
  %v3054 = vsub.f32 %v2862, %v2958
  %v3055 = vsub.f32 %v2863, %v2959
  %v3056 = vsub.f32 %v2864, %v2960
  %v3057 = vsub.f32 %v2865, %v2961
  %v3058 = vsub.f32 %v2866, %v2962
  %v3059 = vsub.f32 %v2867, %v2963
  %v3060 = vsub.f32 %v2868, %v2964
  %v3061 = vsub.f32 %v2869, %v2965
  %v3062 = vsub.f32 %v2870, %v2966
  %v3063 = vsub.f32 %v2871, %v2967
  %v3064 = vsub.f32 %v2872, %v2968
  %v3065 = vsub.f32 %v2873, %v2969
  %v3066 = vsub.f32 %v2874, %v2970
  %v3067 = vsub.f32 %v2875, %v2971
  %v3068 = vsub.f32 %v2876, %v2972
  %v3069 = vsub.f32 %v2877, %v2973
  %v3070 = vsub.f32 %v2878, %v2974
  %v3071 = vsub.f32 %v2879, %v2975
  %v3072 = vsub.f32 %v2880, %v2976
  %v3073 = vsub.f32 %v2881, %v2977
  %v3074 = vsub.f32 %v2882, %v2978
  %v3075 = vsub.f32 %v2883, %v2979
  %v3076 = vsub.f32 %v2884, %v2980
  %v3077 = vsub.f32 %v2885, %v2981
  %v3078 = vsub.f32 %v2886, %v2982
  %v3079 = vsub.f32 %v2887, %v2983
  %v3080 = vsub.f32 %v2888, %v2984
  %v3081 = vsub.f32 %v2889, %v2985
  %v3082 = vsub.f32 %v2890, %v2986
  %v3083 = vsub.f32 %v2891, %v2987
  %v3084 = vsub.f32 %v2892, %v2988
  %v3085 = vsub.f32 %v2893, %v2989
  %v3086 = vsub.f32 %v2894, %v2990
  %v3087 = vsub.f32 %v2895, %v2991
  %v3088 = vsub.f32 %v2896, %v2992
  %v3089 = vsub.f32 %v2897, %v2993
  %v3090 = vsub.f32 %v2898, %v2994
  %v3091 = vsub.f32 %v2899, %v2995
  %v3092 = vsub.f32 %v2900, %v2996
  %v3093 = vsub.f32 %v2901, %v2997
  %v3094 = vsub.f32 %v2902, %v2998
  %v3095 = vsub.f32 %v2903, %v2999
  %v3096 = vsub.f32 %v2904, %v3000
  %v3097 = vsub.f32 %v2905, %v3001
  %v3098 = vsub.f32 %v2906, %v3002
  %v3099 = vsub.f32 %v2907, %v3003
  %v3100 = vsub.f32 %v2908, %v3004
  %v3101 = vsub.f32 %v2909, %v3005
  %v3102 = vsub.f32 %v2910, %v3006
  %v3103 = vsub.f32 %v2911, %v3007
  %v3104 = vsub.f32 %v2912, %v3008
  %v3105 = vsub.f32 %v2913, %v3009
  %v3106 = vsub.f32 %v2914, %v3010
  %v3107 = vsub.f32 %v2915, %v3011
  %v3108 = vsub.f32 %v2916, %v3012
  %v3109 = vsub.f32 %v2917, %v3013
  %v3110 = vsub.f32 %v2918, %v3014
  %v3111 = vsub.f32 %v2919, %v3015
  %v3112 = vsub.f32 %v2920, %v3016
  %v3113 = vsub.f32 %v2921, %v3017
  %v3114 = vsub.f32 %v2922, %v3018
  %v3115 = vsub.f32 %v2923, %v3019
  %v3116 = vsub.f32 %v2924, %v3020
  %v3117 = vsub.f32 %v2925, %v3021
  %v3118 = vsub.f32 %v2926, %v3022
  %v3119 = vsub.f32 %v2927, %v3023
  %v3120 = vsub.f32 %v2928, %v3024
  %v3121 = vsub.f32 %v2929, %v3025
  %v3122 = vsub.f32 %v2930, %v3026
  %v3123 = vsub.f32 %v2931, %v3027
  %v3124 = vsub.f32 %v2932, %v3028
  %v3125 = vsub.f32 %v2933, %v3029
  %v3126 = vsub.f32 %v2934, %v3030
  %v3127 = vsub.f32 %v2935, %v3031
  %v3128 = vsub.f32 %v2936, %v3032
  %v3129 = vsub.f32 %v2937, %v3033
  %v3130 = vsub.f32 %v2938, %v3034
  %v3131 = vsub.f32 %v1309, %v2171
  %v3132 = vsub.f32 %v1311, %v2171
  %v3133 = vsub.f32 %v1313, %v2172
  %v3134 = vsub.f32 %v1315, %v2172
  %v3135 = vsub.f32 %v1319, %v2173
  %v3136 = vsub.f32 %v1321, %v2173
  %v3137 = vsub.f32 %v1323, %v2174
  %v3138 = vsub.f32 %v1325, %v2174
  %v3139 = vsub.f32 %v1329, %v2175
  %v3140 = vsub.f32 %v1331, %v2175
  %v3141 = vsub.f32 %v1333, %v2176
  %v3142 = vsub.f32 %v1335, %v2176
  %v3143 = vsub.f32 %v1339, %v2177
  %v3144 = vsub.f32 %v1341, %v2177
  %v3145 = vsub.f32 %v1343, %v2178
  %v3146 = vsub.f32 %v1345, %v2178
  %v3147 = vsub.f32 %v1349, %v2179
  %v3148 = vsub.f32 %v1351, %v2179
  %v3149 = vsub.f32 %v1353, %v2180
  %v3150 = vsub.f32 %v1355, %v2180
  %v3151 = vsub.f32 %v1359, %v2181
  %v3152 = vsub.f32 %v1361, %v2181
  %v3153 = vsub.f32 %v1363, %v2182
  %v3154 = vsub.f32 %v1365, %v2182
  %v3155 = vsub.f32 %v1369, %v2183
  %v3156 = vsub.f32 %v1371, %v2183
  %v3157 = vsub.f32 %v1373, %v2184
  %v3158 = vsub.f32 %v1375, %v2184
  %v3159 = vsub.f32 %v1379, %v2185
  %v3160 = vsub.f32 %v1381, %v2185
  %v3161 = vsub.f32 %v1383, %v2186
  %v3162 = vsub.f32 %v1385, %v2186
  %v3163 = vsub.f32 %v1389, %v2187
  %v3164 = vsub.f32 %v1391, %v2187
  %v3165 = vsub.f32 %v1393, %v2188
  %v3166 = vsub.f32 %v1395, %v2188
  %v3167 = vsub.f32 %v1399, %v2189
  %v3168 = vsub.f32 %v1401, %v2189
  %v3169 = vsub.f32 %v1403, %v2190
  %v3170 = vsub.f32 %v1405, %v2190
  %v3171 = vsub.f32 %v1409, %v2191
  %v3172 = vsub.f32 %v1411, %v2191
  %v3173 = vsub.f32 %v1413, %v2192
  %v3174 = vsub.f32 %v1415, %v2192
  %v3175 = vsub.f32 %v1419, %v2193
  %v3176 = vsub.f32 %v1421, %v2193
  %v3177 = vsub.f32 %v1423, %v2194
  %v3178 = vsub.f32 %v1425, %v2194
  %v3179 = vsub.f32 %v1429, %v2195
  %v3180 = vsub.f32 %v1431, %v2195
  %v3181 = vsub.f32 %v1433, %v2196
  %v3182 = vsub.f32 %v1435, %v2196
  %v3183 = vsub.f32 %v1439, %v2197
  %v3184 = vsub.f32 %v1441, %v2197
  %v3185 = vsub.f32 %v1443, %v2198
  %v3186 = vsub.f32 %v1445, %v2198
  %v3187 = vsub.f32 %v1449, %v2199
  %v3188 = vsub.f32 %v1451, %v2199
  %v3189 = vsub.f32 %v1453, %v2200
  %v3190 = vsub.f32 %v1455, %v2200
  %v3191 = vsub.f32 %v1459, %v2201
  %v3192 = vsub.f32 %v1461, %v2201
  %v3193 = vsub.f32 %v1463, %v2202
  %v3194 = vsub.f32 %v1465, %v2202
  %v3195 = vsub.f32 %v1469, %v2203
  %v3196 = vsub.f32 %v1471, %v2203
  %v3197 = vsub.f32 %v1473, %v2204
  %v3198 = vsub.f32 %v1475, %v2204
  %v3199 = vsub.f32 %v1479, %v2205
  %v3200 = vsub.f32 %v1481, %v2205
  %v3201 = vsub.f32 %v1483, %v2206
  %v3202 = vsub.f32 %v1485, %v2206
  %v3203 = vsub.f32 %v1489, %v2207
  %v3204 = vsub.f32 %v1491, %v2207
  %v3205 = vsub.f32 %v1493, %v2208
  %v3206 = vsub.f32 %v1495, %v2208
  %v3207 = vsub.f32 %v1499, %v2209
  %v3208 = vsub.f32 %v1501, %v2209
  %v3209 = vsub.f32 %v1503, %v2210
  %v3210 = vsub.f32 %v1505, %v2210
  %v3211 = vsub.f32 %v1509, %v2211
  %v3212 = vsub.f32 %v1511, %v2211
  %v3213 = vsub.f32 %v1513, %v2212
  %v3214 = vsub.f32 %v1515, %v2212
  %v3215 = vsub.f32 %v1519, %v2213
  %v3216 = vsub.f32 %v1521, %v2213
  %v3217 = vsub.f32 %v1523, %v2214
  %v3218 = vsub.f32 %v1525, %v2214
  %v3219 = vsub.f32 %v1529, %v2215
  %v3220 = vsub.f32 %v1531, %v2215
  %v3221 = vsub.f32 %v1533, %v2216
  %v3222 = vsub.f32 %v1535, %v2216
  %v3223 = vsub.f32 %v1539, %v2217
  %v3224 = vsub.f32 %v1541, %v2217
  %v3225 = vsub.f32 %v1543, %v2218
  %v3226 = vsub.f32 %v1545, %v2218
  %v3227 = vsub.f32 %v1549, %v2219
  %v3228 = vsub.f32 %v1551, %v2219
  %v3229 = vsub.f32 %v1553, %v2220
  %v3230 = vsub.f32 %v1555, %v2220
  %v3231 = vsub.f32 %v1559, %v2221
  %v3232 = vsub.f32 %v1561, %v2221
  %v3233 = vsub.f32 %v1563, %v2222
  %v3234 = vsub.f32 %v1565, %v2222
  %v3235 = vsub.f32 %v1569, %v2223
  %v3236 = vsub.f32 %v1571, %v2223
  %v3237 = vsub.f32 %v1573, %v2224
  %v3238 = vsub.f32 %v1575, %v2224
  %v3239 = vsub.f32 %v1579, %v2225
  %v3240 = vsub.f32 %v1581, %v2225
  %v3241 = vsub.f32 %v1583, %v2226
  %v3242 = vsub.f32 %v1585, %v2226
  %v3243 = vsub.f32 %v1589, %v2227
  %v3244 = vsub.f32 %v1591, %v2227
  %v3245 = vsub.f32 %v1593, %v2228
  %v3246 = vsub.f32 %v1595, %v2228
  %v3247 = vsub.f32 %v1599, %v2229
  %v3248 = vsub.f32 %v1601, %v2229
  %v3249 = vsub.f32 %v1603, %v2230
  %v3250 = vsub.f32 %v1605, %v2230
  %v3251 = vsub.f32 %v1609, %v2231
  %v3252 = vsub.f32 %v1611, %v2231
  %v3253 = vsub.f32 %v1613, %v2232
  %v3254 = vsub.f32 %v1615, %v2232
  %v3255 = vsub.f32 %v1619, %v2233
  %v3256 = vsub.f32 %v1621, %v2233
  %v3257 = vsub.f32 %v1623, %v2234
  %v3258 = vsub.f32 %v1625, %v2234
  %v3259 = vsub.f32 %v1629, %v2235
  %v3260 = vsub.f32 %v1631, %v2235
  %v3261 = vsub.f32 %v1633, %v2236
  %v3262 = vsub.f32 %v1635, %v2236
  %v3263 = vsub.f32 %v1639, %v2237
  %v3264 = vsub.f32 %v1641, %v2237
  %v3265 = vsub.f32 %v1643, %v2238
  %v3266 = vsub.f32 %v1645, %v2238
  %v3267 = vsub.f32 %v1649, %v2239
  %v3268 = vsub.f32 %v1651, %v2239
  %v3269 = vsub.f32 %v1653, %v2240
  %v3270 = vsub.f32 %v1655, %v2240
  %v3271 = vsub.f32 %v1659, %v2241
  %v3272 = vsub.f32 %v1661, %v2241
  %v3273 = vsub.f32 %v1663, %v2242
  %v3274 = vsub.f32 %v1665, %v2242
  %v3275 = vsub.f32 %v1669, %v2243
  %v3276 = vsub.f32 %v1671, %v2243
  %v3277 = vsub.f32 %v1673, %v2244
  %v3278 = vsub.f32 %v1675, %v2244
  %v3279 = vsub.f32 %v1679, %v2245
  %v3280 = vsub.f32 %v1681, %v2245
  %v3281 = vsub.f32 %v1683, %v2246
  %v3282 = vsub.f32 %v1685, %v2246
  %v3283 = vsub.f32 %v1689, %v2247
  %v3284 = vsub.f32 %v1691, %v2247
  %v3285 = vsub.f32 %v1693, %v2248
  %v3286 = vsub.f32 %v1695, %v2248
  %v3287 = vsub.f32 %v1699, %v2249
  %v3288 = vsub.f32 %v1701, %v2249
  %v3289 = vsub.f32 %v1703, %v2250
  %v3290 = vsub.f32 %v1705, %v2250
  %v3291 = vsub.f32 %v1709, %v2251
  %v3292 = vsub.f32 %v1711, %v2251
  %v3293 = vsub.f32 %v1713, %v2252
  %v3294 = vsub.f32 %v1715, %v2252
  %v3295 = vsub.f32 %v1719, %v2253
  %v3296 = vsub.f32 %v1721, %v2253
  %v3297 = vsub.f32 %v1723, %v2254
  %v3298 = vsub.f32 %v1725, %v2254
  %v3299 = vsub.f32 %v1729, %v2255
  %v3300 = vsub.f32 %v1731, %v2255
  %v3301 = vsub.f32 %v1733, %v2256
  %v3302 = vsub.f32 %v1735, %v2256
  %v3303 = vsub.f32 %v1739, %v2257
  %v3304 = vsub.f32 %v1741, %v2257
  %v3305 = vsub.f32 %v1743, %v2258
  %v3306 = vsub.f32 %v1745, %v2258
  %v3307 = vsub.f32 %v1749, %v2259
  %v3308 = vsub.f32 %v1751, %v2259
  %v3309 = vsub.f32 %v1753, %v2260
  %v3310 = vsub.f32 %v1755, %v2260
  %v3311 = vsub.f32 %v1759, %v2261
  %v3312 = vsub.f32 %v1761, %v2261
  %v3313 = vsub.f32 %v1763, %v2262
  %v3314 = vsub.f32 %v1765, %v2262
  %v3315 = vsub.f32 %v1769, %v2263
  %v3316 = vsub.f32 %v1771, %v2263
  %v3317 = vsub.f32 %v1773, %v2264
  %v3318 = vsub.f32 %v1775, %v2264
  %v3319 = vsub.f32 %v1779, %v2265
  %v3320 = vsub.f32 %v1781, %v2265
  %v3321 = vsub.f32 %v1783, %v2266
  %v3322 = vsub.f32 %v1785, %v2266
  %v3323 = vadd.f32 %v3035, 1e-05
  %v3324 = vadd.f32 %v3036, 1e-05
  %v3325 = vadd.f32 %v3037, 1e-05
  %v3326 = vadd.f32 %v3038, 1e-05
  %v3327 = vadd.f32 %v3039, 1e-05
  %v3328 = vadd.f32 %v3040, 1e-05
  %v3329 = vadd.f32 %v3041, 1e-05
  %v3330 = vadd.f32 %v3042, 1e-05
  %v3331 = vadd.f32 %v3043, 1e-05
  %v3332 = vadd.f32 %v3044, 1e-05
  %v3333 = vadd.f32 %v3045, 1e-05
  %v3334 = vadd.f32 %v3046, 1e-05
  %v3335 = vadd.f32 %v3047, 1e-05
  %v3336 = vadd.f32 %v3048, 1e-05
  %v3337 = vadd.f32 %v3049, 1e-05
  %v3338 = vadd.f32 %v3050, 1e-05
  %v3339 = vadd.f32 %v3051, 1e-05
  %v3340 = vadd.f32 %v3052, 1e-05
  %v3341 = vadd.f32 %v3053, 1e-05
  %v3342 = vadd.f32 %v3054, 1e-05
  %v3343 = vadd.f32 %v3055, 1e-05
  %v3344 = vadd.f32 %v3056, 1e-05
  %v3345 = vadd.f32 %v3057, 1e-05
  %v3346 = vadd.f32 %v3058, 1e-05
  %v3347 = vadd.f32 %v3059, 1e-05
  %v3348 = vadd.f32 %v3060, 1e-05
  %v3349 = vadd.f32 %v3061, 1e-05
  %v3350 = vadd.f32 %v3062, 1e-05
  %v3351 = vadd.f32 %v3063, 1e-05
  %v3352 = vadd.f32 %v3064, 1e-05
  %v3353 = vadd.f32 %v3065, 1e-05
  %v3354 = vadd.f32 %v3066, 1e-05
  %v3355 = vadd.f32 %v3067, 1e-05
  %v3356 = vadd.f32 %v3068, 1e-05
  %v3357 = vadd.f32 %v3069, 1e-05
  %v3358 = vadd.f32 %v3070, 1e-05
  %v3359 = vadd.f32 %v3071, 1e-05
  %v3360 = vadd.f32 %v3072, 1e-05
  %v3361 = vadd.f32 %v3073, 1e-05
  %v3362 = vadd.f32 %v3074, 1e-05
  %v3363 = vadd.f32 %v3075, 1e-05
  %v3364 = vadd.f32 %v3076, 1e-05
  %v3365 = vadd.f32 %v3077, 1e-05
  %v3366 = vadd.f32 %v3078, 1e-05
  %v3367 = vadd.f32 %v3079, 1e-05
  %v3368 = vadd.f32 %v3080, 1e-05
  %v3369 = vadd.f32 %v3081, 1e-05
  %v3370 = vadd.f32 %v3082, 1e-05
  %v3371 = vadd.f32 %v3083, 1e-05
  %v3372 = vadd.f32 %v3084, 1e-05
  %v3373 = vadd.f32 %v3085, 1e-05
  %v3374 = vadd.f32 %v3086, 1e-05
  %v3375 = vadd.f32 %v3087, 1e-05
  %v3376 = vadd.f32 %v3088, 1e-05
  %v3377 = vadd.f32 %v3089, 1e-05
  %v3378 = vadd.f32 %v3090, 1e-05
  %v3379 = vadd.f32 %v3091, 1e-05
  %v3380 = vadd.f32 %v3092, 1e-05
  %v3381 = vadd.f32 %v3093, 1e-05
  %v3382 = vadd.f32 %v3094, 1e-05
  %v3383 = vadd.f32 %v3095, 1e-05
  %v3384 = vadd.f32 %v3096, 1e-05
  %v3385 = vadd.f32 %v3097, 1e-05
  %v3386 = vadd.f32 %v3098, 1e-05
  %v3387 = vadd.f32 %v3099, 1e-05
  %v3388 = vadd.f32 %v3100, 1e-05
  %v3389 = vadd.f32 %v3101, 1e-05
  %v3390 = vadd.f32 %v3102, 1e-05
  %v3391 = vadd.f32 %v3103, 1e-05
  %v3392 = vadd.f32 %v3104, 1e-05
  %v3393 = vadd.f32 %v3105, 1e-05
  %v3394 = vadd.f32 %v3106, 1e-05
  %v3395 = vadd.f32 %v3107, 1e-05
  %v3396 = vadd.f32 %v3108, 1e-05
  %v3397 = vadd.f32 %v3109, 1e-05
  %v3398 = vadd.f32 %v3110, 1e-05
  %v3399 = vadd.f32 %v3111, 1e-05
  %v3400 = vadd.f32 %v3112, 1e-05
  %v3401 = vadd.f32 %v3113, 1e-05
  %v3402 = vadd.f32 %v3114, 1e-05
  %v3403 = vadd.f32 %v3115, 1e-05
  %v3404 = vadd.f32 %v3116, 1e-05
  %v3405 = vadd.f32 %v3117, 1e-05
  %v3406 = vadd.f32 %v3118, 1e-05
  %v3407 = vadd.f32 %v3119, 1e-05
  %v3408 = vadd.f32 %v3120, 1e-05
  %v3409 = vadd.f32 %v3121, 1e-05
  %v3410 = vadd.f32 %v3122, 1e-05
  %v3411 = vadd.f32 %v3123, 1e-05
  %v3412 = vadd.f32 %v3124, 1e-05
  %v3413 = vadd.f32 %v3125, 1e-05
  %v3414 = vadd.f32 %v3126, 1e-05
  %v3415 = vadd.f32 %v3127, 1e-05
  %v3416 = vadd.f32 %v3128, 1e-05
  %v3417 = vadd.f32 %v3129, 1e-05
  %v3418 = vadd.f32 %v3130, 1e-05
  %v3419 = vrsqrt.pop %v3323
  %v3420 = vrsqrt.pop %v3324
  %v3421 = vrsqrt.pop %v3325
  %v3422 = vrsqrt.pop %v3326
  %v3423 = vrsqrt.pop %v3327
  %v3424 = vrsqrt.pop %v3328
  %v3425 = vrsqrt.pop %v3329
  %v3426 = vrsqrt.pop %v3330
  %v3427 = vrsqrt.pop %v3331
  %v3428 = vrsqrt.pop %v3332
  %v3429 = vrsqrt.pop %v3333
  %v3430 = vrsqrt.pop %v3334
  %v3431 = vrsqrt.pop %v3335
  %v3432 = vrsqrt.pop %v3336
  %v3433 = vrsqrt.pop %v3337
  %v3434 = vrsqrt.pop %v3338
  %v3435 = vrsqrt.pop %v3339
  %v3436 = vrsqrt.pop %v3340
  %v3437 = vrsqrt.pop %v3341
  %v3438 = vrsqrt.pop %v3342
  %v3439 = vrsqrt.pop %v3343
  %v3440 = vrsqrt.pop %v3344
  %v3441 = vrsqrt.pop %v3345
  %v3442 = vrsqrt.pop %v3346
  %v3443 = vrsqrt.pop %v3347
  %v3444 = vrsqrt.pop %v3348
  %v3445 = vrsqrt.pop %v3349
  %v3446 = vrsqrt.pop %v3350
  %v3447 = vrsqrt.pop %v3351
  %v3448 = vrsqrt.pop %v3352
  %v3449 = vrsqrt.pop %v3353
  %v3450 = vrsqrt.pop %v3354
  %v3451 = vrsqrt.pop %v3355
  %v3452 = vrsqrt.pop %v3356
  %v3453 = vrsqrt.pop %v3357
  %v3454 = vrsqrt.pop %v3358
  %v3455 = vrsqrt.pop %v3359
  %v3456 = vrsqrt.pop %v3360
  %v3457 = vrsqrt.pop %v3361
  %v3458 = vrsqrt.pop %v3362
  %v3459 = vrsqrt.pop %v3363
  %v3460 = vrsqrt.pop %v3364
  %v3461 = vrsqrt.pop %v3365
  %v3462 = vrsqrt.pop %v3366
  %v3463 = vrsqrt.pop %v3367
  %v3464 = vrsqrt.pop %v3368
  %v3465 = vrsqrt.pop %v3369
  %v3466 = vrsqrt.pop %v3370
  %v3467 = vrsqrt.pop %v3371
  %v3468 = vrsqrt.pop %v3372
  %v3469 = vrsqrt.pop %v3373
  %v3470 = vrsqrt.pop %v3374
  %v3471 = vrsqrt.pop %v3375
  %v3472 = vrsqrt.pop %v3376
  %v3473 = vrsqrt.pop %v3377
  %v3474 = vrsqrt.pop %v3378
  %v3475 = vrsqrt.pop %v3379
  %v3476 = vrsqrt.pop %v3380
  %v3477 = vrsqrt.pop %v3381
  %v3478 = vrsqrt.pop %v3382
  %v3479 = vrsqrt.pop %v3383
  %v3480 = vrsqrt.pop %v3384
  %v3481 = vrsqrt.pop %v3385
  %v3482 = vrsqrt.pop %v3386
  %v3483 = vrsqrt.pop %v3387
  %v3484 = vrsqrt.pop %v3388
  %v3485 = vrsqrt.pop %v3389
  %v3486 = vrsqrt.pop %v3390
  %v3487 = vrsqrt.pop %v3391
  %v3488 = vrsqrt.pop %v3392
  %v3489 = vrsqrt.pop %v3393
  %v3490 = vrsqrt.pop %v3394
  %v3491 = vrsqrt.pop %v3395
  %v3492 = vrsqrt.pop %v3396
  %v3493 = vrsqrt.pop %v3397
  %v3494 = vrsqrt.pop %v3398
  %v3495 = vrsqrt.pop %v3399
  %v3496 = vrsqrt.pop %v3400
  %v3497 = vrsqrt.pop %v3401
  %v3498 = vrsqrt.pop %v3402
  %v3499 = vrsqrt.pop %v3403
  %v3500 = vrsqrt.pop %v3404
  %v3501 = vrsqrt.pop %v3405
  %v3502 = vrsqrt.pop %v3406
  %v3503 = vrsqrt.pop %v3407
  %v3504 = vrsqrt.pop %v3408
  %v3505 = vrsqrt.pop %v3409
  %v3506 = vrsqrt.pop %v3410
  %v3507 = vrsqrt.pop %v3411
  %v3508 = vrsqrt.pop %v3412
  %v3509 = vrsqrt.pop %v3413
  %v3510 = vrsqrt.pop %v3414
  %v3511 = vrsqrt.pop %v3415
  %v3512 = vrsqrt.pop %v3416
  %v3513 = vrsqrt.pop %v3417
  %v3514 = vrsqrt.pop %v3418
  %v3515 = vmul.f32 %v3131, %v3419
  %v3516 = vmul.f32 %v3132, %v3419
  %v3517 = vmul.f32 %v3133, %v3420
  %v3518 = vmul.f32 %v3134, %v3420
  %v3519 = vmul.f32 %v3135, %v3421
  %v3520 = vmul.f32 %v3136, %v3421
  %v3521 = vmul.f32 %v3137, %v3422
  %v3522 = vmul.f32 %v3138, %v3422
  %v3523 = vmul.f32 %v3139, %v3423
  %v3524 = vmul.f32 %v3140, %v3423
  %v3525 = vmul.f32 %v3141, %v3424
  %v3526 = vmul.f32 %v3142, %v3424
  %v3527 = vmul.f32 %v3143, %v3425
  %v3528 = vmul.f32 %v3144, %v3425
  %v3529 = vmul.f32 %v3145, %v3426
  %v3530 = vmul.f32 %v3146, %v3426
  %v3531 = vmul.f32 %v3147, %v3427
  %v3532 = vmul.f32 %v3148, %v3427
  %v3533 = vmul.f32 %v3149, %v3428
  %v3534 = vmul.f32 %v3150, %v3428
  %v3535 = vmul.f32 %v3151, %v3429
  %v3536 = vmul.f32 %v3152, %v3429
  %v3537 = vmul.f32 %v3153, %v3430
  %v3538 = vmul.f32 %v3154, %v3430
  %v3539 = vmul.f32 %v3155, %v3431
  %v3540 = vmul.f32 %v3156, %v3431
  %v3541 = vmul.f32 %v3157, %v3432
  %v3542 = vmul.f32 %v3158, %v3432
  %v3543 = vmul.f32 %v3159, %v3433
  %v3544 = vmul.f32 %v3160, %v3433
  %v3545 = vmul.f32 %v3161, %v3434
  %v3546 = vmul.f32 %v3162, %v3434
  %v3547 = vmul.f32 %v3163, %v3435
  %v3548 = vmul.f32 %v3164, %v3435
  %v3549 = vmul.f32 %v3165, %v3436
  %v3550 = vmul.f32 %v3166, %v3436
  %v3551 = vmul.f32 %v3167, %v3437
  %v3552 = vmul.f32 %v3168, %v3437
  %v3553 = vmul.f32 %v3169, %v3438
  %v3554 = vmul.f32 %v3170, %v3438
  %v3555 = vmul.f32 %v3171, %v3439
  %v3556 = vmul.f32 %v3172, %v3439
  %v3557 = vmul.f32 %v3173, %v3440
  %v3558 = vmul.f32 %v3174, %v3440
  %v3559 = vmul.f32 %v3175, %v3441
  %v3560 = vmul.f32 %v3176, %v3441
  %v3561 = vmul.f32 %v3177, %v3442
  %v3562 = vmul.f32 %v3178, %v3442
  %v3563 = vmul.f32 %v3179, %v3443
  %v3564 = vmul.f32 %v3180, %v3443
  %v3565 = vmul.f32 %v3181, %v3444
  %v3566 = vmul.f32 %v3182, %v3444
  %v3567 = vmul.f32 %v3183, %v3445
  %v3568 = vmul.f32 %v3184, %v3445
  %v3569 = vmul.f32 %v3185, %v3446
  %v3570 = vmul.f32 %v3186, %v3446
  %v3571 = vmul.f32 %v3187, %v3447
  %v3572 = vmul.f32 %v3188, %v3447
  %v3573 = vmul.f32 %v3189, %v3448
  %v3574 = vmul.f32 %v3190, %v3448
  %v3575 = vmul.f32 %v3191, %v3449
  %v3576 = vmul.f32 %v3192, %v3449
  %v3577 = vmul.f32 %v3193, %v3450
  %v3578 = vmul.f32 %v3194, %v3450
  %v3579 = vmul.f32 %v3195, %v3451
  %v3580 = vmul.f32 %v3196, %v3451
  %v3581 = vmul.f32 %v3197, %v3452
  %v3582 = vmul.f32 %v3198, %v3452
  %v3583 = vmul.f32 %v3199, %v3453
  %v3584 = vmul.f32 %v3200, %v3453
  %v3585 = vmul.f32 %v3201, %v3454
  %v3586 = vmul.f32 %v3202, %v3454
  %v3587 = vmul.f32 %v3203, %v3455
  %v3588 = vmul.f32 %v3204, %v3455
  %v3589 = vmul.f32 %v3205, %v3456
  %v3590 = vmul.f32 %v3206, %v3456
  %v3591 = vmul.f32 %v3207, %v3457
  %v3592 = vmul.f32 %v3208, %v3457
  %v3593 = vmul.f32 %v3209, %v3458
  %v3594 = vmul.f32 %v3210, %v3458
  %v3595 = vmul.f32 %v3211, %v3459
  %v3596 = vmul.f32 %v3212, %v3459
  %v3597 = vmul.f32 %v3213, %v3460
  %v3598 = vmul.f32 %v3214, %v3460
  %v3599 = vmul.f32 %v3215, %v3461
  %v3600 = vmul.f32 %v3216, %v3461
  %v3601 = vmul.f32 %v3217, %v3462
  %v3602 = vmul.f32 %v3218, %v3462
  %v3603 = vmul.f32 %v3219, %v3463
  %v3604 = vmul.f32 %v3220, %v3463
  %v3605 = vmul.f32 %v3221, %v3464
  %v3606 = vmul.f32 %v3222, %v3464
  %v3607 = vmul.f32 %v3223, %v3465
  %v3608 = vmul.f32 %v3224, %v3465
  %v3609 = vmul.f32 %v3225, %v3466
  %v3610 = vmul.f32 %v3226, %v3466
  %v3611 = vmul.f32 %v3227, %v3467
  %v3612 = vmul.f32 %v3228, %v3467
  %v3613 = vmul.f32 %v3229, %v3468
  %v3614 = vmul.f32 %v3230, %v3468
  %v3615 = vmul.f32 %v3231, %v3469
  %v3616 = vmul.f32 %v3232, %v3469
  %v3617 = vmul.f32 %v3233, %v3470
  %v3618 = vmul.f32 %v3234, %v3470
  %v3619 = vmul.f32 %v3235, %v3471
  %v3620 = vmul.f32 %v3236, %v3471
  %v3621 = vmul.f32 %v3237, %v3472
  %v3622 = vmul.f32 %v3238, %v3472
  %v3623 = vmul.f32 %v3239, %v3473
  %v3624 = vmul.f32 %v3240, %v3473
  %v3625 = vmul.f32 %v3241, %v3474
  %v3626 = vmul.f32 %v3242, %v3474
  %v3627 = vmul.f32 %v3243, %v3475
  %v3628 = vmul.f32 %v3244, %v3475
  %v3629 = vmul.f32 %v3245, %v3476
  %v3630 = vmul.f32 %v3246, %v3476
  %v3631 = vmul.f32 %v3247, %v3477
  %v3632 = vmul.f32 %v3248, %v3477
  %v3633 = vmul.f32 %v3249, %v3478
  %v3634 = vmul.f32 %v3250, %v3478
  %v3635 = vmul.f32 %v3251, %v3479
  %v3636 = vmul.f32 %v3252, %v3479
  %v3637 = vmul.f32 %v3253, %v3480
  %v3638 = vmul.f32 %v3254, %v3480
  %v3639 = vmul.f32 %v3255, %v3481
  %v3640 = vmul.f32 %v3256, %v3481
  %v3641 = vmul.f32 %v3257, %v3482
  %v3642 = vmul.f32 %v3258, %v3482
  %v3643 = vmul.f32 %v3259, %v3483
  %v3644 = vmul.f32 %v3260, %v3483
  %v3645 = vmul.f32 %v3261, %v3484
  %v3646 = vmul.f32 %v3262, %v3484
  %v3647 = vmul.f32 %v3263, %v3485
  %v3648 = vmul.f32 %v3264, %v3485
  %v3649 = vmul.f32 %v3265, %v3486
  %v3650 = vmul.f32 %v3266, %v3486
  %v3651 = vmul.f32 %v3267, %v3487
  %v3652 = vmul.f32 %v3268, %v3487
  %v3653 = vmul.f32 %v3269, %v3488
  %v3654 = vmul.f32 %v3270, %v3488
  %v3655 = vmul.f32 %v3271, %v3489
  %v3656 = vmul.f32 %v3272, %v3489
  %v3657 = vmul.f32 %v3273, %v3490
  %v3658 = vmul.f32 %v3274, %v3490
  %v3659 = vmul.f32 %v3275, %v3491
  %v3660 = vmul.f32 %v3276, %v3491
  %v3661 = vmul.f32 %v3277, %v3492
  %v3662 = vmul.f32 %v3278, %v3492
  %v3663 = vmul.f32 %v3279, %v3493
  %v3664 = vmul.f32 %v3280, %v3493
  %v3665 = vmul.f32 %v3281, %v3494
  %v3666 = vmul.f32 %v3282, %v3494
  %v3667 = vmul.f32 %v3283, %v3495
  %v3668 = vmul.f32 %v3284, %v3495
  %v3669 = vmul.f32 %v3285, %v3496
  %v3670 = vmul.f32 %v3286, %v3496
  %v3671 = vmul.f32 %v3287, %v3497
  %v3672 = vmul.f32 %v3288, %v3497
  %v3673 = vmul.f32 %v3289, %v3498
  %v3674 = vmul.f32 %v3290, %v3498
  %v3675 = vmul.f32 %v3291, %v3499
  %v3676 = vmul.f32 %v3292, %v3499
  %v3677 = vmul.f32 %v3293, %v3500
  %v3678 = vmul.f32 %v3294, %v3500
  %v3679 = vmul.f32 %v3295, %v3501
  %v3680 = vmul.f32 %v3296, %v3501
  %v3681 = vmul.f32 %v3297, %v3502
  %v3682 = vmul.f32 %v3298, %v3502
  %v3683 = vmul.f32 %v3299, %v3503
  %v3684 = vmul.f32 %v3300, %v3503
  %v3685 = vmul.f32 %v3301, %v3504
  %v3686 = vmul.f32 %v3302, %v3504
  %v3687 = vmul.f32 %v3303, %v3505
  %v3688 = vmul.f32 %v3304, %v3505
  %v3689 = vmul.f32 %v3305, %v3506
  %v3690 = vmul.f32 %v3306, %v3506
  %v3691 = vmul.f32 %v3307, %v3507
  %v3692 = vmul.f32 %v3308, %v3507
  %v3693 = vmul.f32 %v3309, %v3508
  %v3694 = vmul.f32 %v3310, %v3508
  %v3695 = vmul.f32 %v3311, %v3509
  %v3696 = vmul.f32 %v3312, %v3509
  %v3697 = vmul.f32 %v3313, %v3510
  %v3698 = vmul.f32 %v3314, %v3510
  %v3699 = vmul.f32 %v3315, %v3511
  %v3700 = vmul.f32 %v3316, %v3511
  %v3701 = vmul.f32 %v3317, %v3512
  %v3702 = vmul.f32 %v3318, %v3512
  %v3703 = vmul.f32 %v3319, %v3513
  %v3704 = vmul.f32 %v3320, %v3513
  %v3705 = vmul.f32 %v3321, %v3514
  %v3706 = vmul.f32 %v3322, %v3514
  %v3707 = vld [vmem:[%s6] sm:$0xff]
  %v3708 = vld [vmem:[%s6 + $0x8] sm:$0xff]
  %v3709 = vld [vmem:[%s6 + $0x10] sm:$0xff]
  %v3710 = vld [vmem:[%s6 + $0x18] sm:$0xff]
  %v3711 = vld [vmem:[%s6 + $0x20] sm:$0xff]
  %v3712 = vld [vmem:[%s6 + $0x28] sm:$0xff]
  %v3713 = vld [vmem:[%s6 + $0x30] sm:$0xff]
  %v3714 = vld [vmem:[%s6 + $0x38] sm:$0xff]
  %v3715 = vld [vmem:[%s6 + $0x40] sm:$0xff]
  %v3716 = vld [vmem:[%s6 + $0x48] sm:$0xff]
  %v3717 = vld [vmem:[%s6 + $0x50] sm:$0xff]
  %v3718 = vld [vmem:[%s6 + $0x58] sm:$0xff]
  %v3719 = vld [vmem:[%s6 + $0x60] sm:$0xff]
  %v3720 = vld [vmem:[%s6 + $0x68] sm:$0xff]
  %v3721 = vld [vmem:[%s6 + $0x70] sm:$0xff]
  %v3722 = vld [vmem:[%s6 + $0x78] sm:$0xff]
  %v3723 = vld [vmem:[%s6 + $0x80] sm:$0xff]
  %v3724 = vld [vmem:[%s6 + $0x88] sm:$0xff]
  %v3725 = vld [vmem:[%s6 + $0x90] sm:$0xff]
  %v3726 = vld [vmem:[%s6 + $0x98] sm:$0xff]
  %v3727 = vld [vmem:[%s6 + $0xa0] sm:$0xff]
  %v3728 = vld [vmem:[%s6 + $0xa8] sm:$0xff]
  %v3729 = vld [vmem:[%s6 + $0xb0] sm:$0xff]
  %v3730 = vld [vmem:[%s6 + $0xb8] sm:$0xff]
  %v3731 = vld [vmem:[%s6 + $0xc0] sm:$0xff]
  %v3732 = vld [vmem:[%s6 + $0xc8] sm:$0xff]
  %v3733 = vld [vmem:[%s6 + $0xd0] sm:$0xff]
  %v3734 = vld [vmem:[%s6 + $0xd8] sm:$0xff]
  %v3735 = vld [vmem:[%s6 + $0xe0] sm:$0xff]
  %v3736 = vld [vmem:[%s6 + $0xe8] sm:$0xff]
  %v3737 = vld [vmem:[%s6 + $0xf0] sm:$0xff]
  %v3738 = vld [vmem:[%s6 + $0xf8] sm:$0xff]
  %v3739 = vld [vmem:[%s6 + $0x100] sm:$0xff]
  %v3740 = vld [vmem:[%s6 + $0x108] sm:$0xff]
  %v3741 = vld [vmem:[%s6 + $0x110] sm:$0xff]
  %v3742 = vld [vmem:[%s6 + $0x118] sm:$0xff]
  %v3743 = vld [vmem:[%s6 + $0x120] sm:$0xff]
  %v3744 = vld [vmem:[%s6 + $0x128] sm:$0xff]
  %v3745 = vld [vmem:[%s6 + $0x130] sm:$0xff]
  %v3746 = vld [vmem:[%s6 + $0x138] sm:$0xff]
  %v3747 = vld [vmem:[%s6 + $0x140] sm:$0xff]
  %v3748 = vld [vmem:[%s6 + $0x148] sm:$0xff]
  %v3749 = vld [vmem:[%s6 + $0x150] sm:$0xff]
  %v3750 = vld [vmem:[%s6 + $0x158] sm:$0xff]
  %v3751 = vld [vmem:[%s6 + $0x160] sm:$0xff]
  %v3752 = vld [vmem:[%s6 + $0x168] sm:$0xff]
  %v3753 = vld [vmem:[%s6 + $0x170] sm:$0xff]
  %v3754 = vld [vmem:[%s6 + $0x178] sm:$0xff]
  %v3755 = vld [vmem:[%s6 + $0x180] sm:$0xff]
  %v3756 = vld [vmem:[%s6 + $0x188] sm:$0xff]
  %v3757 = vld [vmem:[%s6 + $0x190] sm:$0xff]
  %v3758 = vld [vmem:[%s6 + $0x198] sm:$0xff]
  %v3759 = vld [vmem:[%s6 + $0x1a0] sm:$0xff]
  %v3760 = vld [vmem:[%s6 + $0x1a8] sm:$0xff]
  %v3761 = vld [vmem:[%s6 + $0x1b0] sm:$0xff]
  %v3762 = vld [vmem:[%s6 + $0x1b8] sm:$0xff]
  %v3763 = vld [vmem:[%s6 + $0x1c0] sm:$0xff]
  %v3764 = vld [vmem:[%s6 + $0x1c8] sm:$0xff]
  %v3765 = vld [vmem:[%s6 + $0x1d0] sm:$0xff]
  %v3766 = vld [vmem:[%s6 + $0x1d8] sm:$0xff]
  %v3767 = vld [vmem:[%s6 + $0x1e0] sm:$0xff]
  %v3768 = vld [vmem:[%s6 + $0x1e8] sm:$0xff]
  %v3769 = vld [vmem:[%s6 + $0x1f0] sm:$0xff]
  %v3770 = vld [vmem:[%s6 + $0x1f8] sm:$0xff]
  %v3771 = vld [vmem:[%s6 + $0x200] sm:$0xff]
  %v3772 = vld [vmem:[%s6 + $0x208] sm:$0xff]
  %v3773 = vld [vmem:[%s6 + $0x210] sm:$0xff]
  %v3774 = vld [vmem:[%s6 + $0x218] sm:$0xff]
  %v3775 = vld [vmem:[%s6 + $0x220] sm:$0xff]
  %v3776 = vld [vmem:[%s6 + $0x228] sm:$0xff]
  %v3777 = vld [vmem:[%s6 + $0x230] sm:$0xff]
  %v3778 = vld [vmem:[%s6 + $0x238] sm:$0xff]
  %v3779 = vld [vmem:[%s6 + $0x240] sm:$0xff]
  %v3780 = vld [vmem:[%s6 + $0x248] sm:$0xff]
  %v3781 = vld [vmem:[%s6 + $0x250] sm:$0xff]
  %v3782 = vld [vmem:[%s6 + $0x258] sm:$0xff]
  %v3783 = vld [vmem:[%s6 + $0x260] sm:$0xff]
  %v3784 = vld [vmem:[%s6 + $0x268] sm:$0xff]
  %v3785 = vld [vmem:[%s6 + $0x270] sm:$0xff]
  %v3786 = vld [vmem:[%s6 + $0x278] sm:$0xff]
  %v3787 = vld [vmem:[%s6 + $0x280] sm:$0xff]
  %v3788 = vld [vmem:[%s6 + $0x288] sm:$0xff]
  %v3789 = vld [vmem:[%s6 + $0x290] sm:$0xff]
  %v3790 = vld [vmem:[%s6 + $0x298] sm:$0xff]
  %v3791 = vld [vmem:[%s6 + $0x2a0] sm:$0xff]
  %v3792 = vld [vmem:[%s6 + $0x2a8] sm:$0xff]
  %v3793 = vld [vmem:[%s6 + $0x2b0] sm:$0xff]
  %v3794 = vld [vmem:[%s6 + $0x2b8] sm:$0xff]
  %v3795 = vld [vmem:[%s6 + $0x2c0] sm:$0xff]
  %v3796 = vld [vmem:[%s6 + $0x2c8] sm:$0xff]
  %v3797 = vld [vmem:[%s6 + $0x2d0] sm:$0xff]
  %v3798 = vld [vmem:[%s6 + $0x2d8] sm:$0xff]
  %v3799 = vld [vmem:[%s6 + $0x2e0] sm:$0xff]
  %v3800 = vld [vmem:[%s6 + $0x2e8] sm:$0xff]
  %v3801 = vld [vmem:[%s6 + $0x2f0] sm:$0xff]
  %v3802 = vld [vmem:[%s6 + $0x2f8] sm:$0xff]
  %3804 = vset.pattern.permute.xlu0 0
  %3805 = vperm.xlu0 %3804, %v3707
  %v3806 = vpop.permute.xlu0 %3805
  %3809 = vset.pattern.permute.xlu0 0
  %3810 = vperm.xlu0 %3809, %v3708
  %v3811 = vpop.permute.xlu0 %3810
  %3814 = vset.pattern.permute.xlu0 0
  %3815 = vperm.xlu0 %3814, %v3709
  %v3816 = vpop.permute.xlu0 %3815
  %3819 = vset.pattern.permute.xlu0 0
  %3820 = vperm.xlu0 %3819, %v3710
  %v3821 = vpop.permute.xlu0 %3820
  %3824 = vset.pattern.permute.xlu0 0
  %3825 = vperm.xlu0 %3824, %v3711
  %v3826 = vpop.permute.xlu0 %3825
  %3829 = vset.pattern.permute.xlu0 0
  %3830 = vperm.xlu0 %3829, %v3712
  %v3831 = vpop.permute.xlu0 %3830
  %3834 = vset.pattern.permute.xlu0 0
  %3835 = vperm.xlu0 %3834, %v3713
  %v3836 = vpop.permute.xlu0 %3835
  %3839 = vset.pattern.permute.xlu0 0
  %3840 = vperm.xlu0 %3839, %v3714
  %v3841 = vpop.permute.xlu0 %3840
  %3844 = vset.pattern.permute.xlu0 0
  %3845 = vperm.xlu0 %3844, %v3715
  %v3846 = vpop.permute.xlu0 %3845
  %3849 = vset.pattern.permute.xlu0 0
  %3850 = vperm.xlu0 %3849, %v3716
  %v3851 = vpop.permute.xlu0 %3850
  %3854 = vset.pattern.permute.xlu0 0
  %3855 = vperm.xlu0 %3854, %v3717
  %v3856 = vpop.permute.xlu0 %3855
  %3859 = vset.pattern.permute.xlu0 0
  %3860 = vperm.xlu0 %3859, %v3718
  %v3861 = vpop.permute.xlu0 %3860
  %3864 = vset.pattern.permute.xlu0 0
  %3865 = vperm.xlu0 %3864, %v3719
  %v3866 = vpop.permute.xlu0 %3865
  %3869 = vset.pattern.permute.xlu0 0
  %3870 = vperm.xlu0 %3869, %v3720
  %v3871 = vpop.permute.xlu0 %3870
  %3874 = vset.pattern.permute.xlu0 0
  %3875 = vperm.xlu0 %3874, %v3721
  %v3876 = vpop.permute.xlu0 %3875
  %3879 = vset.pattern.permute.xlu0 0
  %3880 = vperm.xlu0 %3879, %v3722
  %v3881 = vpop.permute.xlu0 %3880
  %3884 = vset.pattern.permute.xlu0 0
  %3885 = vperm.xlu0 %3884, %v3723
  %v3886 = vpop.permute.xlu0 %3885
  %3889 = vset.pattern.permute.xlu0 0
  %3890 = vperm.xlu0 %3889, %v3724
  %v3891 = vpop.permute.xlu0 %3890
  %3894 = vset.pattern.permute.xlu0 0
  %3895 = vperm.xlu0 %3894, %v3725
  %v3896 = vpop.permute.xlu0 %3895
  %3899 = vset.pattern.permute.xlu0 0
  %3900 = vperm.xlu0 %3899, %v3726
  %v3901 = vpop.permute.xlu0 %3900
  %3904 = vset.pattern.permute.xlu0 0
  %3905 = vperm.xlu0 %3904, %v3727
  %v3906 = vpop.permute.xlu0 %3905
  %3909 = vset.pattern.permute.xlu0 0
  %3910 = vperm.xlu0 %3909, %v3728
  %v3911 = vpop.permute.xlu0 %3910
  %3914 = vset.pattern.permute.xlu0 0
  %3915 = vperm.xlu0 %3914, %v3729
  %v3916 = vpop.permute.xlu0 %3915
  %3919 = vset.pattern.permute.xlu0 0
  %3920 = vperm.xlu0 %3919, %v3730
  %v3921 = vpop.permute.xlu0 %3920
  %3924 = vset.pattern.permute.xlu0 0
  %3925 = vperm.xlu0 %3924, %v3731
  %v3926 = vpop.permute.xlu0 %3925
  %3929 = vset.pattern.permute.xlu0 0
  %3930 = vperm.xlu0 %3929, %v3732
  %v3931 = vpop.permute.xlu0 %3930
  %3934 = vset.pattern.permute.xlu0 0
  %3935 = vperm.xlu0 %3934, %v3733
  %v3936 = vpop.permute.xlu0 %3935
  %3939 = vset.pattern.permute.xlu0 0
  %3940 = vperm.xlu0 %3939, %v3734
  %v3941 = vpop.permute.xlu0 %3940
  %3944 = vset.pattern.permute.xlu0 0
  %3945 = vperm.xlu0 %3944, %v3735
  %v3946 = vpop.permute.xlu0 %3945
  %3949 = vset.pattern.permute.xlu0 0
  %3950 = vperm.xlu0 %3949, %v3736
  %v3951 = vpop.permute.xlu0 %3950
  %3954 = vset.pattern.permute.xlu0 0
  %3955 = vperm.xlu0 %3954, %v3737
  %v3956 = vpop.permute.xlu0 %3955
  %3959 = vset.pattern.permute.xlu0 0
  %3960 = vperm.xlu0 %3959, %v3738
  %v3961 = vpop.permute.xlu0 %3960
  %3964 = vset.pattern.permute.xlu0 0
  %3965 = vperm.xlu0 %3964, %v3739
  %v3966 = vpop.permute.xlu0 %3965
  %3969 = vset.pattern.permute.xlu0 0
  %3970 = vperm.xlu0 %3969, %v3740
  %v3971 = vpop.permute.xlu0 %3970
  %3974 = vset.pattern.permute.xlu0 0
  %3975 = vperm.xlu0 %3974, %v3741
  %v3976 = vpop.permute.xlu0 %3975
  %3979 = vset.pattern.permute.xlu0 0
  %3980 = vperm.xlu0 %3979, %v3742
  %v3981 = vpop.permute.xlu0 %3980
  %3984 = vset.pattern.permute.xlu0 0
  %3985 = vperm.xlu0 %3984, %v3743
  %v3986 = vpop.permute.xlu0 %3985
  %3989 = vset.pattern.permute.xlu0 0
  %3990 = vperm.xlu0 %3989, %v3744
  %v3991 = vpop.permute.xlu0 %3990
  %3994 = vset.pattern.permute.xlu0 0
  %3995 = vperm.xlu0 %3994, %v3745
  %v3996 = vpop.permute.xlu0 %3995
  %3999 = vset.pattern.permute.xlu0 0
  %4000 = vperm.xlu0 %3999, %v3746
  %v4001 = vpop.permute.xlu0 %4000
  %4004 = vset.pattern.permute.xlu0 0
  %4005 = vperm.xlu0 %4004, %v3747
  %v4006 = vpop.permute.xlu0 %4005
  %4009 = vset.pattern.permute.xlu0 0
  %4010 = vperm.xlu0 %4009, %v3748
  %v4011 = vpop.permute.xlu0 %4010
  %4014 = vset.pattern.permute.xlu0 0
  %4015 = vperm.xlu0 %4014, %v3749
  %v4016 = vpop.permute.xlu0 %4015
  %4019 = vset.pattern.permute.xlu0 0
  %4020 = vperm.xlu0 %4019, %v3750
  %v4021 = vpop.permute.xlu0 %4020
  %4024 = vset.pattern.permute.xlu0 0
  %4025 = vperm.xlu0 %4024, %v3751
  %v4026 = vpop.permute.xlu0 %4025
  %4029 = vset.pattern.permute.xlu0 0
  %4030 = vperm.xlu0 %4029, %v3752
  %v4031 = vpop.permute.xlu0 %4030
  %4034 = vset.pattern.permute.xlu0 0
  %4035 = vperm.xlu0 %4034, %v3753
  %v4036 = vpop.permute.xlu0 %4035
  %4039 = vset.pattern.permute.xlu0 0
  %4040 = vperm.xlu0 %4039, %v3754
  %v4041 = vpop.permute.xlu0 %4040
  %4044 = vset.pattern.permute.xlu0 0
  %4045 = vperm.xlu0 %4044, %v3755
  %v4046 = vpop.permute.xlu0 %4045
  %4049 = vset.pattern.permute.xlu0 0
  %4050 = vperm.xlu0 %4049, %v3756
  %v4051 = vpop.permute.xlu0 %4050
  %4054 = vset.pattern.permute.xlu0 0
  %4055 = vperm.xlu0 %4054, %v3757
  %v4056 = vpop.permute.xlu0 %4055
  %4059 = vset.pattern.permute.xlu0 0
  %4060 = vperm.xlu0 %4059, %v3758
  %v4061 = vpop.permute.xlu0 %4060
  %4064 = vset.pattern.permute.xlu0 0
  %4065 = vperm.xlu0 %4064, %v3759
  %v4066 = vpop.permute.xlu0 %4065
  %4069 = vset.pattern.permute.xlu0 0
  %4070 = vperm.xlu0 %4069, %v3760
  %v4071 = vpop.permute.xlu0 %4070
  %4074 = vset.pattern.permute.xlu0 0
  %4075 = vperm.xlu0 %4074, %v3761
  %v4076 = vpop.permute.xlu0 %4075
  %4079 = vset.pattern.permute.xlu0 0
  %4080 = vperm.xlu0 %4079, %v3762
  %v4081 = vpop.permute.xlu0 %4080
  %4084 = vset.pattern.permute.xlu0 0
  %4085 = vperm.xlu0 %4084, %v3763
  %v4086 = vpop.permute.xlu0 %4085
  %4089 = vset.pattern.permute.xlu0 0
  %4090 = vperm.xlu0 %4089, %v3764
  %v4091 = vpop.permute.xlu0 %4090
  %4094 = vset.pattern.permute.xlu0 0
  %4095 = vperm.xlu0 %4094, %v3765
  %v4096 = vpop.permute.xlu0 %4095
  %4099 = vset.pattern.permute.xlu0 0
  %4100 = vperm.xlu0 %4099, %v3766
  %v4101 = vpop.permute.xlu0 %4100
  %4104 = vset.pattern.permute.xlu0 0
  %4105 = vperm.xlu0 %4104, %v3767
  %v4106 = vpop.permute.xlu0 %4105
  %4109 = vset.pattern.permute.xlu0 0
  %4110 = vperm.xlu0 %4109, %v3768
  %v4111 = vpop.permute.xlu0 %4110
  %4114 = vset.pattern.permute.xlu0 0
  %4115 = vperm.xlu0 %4114, %v3769
  %v4116 = vpop.permute.xlu0 %4115
  %4119 = vset.pattern.permute.xlu0 0
  %4120 = vperm.xlu0 %4119, %v3770
  %v4121 = vpop.permute.xlu0 %4120
  %4124 = vset.pattern.permute.xlu0 0
  %4125 = vperm.xlu0 %4124, %v3771
  %v4126 = vpop.permute.xlu0 %4125
  %4129 = vset.pattern.permute.xlu0 0
  %4130 = vperm.xlu0 %4129, %v3772
  %v4131 = vpop.permute.xlu0 %4130
  %4134 = vset.pattern.permute.xlu0 0
  %4135 = vperm.xlu0 %4134, %v3773
  %v4136 = vpop.permute.xlu0 %4135
  %4139 = vset.pattern.permute.xlu0 0
  %4140 = vperm.xlu0 %4139, %v3774
  %v4141 = vpop.permute.xlu0 %4140
  %4144 = vset.pattern.permute.xlu0 0
  %4145 = vperm.xlu0 %4144, %v3775
  %v4146 = vpop.permute.xlu0 %4145
  %4149 = vset.pattern.permute.xlu0 0
  %4150 = vperm.xlu0 %4149, %v3776
  %v4151 = vpop.permute.xlu0 %4150
  %4154 = vset.pattern.permute.xlu0 0
  %4155 = vperm.xlu0 %4154, %v3777
  %v4156 = vpop.permute.xlu0 %4155
  %4159 = vset.pattern.permute.xlu0 0
  %4160 = vperm.xlu0 %4159, %v3778
  %v4161 = vpop.permute.xlu0 %4160
  %4164 = vset.pattern.permute.xlu0 0
  %4165 = vperm.xlu0 %4164, %v3779
  %v4166 = vpop.permute.xlu0 %4165
  %4169 = vset.pattern.permute.xlu0 0
  %4170 = vperm.xlu0 %4169, %v3780
  %v4171 = vpop.permute.xlu0 %4170
  %4174 = vset.pattern.permute.xlu0 0
  %4175 = vperm.xlu0 %4174, %v3781
  %v4176 = vpop.permute.xlu0 %4175
  %4179 = vset.pattern.permute.xlu0 0
  %4180 = vperm.xlu0 %4179, %v3782
  %v4181 = vpop.permute.xlu0 %4180
  %4184 = vset.pattern.permute.xlu0 0
  %4185 = vperm.xlu0 %4184, %v3783
  %v4186 = vpop.permute.xlu0 %4185
  %4189 = vset.pattern.permute.xlu0 0
  %4190 = vperm.xlu0 %4189, %v3784
  %v4191 = vpop.permute.xlu0 %4190
  %4194 = vset.pattern.permute.xlu0 0
  %4195 = vperm.xlu0 %4194, %v3785
  %v4196 = vpop.permute.xlu0 %4195
  %4199 = vset.pattern.permute.xlu0 0
  %4200 = vperm.xlu0 %4199, %v3786
  %v4201 = vpop.permute.xlu0 %4200
  %4204 = vset.pattern.permute.xlu0 0
  %4205 = vperm.xlu0 %4204, %v3787
  %v4206 = vpop.permute.xlu0 %4205
  %4209 = vset.pattern.permute.xlu0 0
  %4210 = vperm.xlu0 %4209, %v3788
  %v4211 = vpop.permute.xlu0 %4210
  %4214 = vset.pattern.permute.xlu0 0
  %4215 = vperm.xlu0 %4214, %v3789
  %v4216 = vpop.permute.xlu0 %4215
  %4219 = vset.pattern.permute.xlu0 0
  %4220 = vperm.xlu0 %4219, %v3790
  %v4221 = vpop.permute.xlu0 %4220
  %4224 = vset.pattern.permute.xlu0 0
  %4225 = vperm.xlu0 %4224, %v3791
  %v4226 = vpop.permute.xlu0 %4225
  %4229 = vset.pattern.permute.xlu0 0
  %4230 = vperm.xlu0 %4229, %v3792
  %v4231 = vpop.permute.xlu0 %4230
  %4234 = vset.pattern.permute.xlu0 0
  %4235 = vperm.xlu0 %4234, %v3793
  %v4236 = vpop.permute.xlu0 %4235
  %4239 = vset.pattern.permute.xlu0 0
  %4240 = vperm.xlu0 %4239, %v3794
  %v4241 = vpop.permute.xlu0 %4240
  %4244 = vset.pattern.permute.xlu0 0
  %4245 = vperm.xlu0 %4244, %v3795
  %v4246 = vpop.permute.xlu0 %4245
  %4249 = vset.pattern.permute.xlu0 0
  %4250 = vperm.xlu0 %4249, %v3796
  %v4251 = vpop.permute.xlu0 %4250
  %4254 = vset.pattern.permute.xlu0 0
  %4255 = vperm.xlu0 %4254, %v3797
  %v4256 = vpop.permute.xlu0 %4255
  %4259 = vset.pattern.permute.xlu0 0
  %4260 = vperm.xlu0 %4259, %v3798
  %v4261 = vpop.permute.xlu0 %4260
  %4264 = vset.pattern.permute.xlu0 0
  %4265 = vperm.xlu0 %4264, %v3799
  %v4266 = vpop.permute.xlu0 %4265
  %4269 = vset.pattern.permute.xlu0 0
  %4270 = vperm.xlu0 %4269, %v3800
  %v4271 = vpop.permute.xlu0 %4270
  %4274 = vset.pattern.permute.xlu0 0
  %4275 = vperm.xlu0 %4274, %v3801
  %v4276 = vpop.permute.xlu0 %4275
  %4279 = vset.pattern.permute.xlu0 0
  %4280 = vperm.xlu0 %4279, %v3802
  %v4281 = vpop.permute.xlu0 %4280
  %v4283 = vmul.f32 %v3515, %v3806
  %v4284 = vmul.f32 %v3516, %v3806
  %v4285 = vmul.f32 %v3517, %v3811
  %v4286 = vmul.f32 %v3518, %v3811
  %v4287 = vmul.f32 %v3519, %v3816
  %v4288 = vmul.f32 %v3520, %v3816
  %v4289 = vmul.f32 %v3521, %v3821
  %v4290 = vmul.f32 %v3522, %v3821
  %v4291 = vmul.f32 %v3523, %v3826
  %v4292 = vmul.f32 %v3524, %v3826
  %v4293 = vmul.f32 %v3525, %v3831
  %v4294 = vmul.f32 %v3526, %v3831
  %v4295 = vmul.f32 %v3527, %v3836
  %v4296 = vmul.f32 %v3528, %v3836
  %v4297 = vmul.f32 %v3529, %v3841
  %v4298 = vmul.f32 %v3530, %v3841
  %v4299 = vmul.f32 %v3531, %v3846
  %v4300 = vmul.f32 %v3532, %v3846
  %v4301 = vmul.f32 %v3533, %v3851
  %v4302 = vmul.f32 %v3534, %v3851
  %v4303 = vmul.f32 %v3535, %v3856
  %v4304 = vmul.f32 %v3536, %v3856
  %v4305 = vmul.f32 %v3537, %v3861
  %v4306 = vmul.f32 %v3538, %v3861
  %v4307 = vmul.f32 %v3539, %v3866
  %v4308 = vmul.f32 %v3540, %v3866
  %v4309 = vmul.f32 %v3541, %v3871
  %v4310 = vmul.f32 %v3542, %v3871
  %v4311 = vmul.f32 %v3543, %v3876
  %v4312 = vmul.f32 %v3544, %v3876
  %v4313 = vmul.f32 %v3545, %v3881
  %v4314 = vmul.f32 %v3546, %v3881
  %v4315 = vmul.f32 %v3547, %v3886
  %v4316 = vmul.f32 %v3548, %v3886
  %v4317 = vmul.f32 %v3549, %v3891
  %v4318 = vmul.f32 %v3550, %v3891
  %v4319 = vmul.f32 %v3551, %v3896
  %v4320 = vmul.f32 %v3552, %v3896
  %v4321 = vmul.f32 %v3553, %v3901
  %v4322 = vmul.f32 %v3554, %v3901
  %v4323 = vmul.f32 %v3555, %v3906
  %v4324 = vmul.f32 %v3556, %v3906
  %v4325 = vmul.f32 %v3557, %v3911
  %v4326 = vmul.f32 %v3558, %v3911
  %v4327 = vmul.f32 %v3559, %v3916
  %v4328 = vmul.f32 %v3560, %v3916
  %v4329 = vmul.f32 %v3561, %v3921
  %v4330 = vmul.f32 %v3562, %v3921
  %v4331 = vmul.f32 %v3563, %v3926
  %v4332 = vmul.f32 %v3564, %v3926
  %v4333 = vmul.f32 %v3565, %v3931
  %v4334 = vmul.f32 %v3566, %v3931
  %v4335 = vmul.f32 %v3567, %v3936
  %v4336 = vmul.f32 %v3568, %v3936
  %v4337 = vmul.f32 %v3569, %v3941
  %v4338 = vmul.f32 %v3570, %v3941
  %v4339 = vmul.f32 %v3571, %v3946
  %v4340 = vmul.f32 %v3572, %v3946
  %v4341 = vmul.f32 %v3573, %v3951
  %v4342 = vmul.f32 %v3574, %v3951
  %v4343 = vmul.f32 %v3575, %v3956
  %v4344 = vmul.f32 %v3576, %v3956
  %v4345 = vmul.f32 %v3577, %v3961
  %v4346 = vmul.f32 %v3578, %v3961
  %v4347 = vmul.f32 %v3579, %v3966
  %v4348 = vmul.f32 %v3580, %v3966
  %v4349 = vmul.f32 %v3581, %v3971
  %v4350 = vmul.f32 %v3582, %v3971
  %v4351 = vmul.f32 %v3583, %v3976
  %v4352 = vmul.f32 %v3584, %v3976
  %v4353 = vmul.f32 %v3585, %v3981
  %v4354 = vmul.f32 %v3586, %v3981
  %v4355 = vmul.f32 %v3587, %v3986
  %v4356 = vmul.f32 %v3588, %v3986
  %v4357 = vmul.f32 %v3589, %v3991
  %v4358 = vmul.f32 %v3590, %v3991
  %v4359 = vmul.f32 %v3591, %v3996
  %v4360 = vmul.f32 %v3592, %v3996
  %v4361 = vmul.f32 %v3593, %v4001
  %v4362 = vmul.f32 %v3594, %v4001
  %v4363 = vmul.f32 %v3595, %v4006
  %v4364 = vmul.f32 %v3596, %v4006
  %v4365 = vmul.f32 %v3597, %v4011
  %v4366 = vmul.f32 %v3598, %v4011
  %v4367 = vmul.f32 %v3599, %v4016
  %v4368 = vmul.f32 %v3600, %v4016
  %v4369 = vmul.f32 %v3601, %v4021
  %v4370 = vmul.f32 %v3602, %v4021
  %v4371 = vmul.f32 %v3603, %v4026
  %v4372 = vmul.f32 %v3604, %v4026
  %v4373 = vmul.f32 %v3605, %v4031
  %v4374 = vmul.f32 %v3606, %v4031
  %v4375 = vmul.f32 %v3607, %v4036
  %v4376 = vmul.f32 %v3608, %v4036
  %v4377 = vmul.f32 %v3609, %v4041
  %v4378 = vmul.f32 %v3610, %v4041
  %v4379 = vmul.f32 %v3611, %v4046
  %v4380 = vmul.f32 %v3612, %v4046
  %v4381 = vmul.f32 %v3613, %v4051
  %v4382 = vmul.f32 %v3614, %v4051
  %v4383 = vmul.f32 %v3615, %v4056
  %v4384 = vmul.f32 %v3616, %v4056
  %v4385 = vmul.f32 %v3617, %v4061
  %v4386 = vmul.f32 %v3618, %v4061
  %v4387 = vmul.f32 %v3619, %v4066
  %v4388 = vmul.f32 %v3620, %v4066
  %v4389 = vmul.f32 %v3621, %v4071
  %v4390 = vmul.f32 %v3622, %v4071
  %v4391 = vmul.f32 %v3623, %v4076
  %v4392 = vmul.f32 %v3624, %v4076
  %v4393 = vmul.f32 %v3625, %v4081
  %v4394 = vmul.f32 %v3626, %v4081
  %v4395 = vmul.f32 %v3627, %v4086
  %v4396 = vmul.f32 %v3628, %v4086
  %v4397 = vmul.f32 %v3629, %v4091
  %v4398 = vmul.f32 %v3630, %v4091
  %v4399 = vmul.f32 %v3631, %v4096
  %v4400 = vmul.f32 %v3632, %v4096
  %v4401 = vmul.f32 %v3633, %v4101
  %v4402 = vmul.f32 %v3634, %v4101
  %v4403 = vmul.f32 %v3635, %v4106
  %v4404 = vmul.f32 %v3636, %v4106
  %v4405 = vmul.f32 %v3637, %v4111
  %v4406 = vmul.f32 %v3638, %v4111
  %v4407 = vmul.f32 %v3639, %v4116
  %v4408 = vmul.f32 %v3640, %v4116
  %v4409 = vmul.f32 %v3641, %v4121
  %v4410 = vmul.f32 %v3642, %v4121
  %v4411 = vmul.f32 %v3643, %v4126
  %v4412 = vmul.f32 %v3644, %v4126
  %v4413 = vmul.f32 %v3645, %v4131
  %v4414 = vmul.f32 %v3646, %v4131
  %v4415 = vmul.f32 %v3647, %v4136
  %v4416 = vmul.f32 %v3648, %v4136
  %v4417 = vmul.f32 %v3649, %v4141
  %v4418 = vmul.f32 %v3650, %v4141
  %v4419 = vmul.f32 %v3651, %v4146
  %v4420 = vmul.f32 %v3652, %v4146
  %v4421 = vmul.f32 %v3653, %v4151
  %v4422 = vmul.f32 %v3654, %v4151
  %v4423 = vmul.f32 %v3655, %v4156
  %v4424 = vmul.f32 %v3656, %v4156
  %v4425 = vmul.f32 %v3657, %v4161
  %v4426 = vmul.f32 %v3658, %v4161
  %v4427 = vmul.f32 %v3659, %v4166
  %v4428 = vmul.f32 %v3660, %v4166
  %v4429 = vmul.f32 %v3661, %v4171
  %v4430 = vmul.f32 %v3662, %v4171
  %v4431 = vmul.f32 %v3663, %v4176
  %v4432 = vmul.f32 %v3664, %v4176
  %v4433 = vmul.f32 %v3665, %v4181
  %v4434 = vmul.f32 %v3666, %v4181
  %v4435 = vmul.f32 %v3667, %v4186
  %v4436 = vmul.f32 %v3668, %v4186
  %v4437 = vmul.f32 %v3669, %v4191
  %v4438 = vmul.f32 %v3670, %v4191
  %v4439 = vmul.f32 %v3671, %v4196
  %v4440 = vmul.f32 %v3672, %v4196
  %v4441 = vmul.f32 %v3673, %v4201
  %v4442 = vmul.f32 %v3674, %v4201
  %v4443 = vmul.f32 %v3675, %v4206
  %v4444 = vmul.f32 %v3676, %v4206
  %v4445 = vmul.f32 %v3677, %v4211
  %v4446 = vmul.f32 %v3678, %v4211
  %v4447 = vmul.f32 %v3679, %v4216
  %v4448 = vmul.f32 %v3680, %v4216
  %v4449 = vmul.f32 %v3681, %v4221
  %v4450 = vmul.f32 %v3682, %v4221
  %v4451 = vmul.f32 %v3683, %v4226
  %v4452 = vmul.f32 %v3684, %v4226
  %v4453 = vmul.f32 %v3685, %v4231
  %v4454 = vmul.f32 %v3686, %v4231
  %v4455 = vmul.f32 %v3687, %v4236
  %v4456 = vmul.f32 %v3688, %v4236
  %v4457 = vmul.f32 %v3689, %v4241
  %v4458 = vmul.f32 %v3690, %v4241
  %v4459 = vmul.f32 %v3691, %v4246
  %v4460 = vmul.f32 %v3692, %v4246
  %v4461 = vmul.f32 %v3693, %v4251
  %v4462 = vmul.f32 %v3694, %v4251
  %v4463 = vmul.f32 %v3695, %v4256
  %v4464 = vmul.f32 %v3696, %v4256
  %v4465 = vmul.f32 %v3697, %v4261
  %v4466 = vmul.f32 %v3698, %v4261
  %v4467 = vmul.f32 %v3699, %v4266
  %v4468 = vmul.f32 %v3700, %v4266
  %v4469 = vmul.f32 %v3701, %v4271
  %v4470 = vmul.f32 %v3702, %v4271
  %v4471 = vmul.f32 %v3703, %v4276
  %v4472 = vmul.f32 %v3704, %v4276
  %v4473 = vmul.f32 %v3705, %v4281
  %v4474 = vmul.f32 %v3706, %v4281
  %v4475 = vld [vmem:[%s7] sm:$0xff]
  %v4476 = vld [vmem:[%s7 + $0x8] sm:$0xff]
  %v4477 = vld [vmem:[%s7 + $0x10] sm:$0xff]
  %v4478 = vld [vmem:[%s7 + $0x18] sm:$0xff]
  %v4479 = vld [vmem:[%s7 + $0x20] sm:$0xff]
  %v4480 = vld [vmem:[%s7 + $0x28] sm:$0xff]
  %v4481 = vld [vmem:[%s7 + $0x30] sm:$0xff]
  %v4482 = vld [vmem:[%s7 + $0x38] sm:$0xff]
  %v4483 = vld [vmem:[%s7 + $0x40] sm:$0xff]
  %v4484 = vld [vmem:[%s7 + $0x48] sm:$0xff]
  %v4485 = vld [vmem:[%s7 + $0x50] sm:$0xff]
  %v4486 = vld [vmem:[%s7 + $0x58] sm:$0xff]
  %v4487 = vld [vmem:[%s7 + $0x60] sm:$0xff]
  %v4488 = vld [vmem:[%s7 + $0x68] sm:$0xff]
  %v4489 = vld [vmem:[%s7 + $0x70] sm:$0xff]
  %v4490 = vld [vmem:[%s7 + $0x78] sm:$0xff]
  %v4491 = vld [vmem:[%s7 + $0x80] sm:$0xff]
  %v4492 = vld [vmem:[%s7 + $0x88] sm:$0xff]
  %v4493 = vld [vmem:[%s7 + $0x90] sm:$0xff]
  %v4494 = vld [vmem:[%s7 + $0x98] sm:$0xff]
  %v4495 = vld [vmem:[%s7 + $0xa0] sm:$0xff]
  %v4496 = vld [vmem:[%s7 + $0xa8] sm:$0xff]
  %v4497 = vld [vmem:[%s7 + $0xb0] sm:$0xff]
  %v4498 = vld [vmem:[%s7 + $0xb8] sm:$0xff]
  %v4499 = vld [vmem:[%s7 + $0xc0] sm:$0xff]
  %v4500 = vld [vmem:[%s7 + $0xc8] sm:$0xff]
  %v4501 = vld [vmem:[%s7 + $0xd0] sm:$0xff]
  %v4502 = vld [vmem:[%s7 + $0xd8] sm:$0xff]
  %v4503 = vld [vmem:[%s7 + $0xe0] sm:$0xff]
  %v4504 = vld [vmem:[%s7 + $0xe8] sm:$0xff]
  %v4505 = vld [vmem:[%s7 + $0xf0] sm:$0xff]
  %v4506 = vld [vmem:[%s7 + $0xf8] sm:$0xff]
  %v4507 = vld [vmem:[%s7 + $0x100] sm:$0xff]
  %v4508 = vld [vmem:[%s7 + $0x108] sm:$0xff]
  %v4509 = vld [vmem:[%s7 + $0x110] sm:$0xff]
  %v4510 = vld [vmem:[%s7 + $0x118] sm:$0xff]
  %v4511 = vld [vmem:[%s7 + $0x120] sm:$0xff]
  %v4512 = vld [vmem:[%s7 + $0x128] sm:$0xff]
  %v4513 = vld [vmem:[%s7 + $0x130] sm:$0xff]
  %v4514 = vld [vmem:[%s7 + $0x138] sm:$0xff]
  %v4515 = vld [vmem:[%s7 + $0x140] sm:$0xff]
  %v4516 = vld [vmem:[%s7 + $0x148] sm:$0xff]
  %v4517 = vld [vmem:[%s7 + $0x150] sm:$0xff]
  %v4518 = vld [vmem:[%s7 + $0x158] sm:$0xff]
  %v4519 = vld [vmem:[%s7 + $0x160] sm:$0xff]
  %v4520 = vld [vmem:[%s7 + $0x168] sm:$0xff]
  %v4521 = vld [vmem:[%s7 + $0x170] sm:$0xff]
  %v4522 = vld [vmem:[%s7 + $0x178] sm:$0xff]
  %v4523 = vld [vmem:[%s7 + $0x180] sm:$0xff]
  %v4524 = vld [vmem:[%s7 + $0x188] sm:$0xff]
  %v4525 = vld [vmem:[%s7 + $0x190] sm:$0xff]
  %v4526 = vld [vmem:[%s7 + $0x198] sm:$0xff]
  %v4527 = vld [vmem:[%s7 + $0x1a0] sm:$0xff]
  %v4528 = vld [vmem:[%s7 + $0x1a8] sm:$0xff]
  %v4529 = vld [vmem:[%s7 + $0x1b0] sm:$0xff]
  %v4530 = vld [vmem:[%s7 + $0x1b8] sm:$0xff]
  %v4531 = vld [vmem:[%s7 + $0x1c0] sm:$0xff]
  %v4532 = vld [vmem:[%s7 + $0x1c8] sm:$0xff]
  %v4533 = vld [vmem:[%s7 + $0x1d0] sm:$0xff]
  %v4534 = vld [vmem:[%s7 + $0x1d8] sm:$0xff]
  %v4535 = vld [vmem:[%s7 + $0x1e0] sm:$0xff]
  %v4536 = vld [vmem:[%s7 + $0x1e8] sm:$0xff]
  %v4537 = vld [vmem:[%s7 + $0x1f0] sm:$0xff]
  %v4538 = vld [vmem:[%s7 + $0x1f8] sm:$0xff]
  %v4539 = vld [vmem:[%s7 + $0x200] sm:$0xff]
  %v4540 = vld [vmem:[%s7 + $0x208] sm:$0xff]
  %v4541 = vld [vmem:[%s7 + $0x210] sm:$0xff]
  %v4542 = vld [vmem:[%s7 + $0x218] sm:$0xff]
  %v4543 = vld [vmem:[%s7 + $0x220] sm:$0xff]
  %v4544 = vld [vmem:[%s7 + $0x228] sm:$0xff]
  %v4545 = vld [vmem:[%s7 + $0x230] sm:$0xff]
  %v4546 = vld [vmem:[%s7 + $0x238] sm:$0xff]
  %v4547 = vld [vmem:[%s7 + $0x240] sm:$0xff]
  %v4548 = vld [vmem:[%s7 + $0x248] sm:$0xff]
  %v4549 = vld [vmem:[%s7 + $0x250] sm:$0xff]
  %v4550 = vld [vmem:[%s7 + $0x258] sm:$0xff]
  %v4551 = vld [vmem:[%s7 + $0x260] sm:$0xff]
  %v4552 = vld [vmem:[%s7 + $0x268] sm:$0xff]
  %v4553 = vld [vmem:[%s7 + $0x270] sm:$0xff]
  %v4554 = vld [vmem:[%s7 + $0x278] sm:$0xff]
  %v4555 = vld [vmem:[%s7 + $0x280] sm:$0xff]
  %v4556 = vld [vmem:[%s7 + $0x288] sm:$0xff]
  %v4557 = vld [vmem:[%s7 + $0x290] sm:$0xff]
  %v4558 = vld [vmem:[%s7 + $0x298] sm:$0xff]
  %v4559 = vld [vmem:[%s7 + $0x2a0] sm:$0xff]
  %v4560 = vld [vmem:[%s7 + $0x2a8] sm:$0xff]
  %v4561 = vld [vmem:[%s7 + $0x2b0] sm:$0xff]
  %v4562 = vld [vmem:[%s7 + $0x2b8] sm:$0xff]
  %v4563 = vld [vmem:[%s7 + $0x2c0] sm:$0xff]
  %v4564 = vld [vmem:[%s7 + $0x2c8] sm:$0xff]
  %v4565 = vld [vmem:[%s7 + $0x2d0] sm:$0xff]
  %v4566 = vld [vmem:[%s7 + $0x2d8] sm:$0xff]
  %v4567 = vld [vmem:[%s7 + $0x2e0] sm:$0xff]
  %v4568 = vld [vmem:[%s7 + $0x2e8] sm:$0xff]
  %v4569 = vld [vmem:[%s7 + $0x2f0] sm:$0xff]
  %v4570 = vld [vmem:[%s7 + $0x2f8] sm:$0xff]
  %4572 = vset.pattern.permute.xlu0 0
  %4573 = vperm.xlu0 %4572, %v4475
  %v4574 = vpop.permute.xlu0 %4573
  %4577 = vset.pattern.permute.xlu0 0
  %4578 = vperm.xlu0 %4577, %v4476
  %v4579 = vpop.permute.xlu0 %4578
  %4582 = vset.pattern.permute.xlu0 0
  %4583 = vperm.xlu0 %4582, %v4477
  %v4584 = vpop.permute.xlu0 %4583
  %4587 = vset.pattern.permute.xlu0 0
  %4588 = vperm.xlu0 %4587, %v4478
  %v4589 = vpop.permute.xlu0 %4588
  %4592 = vset.pattern.permute.xlu0 0
  %4593 = vperm.xlu0 %4592, %v4479
  %v4594 = vpop.permute.xlu0 %4593
  %4597 = vset.pattern.permute.xlu0 0
  %4598 = vperm.xlu0 %4597, %v4480
  %v4599 = vpop.permute.xlu0 %4598
  %4602 = vset.pattern.permute.xlu0 0
  %4603 = vperm.xlu0 %4602, %v4481
  %v4604 = vpop.permute.xlu0 %4603
  %4607 = vset.pattern.permute.xlu0 0
  %4608 = vperm.xlu0 %4607, %v4482
  %v4609 = vpop.permute.xlu0 %4608
  %4612 = vset.pattern.permute.xlu0 0
  %4613 = vperm.xlu0 %4612, %v4483
  %v4614 = vpop.permute.xlu0 %4613
  %4617 = vset.pattern.permute.xlu0 0
  %4618 = vperm.xlu0 %4617, %v4484
  %v4619 = vpop.permute.xlu0 %4618
  %4622 = vset.pattern.permute.xlu0 0
  %4623 = vperm.xlu0 %4622, %v4485
  %v4624 = vpop.permute.xlu0 %4623
  %4627 = vset.pattern.permute.xlu0 0
  %4628 = vperm.xlu0 %4627, %v4486
  %v4629 = vpop.permute.xlu0 %4628
  %4632 = vset.pattern.permute.xlu0 0
  %4633 = vperm.xlu0 %4632, %v4487
  %v4634 = vpop.permute.xlu0 %4633
  %4637 = vset.pattern.permute.xlu0 0
  %4638 = vperm.xlu0 %4637, %v4488
  %v4639 = vpop.permute.xlu0 %4638
  %4642 = vset.pattern.permute.xlu0 0
  %4643 = vperm.xlu0 %4642, %v4489
  %v4644 = vpop.permute.xlu0 %4643
  %4647 = vset.pattern.permute.xlu0 0
  %4648 = vperm.xlu0 %4647, %v4490
  %v4649 = vpop.permute.xlu0 %4648
  %4652 = vset.pattern.permute.xlu0 0
  %4653 = vperm.xlu0 %4652, %v4491
  %v4654 = vpop.permute.xlu0 %4653
  %4657 = vset.pattern.permute.xlu0 0
  %4658 = vperm.xlu0 %4657, %v4492
  %v4659 = vpop.permute.xlu0 %4658
  %4662 = vset.pattern.permute.xlu0 0
  %4663 = vperm.xlu0 %4662, %v4493
  %v4664 = vpop.permute.xlu0 %4663
  %4667 = vset.pattern.permute.xlu0 0
  %4668 = vperm.xlu0 %4667, %v4494
  %v4669 = vpop.permute.xlu0 %4668
  %4672 = vset.pattern.permute.xlu0 0
  %4673 = vperm.xlu0 %4672, %v4495
  %v4674 = vpop.permute.xlu0 %4673
  %4677 = vset.pattern.permute.xlu0 0
  %4678 = vperm.xlu0 %4677, %v4496
  %v4679 = vpop.permute.xlu0 %4678
  %4682 = vset.pattern.permute.xlu0 0
  %4683 = vperm.xlu0 %4682, %v4497
  %v4684 = vpop.permute.xlu0 %4683
  %4687 = vset.pattern.permute.xlu0 0
  %4688 = vperm.xlu0 %4687, %v4498
  %v4689 = vpop.permute.xlu0 %4688
  %4692 = vset.pattern.permute.xlu0 0
  %4693 = vperm.xlu0 %4692, %v4499
  %v4694 = vpop.permute.xlu0 %4693
  %4697 = vset.pattern.permute.xlu0 0
  %4698 = vperm.xlu0 %4697, %v4500
  %v4699 = vpop.permute.xlu0 %4698
  %4702 = vset.pattern.permute.xlu0 0
  %4703 = vperm.xlu0 %4702, %v4501
  %v4704 = vpop.permute.xlu0 %4703
  %4707 = vset.pattern.permute.xlu0 0
  %4708 = vperm.xlu0 %4707, %v4502
  %v4709 = vpop.permute.xlu0 %4708
  %4712 = vset.pattern.permute.xlu0 0
  %4713 = vperm.xlu0 %4712, %v4503
  %v4714 = vpop.permute.xlu0 %4713
  %4717 = vset.pattern.permute.xlu0 0
  %4718 = vperm.xlu0 %4717, %v4504
  %v4719 = vpop.permute.xlu0 %4718
  %4722 = vset.pattern.permute.xlu0 0
  %4723 = vperm.xlu0 %4722, %v4505
  %v4724 = vpop.permute.xlu0 %4723
  %4727 = vset.pattern.permute.xlu0 0
  %4728 = vperm.xlu0 %4727, %v4506
  %v4729 = vpop.permute.xlu0 %4728
  %4732 = vset.pattern.permute.xlu0 0
  %4733 = vperm.xlu0 %4732, %v4507
  %v4734 = vpop.permute.xlu0 %4733
  %4737 = vset.pattern.permute.xlu0 0
  %4738 = vperm.xlu0 %4737, %v4508
  %v4739 = vpop.permute.xlu0 %4738
  %4742 = vset.pattern.permute.xlu0 0
  %4743 = vperm.xlu0 %4742, %v4509
  %v4744 = vpop.permute.xlu0 %4743
  %4747 = vset.pattern.permute.xlu0 0
  %4748 = vperm.xlu0 %4747, %v4510
  %v4749 = vpop.permute.xlu0 %4748
  %4752 = vset.pattern.permute.xlu0 0
  %4753 = vperm.xlu0 %4752, %v4511
  %v4754 = vpop.permute.xlu0 %4753
  %4757 = vset.pattern.permute.xlu0 0
  %4758 = vperm.xlu0 %4757, %v4512
  %v4759 = vpop.permute.xlu0 %4758
  %4762 = vset.pattern.permute.xlu0 0
  %4763 = vperm.xlu0 %4762, %v4513
  %v4764 = vpop.permute.xlu0 %4763
  %4767 = vset.pattern.permute.xlu0 0
  %4768 = vperm.xlu0 %4767, %v4514
  %v4769 = vpop.permute.xlu0 %4768
  %4772 = vset.pattern.permute.xlu0 0
  %4773 = vperm.xlu0 %4772, %v4515
  %v4774 = vpop.permute.xlu0 %4773
  %4777 = vset.pattern.permute.xlu0 0
  %4778 = vperm.xlu0 %4777, %v4516
  %v4779 = vpop.permute.xlu0 %4778
  %4782 = vset.pattern.permute.xlu0 0
  %4783 = vperm.xlu0 %4782, %v4517
  %v4784 = vpop.permute.xlu0 %4783
  %4787 = vset.pattern.permute.xlu0 0
  %4788 = vperm.xlu0 %4787, %v4518
  %v4789 = vpop.permute.xlu0 %4788
  %4792 = vset.pattern.permute.xlu0 0
  %4793 = vperm.xlu0 %4792, %v4519
  %v4794 = vpop.permute.xlu0 %4793
  %4797 = vset.pattern.permute.xlu0 0
  %4798 = vperm.xlu0 %4797, %v4520
  %v4799 = vpop.permute.xlu0 %4798
  %4802 = vset.pattern.permute.xlu0 0
  %4803 = vperm.xlu0 %4802, %v4521
  %v4804 = vpop.permute.xlu0 %4803
  %4807 = vset.pattern.permute.xlu0 0
  %4808 = vperm.xlu0 %4807, %v4522
  %v4809 = vpop.permute.xlu0 %4808
  %4812 = vset.pattern.permute.xlu0 0
  %4813 = vperm.xlu0 %4812, %v4523
  %v4814 = vpop.permute.xlu0 %4813
  %4817 = vset.pattern.permute.xlu0 0
  %4818 = vperm.xlu0 %4817, %v4524
  %v4819 = vpop.permute.xlu0 %4818
  %4822 = vset.pattern.permute.xlu0 0
  %4823 = vperm.xlu0 %4822, %v4525
  %v4824 = vpop.permute.xlu0 %4823
  %4827 = vset.pattern.permute.xlu0 0
  %4828 = vperm.xlu0 %4827, %v4526
  %v4829 = vpop.permute.xlu0 %4828
  %4832 = vset.pattern.permute.xlu0 0
  %4833 = vperm.xlu0 %4832, %v4527
  %v4834 = vpop.permute.xlu0 %4833
  %4837 = vset.pattern.permute.xlu0 0
  %4838 = vperm.xlu0 %4837, %v4528
  %v4839 = vpop.permute.xlu0 %4838
  %4842 = vset.pattern.permute.xlu0 0
  %4843 = vperm.xlu0 %4842, %v4529
  %v4844 = vpop.permute.xlu0 %4843
  %4847 = vset.pattern.permute.xlu0 0
  %4848 = vperm.xlu0 %4847, %v4530
  %v4849 = vpop.permute.xlu0 %4848
  %4852 = vset.pattern.permute.xlu0 0
  %4853 = vperm.xlu0 %4852, %v4531
  %v4854 = vpop.permute.xlu0 %4853
  %4857 = vset.pattern.permute.xlu0 0
  %4858 = vperm.xlu0 %4857, %v4532
  %v4859 = vpop.permute.xlu0 %4858
  %4862 = vset.pattern.permute.xlu0 0
  %4863 = vperm.xlu0 %4862, %v4533
  %v4864 = vpop.permute.xlu0 %4863
  %4867 = vset.pattern.permute.xlu0 0
  %4868 = vperm.xlu0 %4867, %v4534
  %v4869 = vpop.permute.xlu0 %4868
  %4872 = vset.pattern.permute.xlu0 0
  %4873 = vperm.xlu0 %4872, %v4535
  %v4874 = vpop.permute.xlu0 %4873
  %4877 = vset.pattern.permute.xlu0 0
  %4878 = vperm.xlu0 %4877, %v4536
  %v4879 = vpop.permute.xlu0 %4878
  %4882 = vset.pattern.permute.xlu0 0
  %4883 = vperm.xlu0 %4882, %v4537
  %v4884 = vpop.permute.xlu0 %4883
  %4887 = vset.pattern.permute.xlu0 0
  %4888 = vperm.xlu0 %4887, %v4538
  %v4889 = vpop.permute.xlu0 %4888
  %4892 = vset.pattern.permute.xlu0 0
  %4893 = vperm.xlu0 %4892, %v4539
  %v4894 = vpop.permute.xlu0 %4893
  %4897 = vset.pattern.permute.xlu0 0
  %4898 = vperm.xlu0 %4897, %v4540
  %v4899 = vpop.permute.xlu0 %4898
  %4902 = vset.pattern.permute.xlu0 0
  %4903 = vperm.xlu0 %4902, %v4541
  %v4904 = vpop.permute.xlu0 %4903
  %4907 = vset.pattern.permute.xlu0 0
  %4908 = vperm.xlu0 %4907, %v4542
  %v4909 = vpop.permute.xlu0 %4908
  %4912 = vset.pattern.permute.xlu0 0
  %4913 = vperm.xlu0 %4912, %v4543
  %v4914 = vpop.permute.xlu0 %4913
  %4917 = vset.pattern.permute.xlu0 0
  %4918 = vperm.xlu0 %4917, %v4544
  %v4919 = vpop.permute.xlu0 %4918
  %4922 = vset.pattern.permute.xlu0 0
  %4923 = vperm.xlu0 %4922, %v4545
  %v4924 = vpop.permute.xlu0 %4923
  %4927 = vset.pattern.permute.xlu0 0
  %4928 = vperm.xlu0 %4927, %v4546
  %v4929 = vpop.permute.xlu0 %4928
  %4932 = vset.pattern.permute.xlu0 0
  %4933 = vperm.xlu0 %4932, %v4547
  %v4934 = vpop.permute.xlu0 %4933
  %4937 = vset.pattern.permute.xlu0 0
  %4938 = vperm.xlu0 %4937, %v4548
  %v4939 = vpop.permute.xlu0 %4938
  %4942 = vset.pattern.permute.xlu0 0
  %4943 = vperm.xlu0 %4942, %v4549
  %v4944 = vpop.permute.xlu0 %4943
  %4947 = vset.pattern.permute.xlu0 0
  %4948 = vperm.xlu0 %4947, %v4550
  %v4949 = vpop.permute.xlu0 %4948
  %4952 = vset.pattern.permute.xlu0 0
  %4953 = vperm.xlu0 %4952, %v4551
  %v4954 = vpop.permute.xlu0 %4953
  %4957 = vset.pattern.permute.xlu0 0
  %4958 = vperm.xlu0 %4957, %v4552
  %v4959 = vpop.permute.xlu0 %4958
  %4962 = vset.pattern.permute.xlu0 0
  %4963 = vperm.xlu0 %4962, %v4553
  %v4964 = vpop.permute.xlu0 %4963
  %4967 = vset.pattern.permute.xlu0 0
  %4968 = vperm.xlu0 %4967, %v4554
  %v4969 = vpop.permute.xlu0 %4968
  %4972 = vset.pattern.permute.xlu0 0
  %4973 = vperm.xlu0 %4972, %v4555
  %v4974 = vpop.permute.xlu0 %4973
  %4977 = vset.pattern.permute.xlu0 0
  %4978 = vperm.xlu0 %4977, %v4556
  %v4979 = vpop.permute.xlu0 %4978
  %4982 = vset.pattern.permute.xlu0 0
  %4983 = vperm.xlu0 %4982, %v4557
  %v4984 = vpop.permute.xlu0 %4983
  %4987 = vset.pattern.permute.xlu0 0
  %4988 = vperm.xlu0 %4987, %v4558
  %v4989 = vpop.permute.xlu0 %4988
  %4992 = vset.pattern.permute.xlu0 0
  %4993 = vperm.xlu0 %4992, %v4559
  %v4994 = vpop.permute.xlu0 %4993
  %4997 = vset.pattern.permute.xlu0 0
  %4998 = vperm.xlu0 %4997, %v4560
  %v4999 = vpop.permute.xlu0 %4998
  %5002 = vset.pattern.permute.xlu0 0
  %5003 = vperm.xlu0 %5002, %v4561
  %v5004 = vpop.permute.xlu0 %5003
  %5007 = vset.pattern.permute.xlu0 0
  %5008 = vperm.xlu0 %5007, %v4562
  %v5009 = vpop.permute.xlu0 %5008
  %5012 = vset.pattern.permute.xlu0 0
  %5013 = vperm.xlu0 %5012, %v4563
  %v5014 = vpop.permute.xlu0 %5013
  %5017 = vset.pattern.permute.xlu0 0
  %5018 = vperm.xlu0 %5017, %v4564
  %v5019 = vpop.permute.xlu0 %5018
  %5022 = vset.pattern.permute.xlu0 0
  %5023 = vperm.xlu0 %5022, %v4565
  %v5024 = vpop.permute.xlu0 %5023
  %5027 = vset.pattern.permute.xlu0 0
  %5028 = vperm.xlu0 %5027, %v4566
  %v5029 = vpop.permute.xlu0 %5028
  %5032 = vset.pattern.permute.xlu0 0
  %5033 = vperm.xlu0 %5032, %v4567
  %v5034 = vpop.permute.xlu0 %5033
  %5037 = vset.pattern.permute.xlu0 0
  %5038 = vperm.xlu0 %5037, %v4568
  %v5039 = vpop.permute.xlu0 %5038
  %5042 = vset.pattern.permute.xlu0 0
  %5043 = vperm.xlu0 %5042, %v4569
  %v5044 = vpop.permute.xlu0 %5043
  %5047 = vset.pattern.permute.xlu0 0
  %5048 = vperm.xlu0 %5047, %v4570
  %v5049 = vpop.permute.xlu0 %5048
  %v5051 = vadd.f32 %v4283, %v4574
  %v5052 = vadd.f32 %v4284, %v4574
  %v5053 = vadd.f32 %v4285, %v4579
  %v5054 = vadd.f32 %v4286, %v4579
  %v5055 = vadd.f32 %v4287, %v4584
  %v5056 = vadd.f32 %v4288, %v4584
  %v5057 = vadd.f32 %v4289, %v4589
  %v5058 = vadd.f32 %v4290, %v4589
  %v5059 = vadd.f32 %v4291, %v4594
  %v5060 = vadd.f32 %v4292, %v4594
  %v5061 = vadd.f32 %v4293, %v4599
  %v5062 = vadd.f32 %v4294, %v4599
  %v5063 = vadd.f32 %v4295, %v4604
  %v5064 = vadd.f32 %v4296, %v4604
  %v5065 = vadd.f32 %v4297, %v4609
  %v5066 = vadd.f32 %v4298, %v4609
  %v5067 = vadd.f32 %v4299, %v4614
  %v5068 = vadd.f32 %v4300, %v4614
  %v5069 = vadd.f32 %v4301, %v4619
  %v5070 = vadd.f32 %v4302, %v4619
  %v5071 = vadd.f32 %v4303, %v4624
  %v5072 = vadd.f32 %v4304, %v4624
  %v5073 = vadd.f32 %v4305, %v4629
  %v5074 = vadd.f32 %v4306, %v4629
  %v5075 = vadd.f32 %v4307, %v4634
  %v5076 = vadd.f32 %v4308, %v4634
  %v5077 = vadd.f32 %v4309, %v4639
  %v5078 = vadd.f32 %v4310, %v4639
  %v5079 = vadd.f32 %v4311, %v4644
  %v5080 = vadd.f32 %v4312, %v4644
  %v5081 = vadd.f32 %v4313, %v4649
  %v5082 = vadd.f32 %v4314, %v4649
  %v5083 = vadd.f32 %v4315, %v4654
  %v5084 = vadd.f32 %v4316, %v4654
  %v5085 = vadd.f32 %v4317, %v4659
  %v5086 = vadd.f32 %v4318, %v4659
  %v5087 = vadd.f32 %v4319, %v4664
  %v5088 = vadd.f32 %v4320, %v4664
  %v5089 = vadd.f32 %v4321, %v4669
  %v5090 = vadd.f32 %v4322, %v4669
  %v5091 = vadd.f32 %v4323, %v4674
  %v5092 = vadd.f32 %v4324, %v4674
  %v5093 = vadd.f32 %v4325, %v4679
  %v5094 = vadd.f32 %v4326, %v4679
  %v5095 = vadd.f32 %v4327, %v4684
  %v5096 = vadd.f32 %v4328, %v4684
  %v5097 = vadd.f32 %v4329, %v4689
  %v5098 = vadd.f32 %v4330, %v4689
  %v5099 = vadd.f32 %v4331, %v4694
  %v5100 = vadd.f32 %v4332, %v4694
  %v5101 = vadd.f32 %v4333, %v4699
  %v5102 = vadd.f32 %v4334, %v4699
  %v5103 = vadd.f32 %v4335, %v4704
  %v5104 = vadd.f32 %v4336, %v4704
  %v5105 = vadd.f32 %v4337, %v4709
  %v5106 = vadd.f32 %v4338, %v4709
  %v5107 = vadd.f32 %v4339, %v4714
  %v5108 = vadd.f32 %v4340, %v4714
  %v5109 = vadd.f32 %v4341, %v4719
  %v5110 = vadd.f32 %v4342, %v4719
  %v5111 = vadd.f32 %v4343, %v4724
  %v5112 = vadd.f32 %v4344, %v4724
  %v5113 = vadd.f32 %v4345, %v4729
  %v5114 = vadd.f32 %v4346, %v4729
  %v5115 = vadd.f32 %v4347, %v4734
  %v5116 = vadd.f32 %v4348, %v4734
  %v5117 = vadd.f32 %v4349, %v4739
  %v5118 = vadd.f32 %v4350, %v4739
  %v5119 = vadd.f32 %v4351, %v4744
  %v5120 = vadd.f32 %v4352, %v4744
  %v5121 = vadd.f32 %v4353, %v4749
  %v5122 = vadd.f32 %v4354, %v4749
  %v5123 = vadd.f32 %v4355, %v4754
  %v5124 = vadd.f32 %v4356, %v4754
  %v5125 = vadd.f32 %v4357, %v4759
  %v5126 = vadd.f32 %v4358, %v4759
  %v5127 = vadd.f32 %v4359, %v4764
  %v5128 = vadd.f32 %v4360, %v4764
  %v5129 = vadd.f32 %v4361, %v4769
  %v5130 = vadd.f32 %v4362, %v4769
  %v5131 = vadd.f32 %v4363, %v4774
  %v5132 = vadd.f32 %v4364, %v4774
  %v5133 = vadd.f32 %v4365, %v4779
  %v5134 = vadd.f32 %v4366, %v4779
  %v5135 = vadd.f32 %v4367, %v4784
  %v5136 = vadd.f32 %v4368, %v4784
  %v5137 = vadd.f32 %v4369, %v4789
  %v5138 = vadd.f32 %v4370, %v4789
  %v5139 = vadd.f32 %v4371, %v4794
  %v5140 = vadd.f32 %v4372, %v4794
  %v5141 = vadd.f32 %v4373, %v4799
  %v5142 = vadd.f32 %v4374, %v4799
  %v5143 = vadd.f32 %v4375, %v4804
  %v5144 = vadd.f32 %v4376, %v4804
  %v5145 = vadd.f32 %v4377, %v4809
  %v5146 = vadd.f32 %v4378, %v4809
  %v5147 = vadd.f32 %v4379, %v4814
  %v5148 = vadd.f32 %v4380, %v4814
  %v5149 = vadd.f32 %v4381, %v4819
  %v5150 = vadd.f32 %v4382, %v4819
  %v5151 = vadd.f32 %v4383, %v4824
  %v5152 = vadd.f32 %v4384, %v4824
  %v5153 = vadd.f32 %v4385, %v4829
  %v5154 = vadd.f32 %v4386, %v4829
  %v5155 = vadd.f32 %v4387, %v4834
  %v5156 = vadd.f32 %v4388, %v4834
  %v5157 = vadd.f32 %v4389, %v4839
  %v5158 = vadd.f32 %v4390, %v4839
  %v5159 = vadd.f32 %v4391, %v4844
  %v5160 = vadd.f32 %v4392, %v4844
  %v5161 = vadd.f32 %v4393, %v4849
  %v5162 = vadd.f32 %v4394, %v4849
  %v5163 = vadd.f32 %v4395, %v4854
  %v5164 = vadd.f32 %v4396, %v4854
  %v5165 = vadd.f32 %v4397, %v4859
  %v5166 = vadd.f32 %v4398, %v4859
  %v5167 = vadd.f32 %v4399, %v4864
  %v5168 = vadd.f32 %v4400, %v4864
  %v5169 = vadd.f32 %v4401, %v4869
  %v5170 = vadd.f32 %v4402, %v4869
  %v5171 = vadd.f32 %v4403, %v4874
  %v5172 = vadd.f32 %v4404, %v4874
  %v5173 = vadd.f32 %v4405, %v4879
  %v5174 = vadd.f32 %v4406, %v4879
  %v5175 = vadd.f32 %v4407, %v4884
  %v5176 = vadd.f32 %v4408, %v4884
  %v5177 = vadd.f32 %v4409, %v4889
  %v5178 = vadd.f32 %v4410, %v4889
  %v5179 = vadd.f32 %v4411, %v4894
  %v5180 = vadd.f32 %v4412, %v4894
  %v5181 = vadd.f32 %v4413, %v4899
  %v5182 = vadd.f32 %v4414, %v4899
  %v5183 = vadd.f32 %v4415, %v4904
  %v5184 = vadd.f32 %v4416, %v4904
  %v5185 = vadd.f32 %v4417, %v4909
  %v5186 = vadd.f32 %v4418, %v4909
  %v5187 = vadd.f32 %v4419, %v4914
  %v5188 = vadd.f32 %v4420, %v4914
  %v5189 = vadd.f32 %v4421, %v4919
  %v5190 = vadd.f32 %v4422, %v4919
  %v5191 = vadd.f32 %v4423, %v4924
  %v5192 = vadd.f32 %v4424, %v4924
  %v5193 = vadd.f32 %v4425, %v4929
  %v5194 = vadd.f32 %v4426, %v4929
  %v5195 = vadd.f32 %v4427, %v4934
  %v5196 = vadd.f32 %v4428, %v4934
  %v5197 = vadd.f32 %v4429, %v4939
  %v5198 = vadd.f32 %v4430, %v4939
  %v5199 = vadd.f32 %v4431, %v4944
  %v5200 = vadd.f32 %v4432, %v4944
  %v5201 = vadd.f32 %v4433, %v4949
  %v5202 = vadd.f32 %v4434, %v4949
  %v5203 = vadd.f32 %v4435, %v4954
  %v5204 = vadd.f32 %v4436, %v4954
  %v5205 = vadd.f32 %v4437, %v4959
  %v5206 = vadd.f32 %v4438, %v4959
  %v5207 = vadd.f32 %v4439, %v4964
  %v5208 = vadd.f32 %v4440, %v4964
  %v5209 = vadd.f32 %v4441, %v4969
  %v5210 = vadd.f32 %v4442, %v4969
  %v5211 = vadd.f32 %v4443, %v4974
  %v5212 = vadd.f32 %v4444, %v4974
  %v5213 = vadd.f32 %v4445, %v4979
  %v5214 = vadd.f32 %v4446, %v4979
  %v5215 = vadd.f32 %v4447, %v4984
  %v5216 = vadd.f32 %v4448, %v4984
  %v5217 = vadd.f32 %v4449, %v4989
  %v5218 = vadd.f32 %v4450, %v4989
  %v5219 = vadd.f32 %v4451, %v4994
  %v5220 = vadd.f32 %v4452, %v4994
  %v5221 = vadd.f32 %v4453, %v4999
  %v5222 = vadd.f32 %v4454, %v4999
  %v5223 = vadd.f32 %v4455, %v5004
  %v5224 = vadd.f32 %v4456, %v5004
  %v5225 = vadd.f32 %v4457, %v5009
  %v5226 = vadd.f32 %v4458, %v5009
  %v5227 = vadd.f32 %v4459, %v5014
  %v5228 = vadd.f32 %v4460, %v5014
  %v5229 = vadd.f32 %v4461, %v5019
  %v5230 = vadd.f32 %v4462, %v5019
  %v5231 = vadd.f32 %v4463, %v5024
  %v5232 = vadd.f32 %v4464, %v5024
  %v5233 = vadd.f32 %v4465, %v5029
  %v5234 = vadd.f32 %v4466, %v5029
  %v5235 = vadd.f32 %v4467, %v5034
  %v5236 = vadd.f32 %v4468, %v5034
  %v5237 = vadd.f32 %v4469, %v5039
  %v5238 = vadd.f32 %v4470, %v5039
  %v5239 = vadd.f32 %v4471, %v5044
  %v5240 = vadd.f32 %v4472, %v5044
  %v5241 = vadd.f32 %v4473, %v5049
  %v5242 = vadd.f32 %v4474, %v5049
  %5243 = vst [vmem:[%s8] sm:$0xff] %v5051
  %5244 = vst.msk [vmem:[%s8 + $0x8] sm:$0xff] %vm537, %v5052
  %5245 = vst [vmem:[%s8 + $0x10] sm:$0xff] %v5053
  %5246 = vst.msk [vmem:[%s8 + $0x18] sm:$0xff] %vm537, %v5054
  %5247 = vst [vmem:[%s8 + $0x20] sm:$0xff] %v5055
  %5248 = vst.msk [vmem:[%s8 + $0x28] sm:$0xff] %vm537, %v5056
  %5249 = vst [vmem:[%s8 + $0x30] sm:$0xff] %v5057
  %5250 = vst.msk [vmem:[%s8 + $0x38] sm:$0xff] %vm537, %v5058
  %5251 = vst [vmem:[%s8 + $0x40] sm:$0xff] %v5059
  %5252 = vst.msk [vmem:[%s8 + $0x48] sm:$0xff] %vm537, %v5060
  %5253 = vst [vmem:[%s8 + $0x50] sm:$0xff] %v5061
  %5254 = vst.msk [vmem:[%s8 + $0x58] sm:$0xff] %vm537, %v5062
  %5255 = vst [vmem:[%s8 + $0x60] sm:$0xff] %v5063
  %5256 = vst.msk [vmem:[%s8 + $0x68] sm:$0xff] %vm537, %v5064
  %5257 = vst [vmem:[%s8 + $0x70] sm:$0xff] %v5065
  %5258 = vst.msk [vmem:[%s8 + $0x78] sm:$0xff] %vm537, %v5066
  %5259 = vst [vmem:[%s8 + $0x80] sm:$0xff] %v5067
  %5260 = vst.msk [vmem:[%s8 + $0x88] sm:$0xff] %vm537, %v5068
  %5261 = vst [vmem:[%s8 + $0x90] sm:$0xff] %v5069
  %5262 = vst.msk [vmem:[%s8 + $0x98] sm:$0xff] %vm537, %v5070
  %5263 = vst [vmem:[%s8 + $0xa0] sm:$0xff] %v5071
  %5264 = vst.msk [vmem:[%s8 + $0xa8] sm:$0xff] %vm537, %v5072
  %5265 = vst [vmem:[%s8 + $0xb0] sm:$0xff] %v5073
  %5266 = vst.msk [vmem:[%s8 + $0xb8] sm:$0xff] %vm537, %v5074
  %5267 = vst [vmem:[%s8 + $0xc0] sm:$0xff] %v5075
  %5268 = vst.msk [vmem:[%s8 + $0xc8] sm:$0xff] %vm537, %v5076
  %5269 = vst [vmem:[%s8 + $0xd0] sm:$0xff] %v5077
  %5270 = vst.msk [vmem:[%s8 + $0xd8] sm:$0xff] %vm537, %v5078
  %5271 = vst [vmem:[%s8 + $0xe0] sm:$0xff] %v5079
  %5272 = vst.msk [vmem:[%s8 + $0xe8] sm:$0xff] %vm537, %v5080
  %5273 = vst [vmem:[%s8 + $0xf0] sm:$0xff] %v5081
  %5274 = vst.msk [vmem:[%s8 + $0xf8] sm:$0xff] %vm537, %v5082
  %5275 = vst [vmem:[%s8 + $0x100] sm:$0xff] %v5083
  %5276 = vst.msk [vmem:[%s8 + $0x108] sm:$0xff] %vm537, %v5084
  %5277 = vst [vmem:[%s8 + $0x110] sm:$0xff] %v5085
  %5278 = vst.msk [vmem:[%s8 + $0x118] sm:$0xff] %vm537, %v5086
  %5279 = vst [vmem:[%s8 + $0x120] sm:$0xff] %v5087
  %5280 = vst.msk [vmem:[%s8 + $0x128] sm:$0xff] %vm537, %v5088
  %5281 = vst [vmem:[%s8 + $0x130] sm:$0xff] %v5089
  %5282 = vst.msk [vmem:[%s8 + $0x138] sm:$0xff] %vm537, %v5090
  %5283 = vst [vmem:[%s8 + $0x140] sm:$0xff] %v5091
  %5284 = vst.msk [vmem:[%s8 + $0x148] sm:$0xff] %vm537, %v5092
  %5285 = vst [vmem:[%s8 + $0x150] sm:$0xff] %v5093
  %5286 = vst.msk [vmem:[%s8 + $0x158] sm:$0xff] %vm537, %v5094
  %5287 = vst [vmem:[%s8 + $0x160] sm:$0xff] %v5095
  %5288 = vst.msk [vmem:[%s8 + $0x168] sm:$0xff] %vm537, %v5096
  %5289 = vst [vmem:[%s8 + $0x170] sm:$0xff] %v5097
  %5290 = vst.msk [vmem:[%s8 + $0x178] sm:$0xff] %vm537, %v5098
  %5291 = vst [vmem:[%s8 + $0x180] sm:$0xff] %v5099
  %5292 = vst.msk [vmem:[%s8 + $0x188] sm:$0xff] %vm537, %v5100
  %5293 = vst [vmem:[%s8 + $0x190] sm:$0xff] %v5101
  %5294 = vst.msk [vmem:[%s8 + $0x198] sm:$0xff] %vm537, %v5102
  %5295 = vst [vmem:[%s8 + $0x1a0] sm:$0xff] %v5103
  %5296 = vst.msk [vmem:[%s8 + $0x1a8] sm:$0xff] %vm537, %v5104
  %5297 = vst [vmem:[%s8 + $0x1b0] sm:$0xff] %v5105
  %5298 = vst.msk [vmem:[%s8 + $0x1b8] sm:$0xff] %vm537, %v5106
  %5299 = vst [vmem:[%s8 + $0x1c0] sm:$0xff] %v5107
  %5300 = vst.msk [vmem:[%s8 + $0x1c8] sm:$0xff] %vm537, %v5108
  %5301 = vst [vmem:[%s8 + $0x1d0] sm:$0xff] %v5109
  %5302 = vst.msk [vmem:[%s8 + $0x1d8] sm:$0xff] %vm537, %v5110
  %5303 = vst [vmem:[%s8 + $0x1e0] sm:$0xff] %v5111
  %5304 = vst.msk [vmem:[%s8 + $0x1e8] sm:$0xff] %vm537, %v5112
  %5305 = vst [vmem:[%s8 + $0x1f0] sm:$0xff] %v5113
  %5306 = vst.msk [vmem:[%s8 + $0x1f8] sm:$0xff] %vm537, %v5114
  %5307 = vst [vmem:[%s8 + $0x200] sm:$0xff] %v5115
  %5308 = vst.msk [vmem:[%s8 + $0x208] sm:$0xff] %vm537, %v5116
  %5309 = vst [vmem:[%s8 + $0x210] sm:$0xff] %v5117
  %5310 = vst.msk [vmem:[%s8 + $0x218] sm:$0xff] %vm537, %v5118
  %5311 = vst [vmem:[%s8 + $0x220] sm:$0xff] %v5119
  %5312 = vst.msk [vmem:[%s8 + $0x228] sm:$0xff] %vm537, %v5120
  %5313 = vst [vmem:[%s8 + $0x230] sm:$0xff] %v5121
  %5314 = vst.msk [vmem:[%s8 + $0x238] sm:$0xff] %vm537, %v5122
  %5315 = vst [vmem:[%s8 + $0x240] sm:$0xff] %v5123
  %5316 = vst.msk [vmem:[%s8 + $0x248] sm:$0xff] %vm537, %v5124
  %5317 = vst [vmem:[%s8 + $0x250] sm:$0xff] %v5125
  %5318 = vst.msk [vmem:[%s8 + $0x258] sm:$0xff] %vm537, %v5126
  %5319 = vst [vmem:[%s8 + $0x260] sm:$0xff] %v5127
  %5320 = vst.msk [vmem:[%s8 + $0x268] sm:$0xff] %vm537, %v5128
  %5321 = vst [vmem:[%s8 + $0x270] sm:$0xff] %v5129
  %5322 = vst.msk [vmem:[%s8 + $0x278] sm:$0xff] %vm537, %v5130
  %5323 = vst [vmem:[%s8 + $0x280] sm:$0xff] %v5131
  %5324 = vst.msk [vmem:[%s8 + $0x288] sm:$0xff] %vm537, %v5132
  %5325 = vst [vmem:[%s8 + $0x290] sm:$0xff] %v5133
  %5326 = vst.msk [vmem:[%s8 + $0x298] sm:$0xff] %vm537, %v5134
  %5327 = vst [vmem:[%s8 + $0x2a0] sm:$0xff] %v5135
  %5328 = vst.msk [vmem:[%s8 + $0x2a8] sm:$0xff] %vm537, %v5136
  %5329 = vst [vmem:[%s8 + $0x2b0] sm:$0xff] %v5137
  %5330 = vst.msk [vmem:[%s8 + $0x2b8] sm:$0xff] %vm537, %v5138
  %5331 = vst [vmem:[%s8 + $0x2c0] sm:$0xff] %v5139
  %5332 = vst.msk [vmem:[%s8 + $0x2c8] sm:$0xff] %vm537, %v5140
  %5333 = vst [vmem:[%s8 + $0x2d0] sm:$0xff] %v5141
  %5334 = vst.msk [vmem:[%s8 + $0x2d8] sm:$0xff] %vm537, %v5142
  %5335 = vst [vmem:[%s8 + $0x2e0] sm:$0xff] %v5143
  %5336 = vst.msk [vmem:[%s8 + $0x2e8] sm:$0xff] %vm537, %v5144
  %5337 = vst [vmem:[%s8 + $0x2f0] sm:$0xff] %v5145
  %5338 = vst.msk [vmem:[%s8 + $0x2f8] sm:$0xff] %vm537, %v5146
  %5339 = vst [vmem:[%s8 + $0x300] sm:$0xff] %v5147
  %5340 = vst.msk [vmem:[%s8 + $0x308] sm:$0xff] %vm537, %v5148
  %5341 = vst [vmem:[%s8 + $0x310] sm:$0xff] %v5149
  %5342 = vst.msk [vmem:[%s8 + $0x318] sm:$0xff] %vm537, %v5150
  %5343 = vst [vmem:[%s8 + $0x320] sm:$0xff] %v5151
  %5344 = vst.msk [vmem:[%s8 + $0x328] sm:$0xff] %vm537, %v5152
  %5345 = vst [vmem:[%s8 + $0x330] sm:$0xff] %v5153
  %5346 = vst.msk [vmem:[%s8 + $0x338] sm:$0xff] %vm537, %v5154
  %5347 = vst [vmem:[%s8 + $0x340] sm:$0xff] %v5155
  %5348 = vst.msk [vmem:[%s8 + $0x348] sm:$0xff] %vm537, %v5156
  %5349 = vst [vmem:[%s8 + $0x350] sm:$0xff] %v5157
  %5350 = vst.msk [vmem:[%s8 + $0x358] sm:$0xff] %vm537, %v5158
  %5351 = vst [vmem:[%s8 + $0x360] sm:$0xff] %v5159
  %5352 = vst.msk [vmem:[%s8 + $0x368] sm:$0xff] %vm537, %v5160
  %5353 = vst [vmem:[%s8 + $0x370] sm:$0xff] %v5161
  %5354 = vst.msk [vmem:[%s8 + $0x378] sm:$0xff] %vm537, %v5162
  %5355 = vst [vmem:[%s8 + $0x380] sm:$0xff] %v5163
  %5356 = vst.msk [vmem:[%s8 + $0x388] sm:$0xff] %vm537, %v5164
  %5357 = vst [vmem:[%s8 + $0x390] sm:$0xff] %v5165
  %5358 = vst.msk [vmem:[%s8 + $0x398] sm:$0xff] %vm537, %v5166
  %5359 = vst [vmem:[%s8 + $0x3a0] sm:$0xff] %v5167
  %5360 = vst.msk [vmem:[%s8 + $0x3a8] sm:$0xff] %vm537, %v5168
  %5361 = vst [vmem:[%s8 + $0x3b0] sm:$0xff] %v5169
  %5362 = vst.msk [vmem:[%s8 + $0x3b8] sm:$0xff] %vm537, %v5170
  %5363 = vst [vmem:[%s8 + $0x3c0] sm:$0xff] %v5171
  %5364 = vst.msk [vmem:[%s8 + $0x3c8] sm:$0xff] %vm537, %v5172
  %5365 = vst [vmem:[%s8 + $0x3d0] sm:$0xff] %v5173
  %5366 = vst.msk [vmem:[%s8 + $0x3d8] sm:$0xff] %vm537, %v5174
  %5367 = vst [vmem:[%s8 + $0x3e0] sm:$0xff] %v5175
  %5368 = vst.msk [vmem:[%s8 + $0x3e8] sm:$0xff] %vm537, %v5176
  %5369 = vst [vmem:[%s8 + $0x3f0] sm:$0xff] %v5177
  %5370 = vst.msk [vmem:[%s8 + $0x3f8] sm:$0xff] %vm537, %v5178
  %5371 = vst [vmem:[%s8 + $0x400] sm:$0xff] %v5179
  %5372 = vst.msk [vmem:[%s8 + $0x408] sm:$0xff] %vm537, %v5180
  %5373 = vst [vmem:[%s8 + $0x410] sm:$0xff] %v5181
  %5374 = vst.msk [vmem:[%s8 + $0x418] sm:$0xff] %vm537, %v5182
  %5375 = vst [vmem:[%s8 + $0x420] sm:$0xff] %v5183
  %5376 = vst.msk [vmem:[%s8 + $0x428] sm:$0xff] %vm537, %v5184
  %5377 = vst [vmem:[%s8 + $0x430] sm:$0xff] %v5185
  %5378 = vst.msk [vmem:[%s8 + $0x438] sm:$0xff] %vm537, %v5186
  %5379 = vst [vmem:[%s8 + $0x440] sm:$0xff] %v5187
  %5380 = vst.msk [vmem:[%s8 + $0x448] sm:$0xff] %vm537, %v5188
  %5381 = vst [vmem:[%s8 + $0x450] sm:$0xff] %v5189
  %5382 = vst.msk [vmem:[%s8 + $0x458] sm:$0xff] %vm537, %v5190
  %5383 = vst [vmem:[%s8 + $0x460] sm:$0xff] %v5191
  %5384 = vst.msk [vmem:[%s8 + $0x468] sm:$0xff] %vm537, %v5192
  %5385 = vst [vmem:[%s8 + $0x470] sm:$0xff] %v5193
  %5386 = vst.msk [vmem:[%s8 + $0x478] sm:$0xff] %vm537, %v5194
  %5387 = vst [vmem:[%s8 + $0x480] sm:$0xff] %v5195
  %5388 = vst.msk [vmem:[%s8 + $0x488] sm:$0xff] %vm537, %v5196
  %5389 = vst [vmem:[%s8 + $0x490] sm:$0xff] %v5197
  %5390 = vst.msk [vmem:[%s8 + $0x498] sm:$0xff] %vm537, %v5198
  %5391 = vst [vmem:[%s8 + $0x4a0] sm:$0xff] %v5199
  %5392 = vst.msk [vmem:[%s8 + $0x4a8] sm:$0xff] %vm537, %v5200
  %5393 = vst [vmem:[%s8 + $0x4b0] sm:$0xff] %v5201
  %5394 = vst.msk [vmem:[%s8 + $0x4b8] sm:$0xff] %vm537, %v5202
  %5395 = vst [vmem:[%s8 + $0x4c0] sm:$0xff] %v5203
  %5396 = vst.msk [vmem:[%s8 + $0x4c8] sm:$0xff] %vm537, %v5204
  %5397 = vst [vmem:[%s8 + $0x4d0] sm:$0xff] %v5205
  %5398 = vst.msk [vmem:[%s8 + $0x4d8] sm:$0xff] %vm537, %v5206
  %5399 = vst [vmem:[%s8 + $0x4e0] sm:$0xff] %v5207
  %5400 = vst.msk [vmem:[%s8 + $0x4e8] sm:$0xff] %vm537, %v5208
  %5401 = vst [vmem:[%s8 + $0x4f0] sm:$0xff] %v5209
  %5402 = vst.msk [vmem:[%s8 + $0x4f8] sm:$0xff] %vm537, %v5210
  %5403 = vst [vmem:[%s8 + $0x500] sm:$0xff] %v5211
  %5404 = vst.msk [vmem:[%s8 + $0x508] sm:$0xff] %vm537, %v5212
  %5405 = vst [vmem:[%s8 + $0x510] sm:$0xff] %v5213
  %5406 = vst.msk [vmem:[%s8 + $0x518] sm:$0xff] %vm537, %v5214
  %5407 = vst [vmem:[%s8 + $0x520] sm:$0xff] %v5215
  %5408 = vst.msk [vmem:[%s8 + $0x528] sm:$0xff] %vm537, %v5216
  %5409 = vst [vmem:[%s8 + $0x530] sm:$0xff] %v5217
  %5410 = vst.msk [vmem:[%s8 + $0x538] sm:$0xff] %vm537, %v5218
  %5411 = vst [vmem:[%s8 + $0x540] sm:$0xff] %v5219
  %5412 = vst.msk [vmem:[%s8 + $0x548] sm:$0xff] %vm537, %v5220
  %5413 = vst [vmem:[%s8 + $0x550] sm:$0xff] %v5221
  %5414 = vst.msk [vmem:[%s8 + $0x558] sm:$0xff] %vm537, %v5222
  %5415 = vst [vmem:[%s8 + $0x560] sm:$0xff] %v5223
  %5416 = vst.msk [vmem:[%s8 + $0x568] sm:$0xff] %vm537, %v5224
  %5417 = vst [vmem:[%s8 + $0x570] sm:$0xff] %v5225
  %5418 = vst.msk [vmem:[%s8 + $0x578] sm:$0xff] %vm537, %v5226
  %5419 = vst [vmem:[%s8 + $0x580] sm:$0xff] %v5227
  %5420 = vst.msk [vmem:[%s8 + $0x588] sm:$0xff] %vm537, %v5228
  %5421 = vst [vmem:[%s8 + $0x590] sm:$0xff] %v5229
  %5422 = vst.msk [vmem:[%s8 + $0x598] sm:$0xff] %vm537, %v5230
  %5423 = vst [vmem:[%s8 + $0x5a0] sm:$0xff] %v5231
  %5424 = vst.msk [vmem:[%s8 + $0x5a8] sm:$0xff] %vm537, %v5232
  %5425 = vst [vmem:[%s8 + $0x5b0] sm:$0xff] %v5233
  %5426 = vst.msk [vmem:[%s8 + $0x5b8] sm:$0xff] %vm537, %v5234
  %5427 = vst [vmem:[%s8 + $0x5c0] sm:$0xff] %v5235
  %5428 = vst.msk [vmem:[%s8 + $0x5c8] sm:$0xff] %vm537, %v5236
  %5429 = vst [vmem:[%s8 + $0x5d0] sm:$0xff] %v5237
  %5430 = vst.msk [vmem:[%s8 + $0x5d8] sm:$0xff] %vm537, %v5238
  %5431 = vst [vmem:[%s8 + $0x5e0] sm:$0xff] %v5239
  %5432 = vst.msk [vmem:[%s8 + $0x5e8] sm:$0xff] %vm537, %v5240
  %5433 = vst [vmem:[%s8 + $0x5f0] sm:$0xff] %v5241
  %5434 = vst.msk [vmem:[%s8 + $0x5f8] sm:$0xff] %vm537, %v5242
  // Predicated region
  $region34: #{tpu_custom_call.1} parent=0 // pred_check
    _
  $region35: #{tpu_custom_call.1} parent=0 // pred_check_branch
    %5436 = sbr.rel (0) target = $region37
  $region36: #{tpu_custom_call.1} parent=0 // pred_region
    _
  $region37: #{tpu_custom_call.1} parent=0 // pred_fallthru
    _
  // Predicated region
  $region38: #{tpu_custom_call.1} parent=0 // pred_check
    _
  $region39: #{tpu_custom_call.1} parent=0 // pred_check_branch
    %5438 = sbr.rel (0) target = $region41
  $region40: #{tpu_custom_call.1} parent=0 // pred_region
    _
  $region41: #{tpu_custom_call.1} parent=0 // pred_fallthru
    _

</llo_original>
